<compile_context>
chip_gen: v5e
topology: v5e:2x2
jax: 0.10.0
libtpu: 0.0.40
codegen_flags: <defaults>
</compile_context>

<pallas_src>
import math

import jax
import jax.numpy as jnp
from jax import lax
from jax.experimental import pallas as pl
from jax.experimental.pallas import tpu as pltpu


def _cdiv(a, b):
    return -(-a // b)


def _round_up(v, m):
    return ((v + m - 1) // m) * m


def _laplace_filter_bank(a_, b_, kernel_size):
    """Laplace(p1) filter bank, [C, K] float32 (matches the PyTorch Laplace())."""
    K = int(kernel_size)
    C = a_.shape[0]
    A, ep, tal, f = 0.08, 0.03, 0.1, 80.0
    w = 2.0 * math.pi * f
    coef = -ep / math.sqrt(1.0 - ep * ep)
    t = jnp.linspace(0.0, 1.0, K, dtype=jnp.float32)            # time_disc
    p1 = (t[None, :] - b_.reshape(C, 1)) / a_.reshape(C, 1)     # [C, K]
    arg = w * (p1 - tal)
    return (A * jnp.exp(coef * arg) * jnp.sin(arg)).astype(jnp.float32)


def _make_laplace_kernel(C, K, stride, TL, TCH):
    """out[0, :, :] = filt[C,K] (*) xwin windows + bias, chunked along lanes."""
    n_chunks = TL // TCH

    def kernel(filt_ref, bias_ref, xwin_ref, out_ref):
        f = filt_ref[...]                                   # [C, K] (tiny, resident)
        fk = [f[:, k:k + 1] for k in range(K)]              # hoisted [C,1] tap coeffs
        # Bias fused into the accumulator init; broadcast hoisted out of the loop.
        b_full = jnp.broadcast_to(bias_ref[...], (C, TCH))  # [C, TCH]
        for c0 in range(n_chunks):                          # static unroll, acc stays in vregs
            cs = c0 * TCH
            acc = b_full                                    # [8, TCH] f32 = 4 vregs
            for k in range(K):                              # static unroll over taps
                p = k % stride
                off = k // stride
                # Static lane slice of the phase-split window slab -> tap values
                # x[n, 0, (t*TL + cs + j)*stride + k] for j in [0, TCH).
                tap = xwin_ref[0, 0, p:p + 1, cs + off:cs + off + TCH]   # [1, TCH]
                acc = acc + fk[k] * tap                     # exact-f32 VPU FMA
            out_ref[0, :, cs:cs + TCH] = acc                # one full-width store/chunk

    return kernel


def laplace_fast_forward(x, a_, b_, bias, kernel_size, stride, *,
                         max_tile=8192, chunk=512):
    """x: [N, 1, L] float32 -> [N, C, L_out], matching F.conv1d(stride, padding=0)."""
    N, c_in, L = x.shape
    assert c_in == 1, "Laplace_fast only supports one input channel"
    K = int(kernel_size)
    stride = int(stride)
    C = a_.shape[0]
    L_out = (L - K) // stride + 1
    assert L_out > 0

    TCH = int(chunk)
    assert TCH % 128 == 0
    # Tile the output-length axis; keep >= 2 total grid points when possible so
    # v7x's two TensorCores both get work (batch axis already provides >= 2 here).
    n_tiles = _cdiv(L_out, max_tile)
    if N * n_tiles < 2 and L_out > TCH:
        n_tiles = 2
    TL = _round_up(_cdiv(L_out, n_tiles), TCH)      # lane tile, multiple of TCH (and 128)
    L_out_pad = n_tiles * TL
    halo = _round_up((K - 1) // stride, 128)        # per-phase tap overhang, 128-aligned
    TLW = TL + halo                                 # window-slab lanes per tile

    # Stride-phase split + per-tile windows in one gather (no K/stride im2col blow-up):
    #   xwin[n, t, p, j] = x[n, 0, (t*TL + j)*stride + p]
    xflat = x[:, 0, :].astype(jnp.float32)
    max_idx = ((n_tiles - 1) * TL + TLW - 1) * stride + (stride - 1)
    if max_idx + 1 > L:
        xflat = jnp.pad(xflat, ((0, 0), (0, max_idx + 1 - L)))
    tt = jnp.arange(n_tiles, dtype=jnp.int32) * TL
    pp = jnp.arange(stride, dtype=jnp.int32)
    jj = jnp.arange(TLW, dtype=jnp.int32)
    gidx = (tt[:, None, None] + jj[None, None, :]) * stride + pp[None, :, None]
    xwin = xflat[:, gidx]                                   # [N, n_tiles, stride, TLW]

    filt = _laplace_filter_bank(a_.astype(jnp.float32), b_.astype(jnp.float32), K)
    bias2 = bias.reshape(C, 1).astype(jnp.float32)

    kern = _make_laplace_kernel(C, K, stride, TL, TCH)

    out = pl.pallas_call(
        kern,
        out_shape=jax.ShapeDtypeStruct((N, C, L_out_pad), jnp.float32),
        grid=(N, n_tiles),
        in_specs=[
            pl.BlockSpec((C, K), lambda n, t: (0, 0)),              # filter bank (resident)
            pl.BlockSpec((C, 1), lambda n, t: (0, 0)),              # bias (resident)
            pl.BlockSpec((1, 1, stride, TLW), lambda n, t: (n, t, 0, 0)),  # window slab
        ],
        # Final layout written directly: lane-dense [N, C, L_out_pad], no epilogue transpose.
        out_specs=pl.BlockSpec((1, C, TL), lambda n, t: (n, 0, t)),
        compiler_params=pltpu.CompilerParams(
            dimension_semantics=("parallel", "parallel")),
        cost_estimate=pl.CostEstimate(
            flops=2 * N * L_out_pad * K * C,
            transcendentals=0,
            bytes_accessed=4 * (N * n_tiles * stride * TLW
                                + N * C * L_out_pad + C * K + C)),
    )(filt, bias2, xwin)

    # Padding is per-batch along the last axis only; slice it off.
    return out[:, :, :L_out]


def _reference(x, a_, b_, bias, kernel_size, stride):
    """Pure-JAX reference reproducing the PyTorch forward (high-precision conv)."""
    K = int(kernel_size)
    C = a_.shape[0]
    A, ep, tal, f = 0.08, 0.03, 0.1, 80.0
    w = 2.0 * math.pi * f
    q = jnp.float32(1.0 - ep * ep)
    t = jnp.linspace(0.0, 1.0, K, dtype=jnp.float32)
    p1 = (t[None, :] - b_.reshape(C, 1)) / a_.reshape(C, 1)
    filt = A * jnp.exp(-ep / jnp.sqrt(q) * (w * (p1 - tal))) * jnp.sin(w * (p1 - tal))
    out = lax.conv_general_dilated(
        x.astype(jnp.float32), filt[:, None, :].astype(jnp.float32),
        window_strides=(stride,), padding="VALID",
        dimension_numbers=("NCH", "OIH", "NCH"),
        precision=lax.Precision.HIGHEST)
    return out + bias.reshape(1, C, 1)


if __name__ == "__main__":
    # Module config: Laplace_fast(out_channels=8, kernel_size=16, stride=2)
    out_channels = 8
    kernel_size = 16
    stride = 2
    batch = 2
    length = 9000   # 1-D waveform; exercises multiple lane chunks per tile

    # Deterministic parameter init exactly as in Laplace_fast.__init__.
    a_ = jnp.linspace(1.0, 100.0, out_channels, dtype=jnp.float32).reshape(out_channels, 1)
    b_ = jnp.linspace(0.0, 100.0, out_channels, dtype=jnp.float32).reshape(out_channels, 1)
    bias = jnp.zeros((out_channels,), dtype=jnp.float32)

    key = jax.random.PRNGKey(0)
    x = jax.random.normal(key, (batch, 1, length), dtype=jnp.float32)

    out = jax.block_until_ready(
        laplace_fast_forward(x, a_, b_, bias, kernel_size, stride))

    L_out = (length - kernel_size) // stride + 1
    ref = jax.block_until_ready(_reference(x, a_, b_, bias, kernel_size, stride))
    assert out.shape == ref.shape == (batch, out_channels, L_out)

    # The Laplace envelope exp() reaches ~1e7 for the default (a_, b_) init, so
    # compare at a tolerance scaled by the global output magnitude.
    scale = float(jnp.max(jnp.abs(ref)))
    max_err = float(jnp.max(jnp.abs(out - ref)))
    assert max_err <= 2e-3 * scale, (
        f"mismatch vs reference conv1d: max_err={max_err}, scale={scale}")

    print("KERNEL_OK")
</pallas_src>

<mosaic_0001>
module attributes {stable_mosaic.version = 11 : i64} {
  func.func @kernel(%arg0: i32, %arg1: i32, %arg2: memref<8x16xf32, #tpu.memory_space<vmem>>, %arg3: memref<8x1xf32, #tpu.memory_space<vmem>>, %arg4: memref<1x1x2x4736xf32, #tpu.memory_space<vmem>>, %arg5: memref<1x8x4608xf32, #tpu.memory_space<vmem>>) attributes {dimension_semantics = [#tpu.dimension_semantics<parallel>, #tpu.dimension_semantics<parallel>], iteration_bounds = array<i64: 2, 1>, scalar_prefetch = 0 : i64, scratch_operands = 0 : i64, tpu.core_type = #tpu.core_type<tc>, window_params = [{pipeline_mode = #tpu.pipeline_mode<synchronous>, transform_indices = @transform_0, window_bounds = array<i64: 8, 16>}, {pipeline_mode = #tpu.pipeline_mode<synchronous>, transform_indices = @transform_1, window_bounds = array<i64: 8, 1>}, {transform_indices = @transform_2, window_bounds = array<i64: 1, 1, 2, 4736>}, {transform_indices = @transform_3, window_bounds = array<i64: 1, 8, 4608>}]} {
    %c0 = arith.constant 0 : index
    %c0_0 = arith.constant 0 : index
    %0 = vector.load %arg2[%c0, %c0_0] : memref<8x16xf32, #tpu.memory_space<vmem>>, vector<8x16xf32>
    %1 = vector.extract_strided_slice %0 {offsets = [0, 0], sizes = [8, 1], strides = [1, 1]} : vector<8x16xf32> to vector<8x1xf32>
    %2 = vector.extract_strided_slice %0 {offsets = [0, 1], sizes = [8, 1], strides = [1, 1]} : vector<8x16xf32> to vector<8x1xf32>
    %3 = vector.extract_strided_slice %0 {offsets = [0, 2], sizes = [8, 1], strides = [1, 1]} : vector<8x16xf32> to vector<8x1xf32>
    %4 = vector.extract_strided_slice %0 {offsets = [0, 3], sizes = [8, 1], strides = [1, 1]} : vector<8x16xf32> to vector<8x1xf32>
    %5 = vector.extract_strided_slice %0 {offsets = [0, 4], sizes = [8, 1], strides = [1, 1]} : vector<8x16xf32> to vector<8x1xf32>
    %6 = vector.extract_strided_slice %0 {offsets = [0, 5], sizes = [8, 1], strides = [1, 1]} : vector<8x16xf32> to vector<8x1xf32>
    %7 = vector.extract_strided_slice %0 {offsets = [0, 6], sizes = [8, 1], strides = [1, 1]} : vector<8x16xf32> to vector<8x1xf32>
    %8 = vector.extract_strided_slice %0 {offsets = [0, 7], sizes = [8, 1], strides = [1, 1]} : vector<8x16xf32> to vector<8x1xf32>
    %9 = vector.extract_strided_slice %0 {offsets = [0, 8], sizes = [8, 1], strides = [1, 1]} : vector<8x16xf32> to vector<8x1xf32>
    %10 = vector.extract_strided_slice %0 {offsets = [0, 9], sizes = [8, 1], strides = [1, 1]} : vector<8x16xf32> to vector<8x1xf32>
    %11 = vector.extract_strided_slice %0 {offsets = [0, 10], sizes = [8, 1], strides = [1, 1]} : vector<8x16xf32> to vector<8x1xf32>
    %12 = vector.extract_strided_slice %0 {offsets = [0, 11], sizes = [8, 1], strides = [1, 1]} : vector<8x16xf32> to vector<8x1xf32>
    %13 = vector.extract_strided_slice %0 {offsets = [0, 12], sizes = [8, 1], strides = [1, 1]} : vector<8x16xf32> to vector<8x1xf32>
    %14 = vector.extract_strided_slice %0 {offsets = [0, 13], sizes = [8, 1], strides = [1, 1]} : vector<8x16xf32> to vector<8x1xf32>
    %15 = vector.extract_strided_slice %0 {offsets = [0, 14], sizes = [8, 1], strides = [1, 1]} : vector<8x16xf32> to vector<8x1xf32>
    %16 = vector.extract_strided_slice %0 {offsets = [0, 15], sizes = [8, 1], strides = [1, 1]} : vector<8x16xf32> to vector<8x1xf32>
    %c0_1 = arith.constant 0 : index
    %c0_2 = arith.constant 0 : index
    %17 = vector.load %arg3[%c0_1, %c0_2] : memref<8x1xf32, #tpu.memory_space<vmem>>, vector<8x1xf32>
    %18 = vector.shape_cast %17 : vector<8x1xf32> to vector<8x1xf32>
    %19 = vector.broadcast %18 : vector<8x1xf32> to vector<8x512xf32>
    %c0_3 = arith.constant 0 : index
    %c0_4 = arith.constant 0 : index
    %c0_5 = arith.constant 0 : index
    %c0_6 = arith.constant 0 : index
    %20 = vector.load %arg4[%c0_3, %c0_4, %c0_5, %c0_6] : memref<1x1x2x4736xf32, #tpu.memory_space<vmem>>, vector<1x1x1x512xf32>
    %21 = vector.shape_cast %20 : vector<1x1x1x512xf32> to vector<1x512xf32>
    %22 = vector.broadcast %1 : vector<8x1xf32> to vector<8x512xf32>
    %23 = vector.broadcast %21 : vector<1x512xf32> to vector<8x512xf32>
    %24 = arith.mulf %22, %23 : vector<8x512xf32>
    %25 = arith.addf %19, %24 : vector<8x512xf32>
    %c0_7 = arith.constant 0 : index
    %c0_8 = arith.constant 0 : index
    %c1 = arith.constant 1 : index
    %c0_9 = arith.constant 0 : index
    %26 = vector.load %arg4[%c0_7, %c0_8, %c1, %c0_9] : memref<1x1x2x4736xf32, #tpu.memory_space<vmem>>, vector<1x1x1x512xf32>
    %27 = vector.shape_cast %26 : vector<1x1x1x512xf32> to vector<1x512xf32>
    %28 = vector.broadcast %2 : vector<8x1xf32> to vector<8x512xf32>
    %29 = vector.broadcast %27 : vector<1x512xf32> to vector<8x512xf32>
    %30 = arith.mulf %28, %29 : vector<8x512xf32>
    %31 = arith.addf %25, %30 : vector<8x512xf32>
    %c0_10 = arith.constant 0 : index
    %c0_11 = arith.constant 0 : index
    %c0_12 = arith.constant 0 : index
    %c1_13 = arith.constant 1 : index
    %32 = vector.load %arg4[%c0_10, %c0_11, %c0_12, %c1_13] : memref<1x1x2x4736xf32, #tpu.memory_space<vmem>>, vector<1x1x1x512xf32>
    %33 = vector.shape_cast %32 : vector<1x1x1x512xf32> to vector<1x512xf32>
    %34 = vector.broadcast %3 : vector<8x1xf32> to vector<8x512xf32>
    %35 = vector.broadcast %33 : vector<1x512xf32> to vector<8x512xf32>
    %36 = arith.mulf %34, %35 : vector<8x512xf32>
    %37 = arith.addf %31, %36 : vector<8x512xf32>
    %c0_14 = arith.constant 0 : index
    %c0_15 = arith.constant 0 : index
    %c1_16 = arith.constant 1 : index
    %c1_17 = arith.constant 1 : index
    %38 = vector.load %arg4[%c0_14, %c0_15, %c1_16, %c1_17] : memref<1x1x2x4736xf32, #tpu.memory_space<vmem>>, vector<1x1x1x512xf32>
    %39 = vector.shape_cast %38 : vector<1x1x1x512xf32> to vector<1x512xf32>
    %40 = vector.broadcast %4 : vector<8x1xf32> to vector<8x512xf32>
    %41 = vector.broadcast %39 : vector<1x512xf32> to vector<8x512xf32>
    %42 = arith.mulf %40, %41 : vector<8x512xf32>
    %43 = arith.addf %37, %42 : vector<8x512xf32>
    %c0_18 = arith.constant 0 : index
    %c0_19 = arith.constant 0 : index
    %c0_20 = arith.constant 0 : index
    %c2 = arith.constant 2 : index
    %44 = vector.load %arg4[%c0_18, %c0_19, %c0_20, %c2] : memref<1x1x2x4736xf32, #tpu.memory_space<vmem>>, vector<1x1x1x512xf32>
    %45 = vector.shape_cast %44 : vector<1x1x1x512xf32> to vector<1x512xf32>
    %46 = vector.broadcast %5 : vector<8x1xf32> to vector<8x512xf32>
    %47 = vector.broadcast %45 : vector<1x512xf32> to vector<8x512xf32>
    %48 = arith.mulf %46, %47 : vector<8x512xf32>
    %49 = arith.addf %43, %48 : vector<8x512xf32>
    %c0_21 = arith.constant 0 : index
    %c0_22 = arith.constant 0 : index
    %c1_23 = arith.constant 1 : index
    %c2_24 = arith.constant 2 : index
    %50 = vector.load %arg4[%c0_21, %c0_22, %c1_23, %c2_24] : memref<1x1x2x4736xf32, #tpu.memory_space<vmem>>, vector<1x1x1x512xf32>
    %51 = vector.shape_cast %50 : vector<1x1x1x512xf32> to vector<1x512xf32>
    %52 = vector.broadcast %6 : vector<8x1xf32> to vector<8x512xf32>
    %53 = vector.broadcast %51 : vector<1x512xf32> to vector<8x512xf32>
    %54 = arith.mulf %52, %53 : vector<8x512xf32>
    %55 = arith.addf %49, %54 : vector<8x512xf32>
    %c0_25 = arith.constant 0 : index
    %c0_26 = arith.constant 0 : index
    %c0_27 = arith.constant 0 : index
    %c3 = arith.constant 3 : index
    %56 = vector.load %arg4[%c0_25, %c0_26, %c0_27, %c3] : memref<1x1x2x4736xf32, #tpu.memory_space<vmem>>, vector<1x1x1x512xf32>
    %57 = vector.shape_cast %56 : vector<1x1x1x512xf32> to vector<1x512xf32>
    %58 = vector.broadcast %7 : vector<8x1xf32> to vector<8x512xf32>
    %59 = vector.broadcast %57 : vector<1x512xf32> to vector<8x512xf32>
    %60 = arith.mulf %58, %59 : vector<8x512xf32>
    %61 = arith.addf %55, %60 : vector<8x512xf32>
    %c0_28 = arith.constant 0 : index
    %c0_29 = arith.constant 0 : index
    %c1_30 = arith.constant 1 : index
    %c3_31 = arith.constant 3 : index
    %62 = vector.load %arg4[%c0_28, %c0_29, %c1_30, %c3_31] : memref<1x1x2x4736xf32, #tpu.memory_space<vmem>>, vector<1x1x1x512xf32>
    %63 = vector.shape_cast %62 : vector<1x1x1x512xf32> to vector<1x512xf32>
    %64 = vector.broadcast %8 : vector<8x1xf32> to vector<8x512xf32>
    %65 = vector.broadcast %63 : vector<1x512xf32> to vector<8x512xf32>
    %66 = arith.mulf %64, %65 : vector<8x512xf32>
    %67 = arith.addf %61, %66 : vector<8x512xf32>
    %c0_32 = arith.constant 0 : index
    %c0_33 = arith.constant 0 : index
    %c0_34 = arith.constant 0 : index
    %c4 = arith.constant 4 : index
    %68 = vector.load %arg4[%c0_32, %c0_33, %c0_34, %c4] : memref<1x1x2x4736xf32, #tpu.memory_space<vmem>>, vector<1x1x1x512xf32>
    %69 = vector.shape_cast %68 : vector<1x1x1x512xf32> to vector<1x512xf32>
    %70 = vector.broadcast %9 : vector<8x1xf32> to vector<8x512xf32>
    %71 = vector.broadcast %69 : vector<1x512xf32> to vector<8x512xf32>
    %72 = arith.mulf %70, %71 : vector<8x512xf32>
    %73 = arith.addf %67, %72 : vector<8x512xf32>
    %c0_35 = arith.constant 0 : index
    %c0_36 = arith.constant 0 : index
    %c1_37 = arith.constant 1 : index
    %c4_38 = arith.constant 4 : index
    %74 = vector.load %arg4[%c0_35, %c0_36, %c1_37, %c4_38] : memref<1x1x2x4736xf32, #tpu.memory_space<vmem>>, vector<1x1x1x512xf32>
    %75 = vector.shape_cast %74 : vector<1x1x1x512xf32> to vector<1x512xf32>
    %76 = vector.broadcast %10 : vector<8x1xf32> to vector<8x512xf32>
    %77 = vector.broadcast %75 : vector<1x512xf32> to vector<8x512xf32>
    %78 = arith.mulf %76, %77 : vector<8x512xf32>
    %79 = arith.addf %73, %78 : vector<8x512xf32>
    %c0_39 = arith.constant 0 : index
    %c0_40 = arith.constant 0 : index
    %c0_41 = arith.constant 0 : index
    %c5 = arith.constant 5 : index
    %80 = vector.load %arg4[%c0_39, %c0_40, %c0_41, %c5] : memref<1x1x2x4736xf32, #tpu.memory_space<vmem>>, vector<1x1x1x512xf32>
    %81 = vector.shape_cast %80 : vector<1x1x1x512xf32> to vector<1x512xf32>
    %82 = vector.broadcast %11 : vector<8x1xf32> to vector<8x512xf32>
    %83 = vector.broadcast %81 : vector<1x512xf32> to vector<8x512xf32>
    %84 = arith.mulf %82, %83 : vector<8x512xf32>
    %85 = arith.addf %79, %84 : vector<8x512xf32>
    %c0_42 = arith.constant 0 : index
    %c0_43 = arith.constant 0 : index
    %c1_44 = arith.constant 1 : index
    %c5_45 = arith.constant 5 : index
    %86 = vector.load %arg4[%c0_42, %c0_43, %c1_44, %c5_45] : memref<1x1x2x4736xf32, #tpu.memory_space<vmem>>, vector<1x1x1x512xf32>
    %87 = vector.shape_cast %86 : vector<1x1x1x512xf32> to vector<1x512xf32>
    %88 = vector.broadcast %12 : vector<8x1xf32> to vector<8x512xf32>
    %89 = vector.broadcast %87 : vector<1x512xf32> to vector<8x512xf32>
    %90 = arith.mulf %88, %89 : vector<8x512xf32>
    %91 = arith.addf %85, %90 : vector<8x512xf32>
    %c0_46 = arith.constant 0 : index
    %c0_47 = arith.constant 0 : index
    %c0_48 = arith.constant 0 : index
    %c6 = arith.constant 6 : index
    %92 = vector.load %arg4[%c0_46, %c0_47, %c0_48, %c6] : memref<1x1x2x4736xf32, #tpu.memory_space<vmem>>, vector<1x1x1x512xf32>
    %93 = vector.shape_cast %92 : vector<1x1x1x512xf32> to vector<1x512xf32>
    %94 = vector.broadcast %13 : vector<8x1xf32> to vector<8x512xf32>
    %95 = vector.broadcast %93 : vector<1x512xf32> to vector<8x512xf32>
    %96 = arith.mulf %94, %95 : vector<8x512xf32>
    %97 = arith.addf %91, %96 : vector<8x512xf32>
    %c0_49 = arith.constant 0 : index
    %c0_50 = arith.constant 0 : index
    %c1_51 = arith.constant 1 : index
    %c6_52 = arith.constant 6 : index
    %98 = vector.load %arg4[%c0_49, %c0_50, %c1_51, %c6_52] : memref<1x1x2x4736xf32, #tpu.memory_space<vmem>>, vector<1x1x1x512xf32>
    %99 = vector.shape_cast %98 : vector<1x1x1x512xf32> to vector<1x512xf32>
    %100 = vector.broadcast %14 : vector<8x1xf32> to vector<8x512xf32>
    %101 = vector.broadcast %99 : vector<1x512xf32> to vector<8x512xf32>
    %102 = arith.mulf %100, %101 : vector<8x512xf32>
    %103 = arith.addf %97, %102 : vector<8x512xf32>
    %c0_53 = arith.constant 0 : index
    %c0_54 = arith.constant 0 : index
    %c0_55 = arith.constant 0 : index
    %c7 = arith.constant 7 : index
    %104 = vector.load %arg4[%c0_53, %c0_54, %c0_55, %c7] : memref<1x1x2x4736xf32, #tpu.memory_space<vmem>>, vector<1x1x1x512xf32>
    %105 = vector.shape_cast %104 : vector<1x1x1x512xf32> to vector<1x512xf32>
    %106 = vector.broadcast %15 : vector<8x1xf32> to vector<8x512xf32>
    %107 = vector.broadcast %105 : vector<1x512xf32> to vector<8x512xf32>
    %108 = arith.mulf %106, %107 : vector<8x512xf32>
    %109 = arith.addf %103, %108 : vector<8x512xf32>
    %c0_56 = arith.constant 0 : index
    %c0_57 = arith.constant 0 : index
    %c1_58 = arith.constant 1 : index
    %c7_59 = arith.constant 7 : index
    %110 = vector.load %arg4[%c0_56, %c0_57, %c1_58, %c7_59] : memref<1x1x2x4736xf32, #tpu.memory_space<vmem>>, vector<1x1x1x512xf32>
    %111 = vector.shape_cast %110 : vector<1x1x1x512xf32> to vector<1x512xf32>
    %112 = vector.broadcast %16 : vector<8x1xf32> to vector<8x512xf32>
    %113 = vector.broadcast %111 : vector<1x512xf32> to vector<8x512xf32>
    %114 = arith.mulf %112, %113 : vector<8x512xf32>
    %115 = arith.addf %109, %114 : vector<8x512xf32>
    %c0_60 = arith.constant 0 : index
    %c0_61 = arith.constant 0 : index
    %c0_62 = arith.constant 0 : index
    %116 = vector.load %arg5[%c0_60, %c0_61, %c0_62] : memref<1x8x4608xf32, #tpu.memory_space<vmem>>, vector<1x8x512xf32>
    %117 = vector.shape_cast %116 : vector<1x8x512xf32> to vector<8x512xf32>
    %118 = vector.shape_cast %115 : vector<8x512xf32> to vector<1x8x512xf32>
    tpu.vector_store %arg5[%c0_60, %c0_61, %c0_62], %118 {strides = array<i32>} : memref<1x8x4608xf32, #tpu.memory_space<vmem>>, vector<1x8x512xf32>,
    %c0_63 = arith.constant 0 : index
    %c0_64 = arith.constant 0 : index
    %c0_65 = arith.constant 0 : index
    %c512 = arith.constant 512 : index
    %119 = vector.load %arg4[%c0_63, %c0_64, %c0_65, %c512] : memref<1x1x2x4736xf32, #tpu.memory_space<vmem>>, vector<1x1x1x512xf32>
    %120 = vector.shape_cast %119 : vector<1x1x1x512xf32> to vector<1x512xf32>
    %121 = vector.broadcast %1 : vector<8x1xf32> to vector<8x512xf32>
    %122 = vector.broadcast %120 : vector<1x512xf32> to vector<8x512xf32>
    %123 = arith.mulf %121, %122 : vector<8x512xf32>
    %124 = arith.addf %19, %123 : vector<8x512xf32>
    %c0_66 = arith.constant 0 : index
    %c0_67 = arith.constant 0 : index
    %c1_68 = arith.constant 1 : index
    %c512_69 = arith.constant 512 : index
    %125 = vector.load %arg4[%c0_66, %c0_67, %c1_68, %c512_69] : memref<1x1x2x4736xf32, #tpu.memory_space<vmem>>, vector<1x1x1x512xf32>
    %126 = vector.shape_cast %125 : vector<1x1x1x512xf32> to vector<1x512xf32>
    %127 = vector.broadcast %2 : vector<8x1xf32> to vector<8x512xf32>
    %128 = vector.broadcast %126 : vector<1x512xf32> to vector<8x512xf32>
    %129 = arith.mulf %127, %128 : vector<8x512xf32>
    %130 = arith.addf %124, %129 : vector<8x512xf32>
    %c0_70 = arith.constant 0 : index
    %c0_71 = arith.constant 0 : index
    %c0_72 = arith.constant 0 : index
    %c513 = arith.constant 513 : index
    %131 = vector.load %arg4[%c0_70, %c0_71, %c0_72, %c513] : memref<1x1x2x4736xf32, #tpu.memory_space<vmem>>, vector<1x1x1x512xf32>
    %132 = vector.shape_cast %131 : vector<1x1x1x512xf32> to vector<1x512xf32>
    %133 = vector.broadcast %3 : vector<8x1xf32> to vector<8x512xf32>
    %134 = vector.broadcast %132 : vector<1x512xf32> to vector<8x512xf32>
    %135 = arith.mulf %133, %134 : vector<8x512xf32>
    %136 = arith.addf %130, %135 : vector<8x512xf32>
    %c0_73 = arith.constant 0 : index
    %c0_74 = arith.constant 0 : index
    %c1_75 = arith.constant 1 : index
    %c513_76 = arith.constant 513 : index
    %137 = vector.load %arg4[%c0_73, %c0_74, %c1_75, %c513_76] : memref<1x1x2x4736xf32, #tpu.memory_space<vmem>>, vector<1x1x1x512xf32>
    %138 = vector.shape_cast %137 : vector<1x1x1x512xf32> to vector<1x512xf32>
    %139 = vector.broadcast %4 : vector<8x1xf32> to vector<8x512xf32>
    %140 = vector.broadcast %138 : vector<1x512xf32> to vector<8x512xf32>
    %141 = arith.mulf %139, %140 : vector<8x512xf32>
    %142 = arith.addf %136, %141 : vector<8x512xf32>
    %c0_77 = arith.constant 0 : index
    %c0_78 = arith.constant 0 : index
    %c0_79 = arith.constant 0 : index
    %c514 = arith.constant 514 : index
    %143 = vector.load %arg4[%c0_77, %c0_78, %c0_79, %c514] : memref<1x1x2x4736xf32, #tpu.memory_space<vmem>>, vector<1x1x1x512xf32>
    %144 = vector.shape_cast %143 : vector<1x1x1x512xf32> to vector<1x512xf32>
    %145 = vector.broadcast %5 : vector<8x1xf32> to vector<8x512xf32>
    %146 = vector.broadcast %144 : vector<1x512xf32> to vector<8x512xf32>
    %147 = arith.mulf %145, %146 : vector<8x512xf32>
    %148 = arith.addf %142, %147 : vector<8x512xf32>
    %c0_80 = arith.constant 0 : index
    %c0_81 = arith.constant 0 : index
    %c1_82 = arith.constant 1 : index
    %c514_83 = arith.constant 514 : index
    %149 = vector.load %arg4[%c0_80, %c0_81, %c1_82, %c514_83] : memref<1x1x2x4736xf32, #tpu.memory_space<vmem>>, vector<1x1x1x512xf32>
    %150 = vector.shape_cast %149 : vector<1x1x1x512xf32> to vector<1x512xf32>
    %151 = vector.broadcast %6 : vector<8x1xf32> to vector<8x512xf32>
    %152 = vector.broadcast %150 : vector<1x512xf32> to vector<8x512xf32>
    %153 = arith.mulf %151, %152 : vector<8x512xf32>
    %154 = arith.addf %148, %153 : vector<8x512xf32>
    %c0_84 = arith.constant 0 : index
    %c0_85 = arith.constant 0 : index
    %c0_86 = arith.constant 0 : index
    %c515 = arith.constant 515 : index
    %155 = vector.load %arg4[%c0_84, %c0_85, %c0_86, %c515] : memref<1x1x2x4736xf32, #tpu.memory_space<vmem>>, vector<1x1x1x512xf32>
    %156 = vector.shape_cast %155 : vector<1x1x1x512xf32> to vector<1x512xf32>
    %157 = vector.broadcast %7 : vector<8x1xf32> to vector<8x512xf32>
    %158 = vector.broadcast %156 : vector<1x512xf32> to vector<8x512xf32>
    %159 = arith.mulf %157, %158 : vector<8x512xf32>
    %160 = arith.addf %154, %159 : vector<8x512xf32>
    %c0_87 = arith.constant 0 : index
    %c0_88 = arith.constant 0 : index
    %c1_89 = arith.constant 1 : index
    %c515_90 = arith.constant 515 : index
    %161 = vector.load %arg4[%c0_87, %c0_88, %c1_89, %c515_90] : memref<1x1x2x4736xf32, #tpu.memory_space<vmem>>, vector<1x1x1x512xf32>
    %162 = vector.shape_cast %161 : vector<1x1x1x512xf32> to vector<1x512xf32>
    %163 = vector.broadcast %8 : vector<8x1xf32> to vector<8x512xf32>
    %164 = vector.broadcast %162 : vector<1x512xf32> to vector<8x512xf32>
    %165 = arith.mulf %163, %164 : vector<8x512xf32>
    %166 = arith.addf %160, %165 : vector<8x512xf32>
    %c0_91 = arith.constant 0 : index
    %c0_92 = arith.constant 0 : index
    %c0_93 = arith.constant 0 : index
    %c516 = arith.constant 516 : index
    %167 = vector.load %arg4[%c0_91, %c0_92, %c0_93, %c516] : memref<1x1x2x4736xf32, #tpu.memory_space<vmem>>, vector<1x1x1x512xf32>
    %168 = vector.shape_cast %167 : vector<1x1x1x512xf32> to vector<1x512xf32>
    %169 = vector.broadcast %9 : vector<8x1xf32> to vector<8x512xf32>
    %170 = vector.broadcast %168 : vector<1x512xf32> to vector<8x512xf32>
    %171 = arith.mulf %169, %170 : vector<8x512xf32>
    %172 = arith.addf %166, %171 : vector<8x512xf32>
    %c0_94 = arith.constant 0 : index
    %c0_95 = arith.constant 0 : index
    %c1_96 = arith.constant 1 : index
    %c516_97 = arith.constant 516 : index
    %173 = vector.load %arg4[%c0_94, %c0_95, %c1_96, %c516_97] : memref<1x1x2x4736xf32, #tpu.memory_space<vmem>>, vector<1x1x1x512xf32>
    %174 = vector.shape_cast %173 : vector<1x1x1x512xf32> to vector<1x512xf32>
    %175 = vector.broadcast %10 : vector<8x1xf32> to vector<8x512xf32>
    %176 = vector.broadcast %174 : vector<1x512xf32> to vector<8x512xf32>
    %177 = arith.mulf %175, %176 : vector<8x512xf32>
    %178 = arith.addf %172, %177 : vector<8x512xf32>
    %c0_98 = arith.constant 0 : index
    %c0_99 = arith.constant 0 : index
    %c0_100 = arith.constant 0 : index
    %c517 = arith.constant 517 : index
    %179 = vector.load %arg4[%c0_98, %c0_99, %c0_100, %c517] : memref<1x1x2x4736xf32, #tpu.memory_space<vmem>>, vector<1x1x1x512xf32>
    %180 = vector.shape_cast %179 : vector<1x1x1x512xf32> to vector<1x512xf32>
    %181 = vector.broadcast %11 : vector<8x1xf32> to vector<8x512xf32>
    %182 = vector.broadcast %180 : vector<1x512xf32> to vector<8x512xf32>
    %183 = arith.mulf %181, %182 : vector<8x512xf32>
    %184 = arith.addf %178, %183 : vector<8x512xf32>
    %c0_101 = arith.constant 0 : index
    %c0_102 = arith.constant 0 : index
    %c1_103 = arith.constant 1 : index
    %c517_104 = arith.constant 517 : index
    %185 = vector.load %arg4[%c0_101, %c0_102, %c1_103, %c517_104] : memref<1x1x2x4736xf32, #tpu.memory_space<vmem>>, vector<1x1x1x512xf32>
    %186 = vector.shape_cast %185 : vector<1x1x1x512xf32> to vector<1x512xf32>
    %187 = vector.broadcast %12 : vector<8x1xf32> to vector<8x512xf32>
    %188 = vector.broadcast %186 : vector<1x512xf32> to vector<8x512xf32>
    %189 = arith.mulf %187, %188 : vector<8x512xf32>
    %190 = arith.addf %184, %189 : vector<8x512xf32>
    %c0_105 = arith.constant 0 : index
    %c0_106 = arith.constant 0 : index
    %c0_107 = arith.constant 0 : index
    %c518 = arith.constant 518 : index
    %191 = vector.load %arg4[%c0_105, %c0_106, %c0_107, %c518] : memref<1x1x2x4736xf32, #tpu.memory_space<vmem>>, vector<1x1x1x512xf32>
    %192 = vector.shape_cast %191 : vector<1x1x1x512xf32> to vector<1x512xf32>
    %193 = vector.broadcast %13 : vector<8x1xf32> to vector<8x512xf32>
    %194 = vector.broadcast %192 : vector<1x512xf32> to vector<8x512xf32>
    %195 = arith.mulf %193, %194 : vector<8x512xf32>
    %196 = arith.addf %190, %195 : vector<8x512xf32>
    %c0_108 = arith.constant 0 : index
    %c0_109 = arith.constant 0 : index
    %c1_110 = arith.constant 1 : index
    %c518_111 = arith.constant 518 : index
    %197 = vector.load %arg4[%c0_108, %c0_109, %c1_110, %c518_111] : memref<1x1x2x4736xf32, #tpu.memory_space<vmem>>, vector<1x1x1x512xf32>
    %198 = vector.shape_cast %197 : vector<1x1x1x512xf32> to vector<1x512xf32>
    %199 = vector.broadcast %14 : vector<8x1xf32> to vector<8x512xf32>
    %200 = vector.broadcast %198 : vector<1x512xf32> to vector<8x512xf32>
    %201 = arith.mulf %199, %200 : vector<8x512xf32>
    %202 = arith.addf %196, %201 : vector<8x512xf32>
    %c0_112 = arith.constant 0 : index
    %c0_113 = arith.constant 0 : index
    %c0_114 = arith.constant 0 : index
    %c519 = arith.constant 519 : index
    %203 = vector.load %arg4[%c0_112, %c0_113, %c0_114, %c519] : memref<1x1x2x4736xf32, #tpu.memory_space<vmem>>, vector<1x1x1x512xf32>
    %204 = vector.shape_cast %203 : vector<1x1x1x512xf32> to vector<1x512xf32>
    %205 = vector.broadcast %15 : vector<8x1xf32> to vector<8x512xf32>
    %206 = vector.broadcast %204 : vector<1x512xf32> to vector<8x512xf32>
    %207 = arith.mulf %205, %206 : vector<8x512xf32>
    %208 = arith.addf %202, %207 : vector<8x512xf32>
    %c0_115 = arith.constant 0 : index
    %c0_116 = arith.constant 0 : index
    %c1_117 = arith.constant 1 : index
    %c519_118 = arith.constant 519 : index
    %209 = vector.load %arg4[%c0_115, %c0_116, %c1_117, %c519_118] : memref<1x1x2x4736xf32, #tpu.memory_space<vmem>>, vector<1x1x1x512xf32>
    %210 = vector.shape_cast %209 : vector<1x1x1x512xf32> to vector<1x512xf32>
    %211 = vector.broadcast %16 : vector<8x1xf32> to vector<8x512xf32>
    %212 = vector.broadcast %210 : vector<1x512xf32> to vector<8x512xf32>
    %213 = arith.mulf %211, %212 : vector<8x512xf32>
    %214 = arith.addf %208, %213 : vector<8x512xf32>
    %c0_119 = arith.constant 0 : index
    %c0_120 = arith.constant 0 : index
    %c512_121 = arith.constant 512 : index
    %215 = vector.load %arg5[%c0_119, %c0_120, %c512_121] : memref<1x8x4608xf32, #tpu.memory_space<vmem>>, vector<1x8x512xf32>
    %216 = vector.shape_cast %215 : vector<1x8x512xf32> to vector<8x512xf32>
    %217 = vector.shape_cast %214 : vector<8x512xf32> to vector<1x8x512xf32>
    tpu.vector_store %arg5[%c0_119, %c0_120, %c512_121], %217 {strides = array<i32>} : memref<1x8x4608xf32, #tpu.memory_space<vmem>>, vector<1x8x512xf32>,
    %c0_122 = arith.constant 0 : index
    %c0_123 = arith.constant 0 : index
    %c0_124 = arith.constant 0 : index
    %c1024 = arith.constant 1024 : index
    %218 = vector.load %arg4[%c0_122, %c0_123, %c0_124, %c1024] : memref<1x1x2x4736xf32, #tpu.memory_space<vmem>>, vector<1x1x1x512xf32>
    %219 = vector.shape_cast %218 : vector<1x1x1x512xf32> to vector<1x512xf32>
    %220 = vector.broadcast %1 : vector<8x1xf32> to vector<8x512xf32>
    %221 = vector.broadcast %219 : vector<1x512xf32> to vector<8x512xf32>
    %222 = arith.mulf %220, %221 : vector<8x512xf32>
    %223 = arith.addf %19, %222 : vector<8x512xf32>
    %c0_125 = arith.constant 0 : index
    %c0_126 = arith.constant 0 : index
    %c1_127 = arith.constant 1 : index
    %c1024_128 = arith.constant 1024 : index
    %224 = vector.load %arg4[%c0_125, %c0_126, %c1_127, %c1024_128] : memref<1x1x2x4736xf32, #tpu.memory_space<vmem>>, vector<1x1x1x512xf32>
    %225 = vector.shape_cast %224 : vector<1x1x1x512xf32> to vector<1x512xf32>
    %226 = vector.broadcast %2 : vector<8x1xf32> to vector<8x512xf32>
    %227 = vector.broadcast %225 : vector<1x512xf32> to vector<8x512xf32>
    %228 = arith.mulf %226, %227 : vector<8x512xf32>
    %229 = arith.addf %223, %228 : vector<8x512xf32>
    %c0_129 = arith.constant 0 : index
    %c0_130 = arith.constant 0 : index
    %c0_131 = arith.constant 0 : index
    %c1025 = arith.constant 1025 : index
    %230 = vector.load %arg4[%c0_129, %c0_130, %c0_131, %c1025] : memref<1x1x2x4736xf32, #tpu.memory_space<vmem>>, vector<1x1x1x512xf32>
    %231 = vector.shape_cast %230 : vector<1x1x1x512xf32> to vector<1x512xf32>
    %232 = vector.broadcast %3 : vector<8x1xf32> to vector<8x512xf32>
    %233 = vector.broadcast %231 : vector<1x512xf32> to vector<8x512xf32>
    %234 = arith.mulf %232, %233 : vector<8x512xf32>
    %235 = arith.addf %229, %234 : vector<8x512xf32>
    %c0_132 = arith.constant 0 : index
    %c0_133 = arith.constant 0 : index
    %c1_134 = arith.constant 1 : index
    %c1025_135 = arith.constant 1025 : index
    %236 = vector.load %arg4[%c0_132, %c0_133, %c1_134, %c1025_135] : memref<1x1x2x4736xf32, #tpu.memory_space<vmem>>, vector<1x1x1x512xf32>
    %237 = vector.shape_cast %236 : vector<1x1x1x512xf32> to vector<1x512xf32>
    %238 = vector.broadcast %4 : vector<8x1xf32> to vector<8x512xf32>
    %239 = vector.broadcast %237 : vector<1x512xf32> to vector<8x512xf32>
    %240 = arith.mulf %238, %239 : vector<8x512xf32>
    %241 = arith.addf %235, %240 : vector<8x512xf32>
    %c0_136 = arith.constant 0 : index
    %c0_137 = arith.constant 0 : index
    %c0_138 = arith.constant 0 : index
    %c1026 = arith.constant 1026 : index
    %242 = vector.load %arg4[%c0_136, %c0_137, %c0_138, %c1026] : memref<1x1x2x4736xf32, #tpu.memory_space<vmem>>, vector<1x1x1x512xf32>
    %243 = vector.shape_cast %242 : vector<1x1x1x512xf32> to vector<1x512xf32>
    %244 = vector.broadcast %5 : vector<8x1xf32> to vector<8x512xf32>
    %245 = vector.broadcast %243 : vector<1x512xf32> to vector<8x512xf32>
    %246 = arith.mulf %244, %245 : vector<8x512xf32>
    %247 = arith.addf %241, %246 : vector<8x512xf32>
    %c0_139 = arith.constant 0 : index
    %c0_140 = arith.constant 0 : index
    %c1_141 = arith.constant 1 : index
    %c1026_142 = arith.constant 1026 : index
    %248 = vector.load %arg4[%c0_139, %c0_140, %c1_141, %c1026_142] : memref<1x1x2x4736xf32, #tpu.memory_space<vmem>>, vector<1x1x1x512xf32>
    %249 = vector.shape_cast %248 : vector<1x1x1x512xf32> to vector<1x512xf32>
    %250 = vector.broadcast %6 : vector<8x1xf32> to vector<8x512xf32>
    %251 = vector.broadcast %249 : vector<1x512xf32> to vector<8x512xf32>
    %252 = arith.mulf %250, %251 : vector<8x512xf32>
    %253 = arith.addf %247, %252 : vector<8x512xf32>
    %c0_143 = arith.constant 0 : index
    %c0_144 = arith.constant 0 : index
    %c0_145 = arith.constant 0 : index
    %c1027 = arith.constant 1027 : index
    %254 = vector.load %arg4[%c0_143, %c0_144, %c0_145, %c1027] : memref<1x1x2x4736xf32, #tpu.memory_space<vmem>>, vector<1x1x1x512xf32>
    %255 = vector.shape_cast %254 : vector<1x1x1x512xf32> to vector<1x512xf32>
    %256 = vector.broadcast %7 : vector<8x1xf32> to vector<8x512xf32>
    %257 = vector.broadcast %255 : vector<1x512xf32> to vector<8x512xf32>
    %258 = arith.mulf %256, %257 : vector<8x512xf32>
    %259 = arith.addf %253, %258 : vector<8x512xf32>
    %c0_146 = arith.constant 0 : index
    %c0_147 = arith.constant 0 : index
    %c1_148 = arith.constant 1 : index
    %c1027_149 = arith.constant 1027 : index
    %260 = vector.load %arg4[%c0_146, %c0_147, %c1_148, %c1027_149] : memref<1x1x2x4736xf32, #tpu.memory_space<vmem>>, vector<1x1x1x512xf32>
    %261 = vector.shape_cast %260 : vector<1x1x1x512xf32> to vector<1x512xf32>
    %262 = vector.broadcast %8 : vector<8x1xf32> to vector<8x512xf32>
    %263 = vector.broadcast %261 : vector<1x512xf32> to vector<8x512xf32>
    %264 = arith.mulf %262, %263 : vector<8x512xf32>
    %265 = arith.addf %259, %264 : vector<8x512xf32>
    %c0_150 = arith.constant 0 : index
    %c0_151 = arith.constant 0 : index
    %c0_152 = arith.constant 0 : index
    %c1028 = arith.constant 1028 : index
    %266 = vector.load %arg4[%c0_150, %c0_151, %c0_152, %c1028] : memref<1x1x2x4736xf32, #tpu.memory_space<vmem>>, vector<1x1x1x512xf32>
    %267 = vector.shape_cast %266 : vector<1x1x1x512xf32> to vector<1x512xf32>
    %268 = vector.broadcast %9 : vector<8x1xf32> to vector<8x512xf32>
    %269 = vector.broadcast %267 : vector<1x512xf32> to vector<8x512xf32>
    %270 = arith.mulf %268, %269 : vector<8x512xf32>
    %271 = arith.addf %265, %270 : vector<8x512xf32>
    %c0_153 = arith.constant 0 : index
    %c0_154 = arith.constant 0 : index
    %c1_155 = arith.constant 1 : index
    %c1028_156 = arith.constant 1028 : index
    %272 = vector.load %arg4[%c0_153, %c0_154, %c1_155, %c1028_156] : memref<1x1x2x4736xf32, #tpu.memory_space<vmem>>, vector<1x1x1x512xf32>
    %273 = vector.shape_cast %272 : vector<1x1x1x512xf32> to vector<1x512xf32>
    %274 = vector.broadcast %10 : vector<8x1xf32> to vector<8x512xf32>
    %275 = vector.broadcast %273 : vector<1x512xf32> to vector<8x512xf32>
    %276 = arith.mulf %274, %275 : vector<8x512xf32>
    %277 = arith.addf %271, %276 : vector<8x512xf32>
    %c0_157 = arith.constant 0 : index
    %c0_158 = arith.constant 0 : index
    %c0_159 = arith.constant 0 : index
    %c1029 = arith.constant 1029 : index
    %278 = vector.load %arg4[%c0_157, %c0_158, %c0_159, %c1029] : memref<1x1x2x4736xf32, #tpu.memory_space<vmem>>, vector<1x1x1x512xf32>
    %279 = vector.shape_cast %278 : vector<1x1x1x512xf32> to vector<1x512xf32>
    %280 = vector.broadcast %11 : vector<8x1xf32> to vector<8x512xf32>
    %281 = vector.broadcast %279 : vector<1x512xf32> to vector<8x512xf32>
    %282 = arith.mulf %280, %281 : vector<8x512xf32>
    %283 = arith.addf %277, %282 : vector<8x512xf32>
    %c0_160 = arith.constant 0 : index
    %c0_161 = arith.constant 0 : index
    %c1_162 = arith.constant 1 : index
    %c1029_163 = arith.constant 1029 : index
    %284 = vector.load %arg4[%c0_160, %c0_161, %c1_162, %c1029_163] : memref<1x1x2x4736xf32, #tpu.memory_space<vmem>>, vector<1x1x1x512xf32>
    %285 = vector.shape_cast %284 : vector<1x1x1x512xf32> to vector<1x512xf32>
    %286 = vector.broadcast %12 : vector<8x1xf32> to vector<8x512xf32>
    %287 = vector.broadcast %285 : vector<1x512xf32> to vector<8x512xf32>
    %288 = arith.mulf %286, %287 : vector<8x512xf32>
    %289 = arith.addf %283, %288 : vector<8x512xf32>
    %c0_164 = arith.constant 0 : index
    %c0_165 = arith.constant 0 : index
    %c0_166 = arith.constant 0 : index
    %c1030 = arith.constant 1030 : index
    %290 = vector.load %arg4[%c0_164, %c0_165, %c0_166, %c1030] : memref<1x1x2x4736xf32, #tpu.memory_space<vmem>>, vector<1x1x1x512xf32>
    %291 = vector.shape_cast %290 : vector<1x1x1x512xf32> to vector<1x512xf32>
    %292 = vector.broadcast %13 : vector<8x1xf32> to vector<8x512xf32>
    %293 = vector.broadcast %291 : vector<1x512xf32> to vector<8x512xf32>
    %294 = arith.mulf %292, %293 : vector<8x512xf32>
    %295 = arith.addf %289, %294 : vector<8x512xf32>
    %c0_167 = arith.constant 0 : index
    %c0_168 = arith.constant 0 : index
    %c1_169 = arith.constant 1 : index
    %c1030_170 = arith.constant 1030 : index
    %296 = vector.load %arg4[%c0_167, %c0_168, %c1_169, %c1030_170] : memref<1x1x2x4736xf32, #tpu.memory_space<vmem>>, vector<1x1x1x512xf32>
    %297 = vector.shape_cast %296 : vector<1x1x1x512xf32> to vector<1x512xf32>
    %298 = vector.broadcast %14 : vector<8x1xf32> to vector<8x512xf32>
    %299 = vector.broadcast %297 : vector<1x512xf32> to vector<8x512xf32>
    %300 = arith.mulf %298, %299 : vector<8x512xf32>
    %301 = arith.addf %295, %300 : vector<8x512xf32>
    %c0_171 = arith.constant 0 : index
    %c0_172 = arith.constant 0 : index
    %c0_173 = arith.constant 0 : index
    %c1031 = arith.constant 1031 : index
    %302 = vector.load %arg4[%c0_171, %c0_172, %c0_173, %c1031] : memref<1x1x2x4736xf32, #tpu.memory_space<vmem>>, vector<1x1x1x512xf32>
    %303 = vector.shape_cast %302 : vector<1x1x1x512xf32> to vector<1x512xf32>
    %304 = vector.broadcast %15 : vector<8x1xf32> to vector<8x512xf32>
    %305 = vector.broadcast %303 : vector<1x512xf32> to vector<8x512xf32>
    %306 = arith.mulf %304, %305 : vector<8x512xf32>
    %307 = arith.addf %301, %306 : vector<8x512xf32>
    %c0_174 = arith.constant 0 : index
    %c0_175 = arith.constant 0 : index
    %c1_176 = arith.constant 1 : index
    %c1031_177 = arith.constant 1031 : index
    %308 = vector.load %arg4[%c0_174, %c0_175, %c1_176, %c1031_177] : memref<1x1x2x4736xf32, #tpu.memory_space<vmem>>, vector<1x1x1x512xf32>
    %309 = vector.shape_cast %308 : vector<1x1x1x512xf32> to vector<1x512xf32>
    %310 = vector.broadcast %16 : vector<8x1xf32> to vector<8x512xf32>
    %311 = vector.broadcast %309 : vector<1x512xf32> to vector<8x512xf32>
    %312 = arith.mulf %310, %311 : vector<8x512xf32>
    %313 = arith.addf %307, %312 : vector<8x512xf32>
    %c0_178 = arith.constant 0 : index
    %c0_179 = arith.constant 0 : index
    %c1024_180 = arith.constant 1024 : index
    %314 = vector.load %arg5[%c0_178, %c0_179, %c1024_180] : memref<1x8x4608xf32, #tpu.memory_space<vmem>>, vector<1x8x512xf32>
    %315 = vector.shape_cast %314 : vector<1x8x512xf32> to vector<8x512xf32>
    %316 = vector.shape_cast %313 : vector<8x512xf32> to vector<1x8x512xf32>
    tpu.vector_store %arg5[%c0_178, %c0_179, %c1024_180], %316 {strides = array<i32>} : memref<1x8x4608xf32, #tpu.memory_space<vmem>>, vector<1x8x512xf32>,
    %c0_181 = arith.constant 0 : index
    %c0_182 = arith.constant 0 : index
    %c0_183 = arith.constant 0 : index
    %c1536 = arith.constant 1536 : index
    %317 = vector.load %arg4[%c0_181, %c0_182, %c0_183, %c1536] : memref<1x1x2x4736xf32, #tpu.memory_space<vmem>>, vector<1x1x1x512xf32>
    %318 = vector.shape_cast %317 : vector<1x1x1x512xf32> to vector<1x512xf32>
    %319 = vector.broadcast %1 : vector<8x1xf32> to vector<8x512xf32>
    %320 = vector.broadcast %318 : vector<1x512xf32> to vector<8x512xf32>
    %321 = arith.mulf %319, %320 : vector<8x512xf32>
    %322 = arith.addf %19, %321 : vector<8x512xf32>
    %c0_184 = arith.constant 0 : index
    %c0_185 = arith.constant 0 : index
    %c1_186 = arith.constant 1 : index
    %c1536_187 = arith.constant 1536 : index
    %323 = vector.load %arg4[%c0_184, %c0_185, %c1_186, %c1536_187] : memref<1x1x2x4736xf32, #tpu.memory_space<vmem>>, vector<1x1x1x512xf32>
    %324 = vector.shape_cast %323 : vector<1x1x1x512xf32> to vector<1x512xf32>
    %325 = vector.broadcast %2 : vector<8x1xf32> to vector<8x512xf32>
    %326 = vector.broadcast %324 : vector<1x512xf32> to vector<8x512xf32>
    %327 = arith.mulf %325, %326 : vector<8x512xf32>
    %328 = arith.addf %322, %327 : vector<8x512xf32>
    %c0_188 = arith.constant 0 : index
    %c0_189 = arith.constant 0 : index
    %c0_190 = arith.constant 0 : index
    %c1537 = arith.constant 1537 : index
    %329 = vector.load %arg4[%c0_188, %c0_189, %c0_190, %c1537] : memref<1x1x2x4736xf32, #tpu.memory_space<vmem>>, vector<1x1x1x512xf32>
    %330 = vector.shape_cast %329 : vector<1x1x1x512xf32> to vector<1x512xf32>
    %331 = vector.broadcast %3 : vector<8x1xf32> to vector<8x512xf32>
    %332 = vector.broadcast %330 : vector<1x512xf32> to vector<8x512xf32>
    %333 = arith.mulf %331, %332 : vector<8x512xf32>
    %334 = arith.addf %328, %333 : vector<8x512xf32>
    %c0_191 = arith.constant 0 : index
    %c0_192 = arith.constant 0 : index
    %c1_193 = arith.constant 1 : index
    %c1537_194 = arith.constant 1537 : index
    %335 = vector.load %arg4[%c0_191, %c0_192, %c1_193, %c1537_194] : memref<1x1x2x4736xf32, #tpu.memory_space<vmem>>, vector<1x1x1x512xf32>
    %336 = vector.shape_cast %335 : vector<1x1x1x512xf32> to vector<1x512xf32>
    %337 = vector.broadcast %4 : vector<8x1xf32> to vector<8x512xf32>
    %338 = vector.broadcast %336 : vector<1x512xf32> to vector<8x512xf32>
    %339 = arith.mulf %337, %338 : vector<8x512xf32>
    %340 = arith.addf %334, %339 : vector<8x512xf32>
    %c0_195 = arith.constant 0 : index
    %c0_196 = arith.constant 0 : index
    %c0_197 = arith.constant 0 : index
    %c1538 = arith.constant 1538 : index
    %341 = vector.load %arg4[%c0_195, %c0_196, %c0_197, %c1538] : memref<1x1x2x4736xf32, #tpu.memory_space<vmem>>, vector<1x1x1x512xf32>
    %342 = vector.shape_cast %341 : vector<1x1x1x512xf32> to vector<1x512xf32>
    %343 = vector.broadcast %5 : vector<8x1xf32> to vector<8x512xf32>
    %344 = vector.broadcast %342 : vector<1x512xf32> to vector<8x512xf32>
    %345 = arith.mulf %343, %344 : vector<8x512xf32>
    %346 = arith.addf %340, %345 : vector<8x512xf32>
    %c0_198 = arith.constant 0 : index
    %c0_199 = arith.constant 0 : index
    %c1_200 = arith.constant 1 : index
    %c1538_201 = arith.constant 1538 : index
    %347 = vector.load %arg4[%c0_198, %c0_199, %c1_200, %c1538_201] : memref<1x1x2x4736xf32, #tpu.memory_space<vmem>>, vector<1x1x1x512xf32>
    %348 = vector.shape_cast %347 : vector<1x1x1x512xf32> to vector<1x512xf32>
    %349 = vector.broadcast %6 : vector<8x1xf32> to vector<8x512xf32>
    %350 = vector.broadcast %348 : vector<1x512xf32> to vector<8x512xf32>
    %351 = arith.mulf %349, %350 : vector<8x512xf32>
    %352 = arith.addf %346, %351 : vector<8x512xf32>
    %c0_202 = arith.constant 0 : index
    %c0_203 = arith.constant 0 : index
    %c0_204 = arith.constant 0 : index
    %c1539 = arith.constant 1539 : index
    %353 = vector.load %arg4[%c0_202, %c0_203, %c0_204, %c1539] : memref<1x1x2x4736xf32, #tpu.memory_space<vmem>>, vector<1x1x1x512xf32>
    %354 = vector.shape_cast %353 : vector<1x1x1x512xf32> to vector<1x512xf32>
    %355 = vector.broadcast %7 : vector<8x1xf32> to vector<8x512xf32>
    %356 = vector.broadcast %354 : vector<1x512xf32> to vector<8x512xf32>
    %357 = arith.mulf %355, %356 : vector<8x512xf32>
    %358 = arith.addf %352, %357 : vector<8x512xf32>
    %c0_205 = arith.constant 0 : index
    %c0_206 = arith.constant 0 : index
    %c1_207 = arith.constant 1 : index
    %c1539_208 = arith.constant 1539 : index
    %359 = vector.load %arg4[%c0_205, %c0_206, %c1_207, %c1539_208] : memref<1x1x2x4736xf32, #tpu.memory_space<vmem>>, vector<1x1x1x512xf32>
    %360 = vector.shape_cast %359 : vector<1x1x1x512xf32> to vector<1x512xf32>
    %361 = vector.broadcast %8 : vector<8x1xf32> to vector<8x512xf32>
    %362 = vector.broadcast %360 : vector<1x512xf32> to vector<8x512xf32>
    %363 = arith.mulf %361, %362 : vector<8x512xf32>
    %364 = arith.addf %358, %363 : vector<8x512xf32>
    %c0_209 = arith.constant 0 : index
    %c0_210 = arith.constant 0 : index
    %c0_211 = arith.constant 0 : index
    %c1540 = arith.constant 1540 : index
    %365 = vector.load %arg4[%c0_209, %c0_210, %c0_211, %c1540] : memref<1x1x2x4736xf32, #tpu.memory_space<vmem>>, vector<1x1x1x512xf32>
    %366 = vector.shape_cast %365 : vector<1x1x1x512xf32> to vector<1x512xf32>
    %367 = vector.broadcast %9 : vector<8x1xf32> to vector<8x512xf32>
    %368 = vector.broadcast %366 : vector<1x512xf32> to vector<8x512xf32>
    %369 = arith.mulf %367, %368 : vector<8x512xf32>
    %370 = arith.addf %364, %369 : vector<8x512xf32>
    %c0_212 = arith.constant 0 : index
    %c0_213 = arith.constant 0 : index
    %c1_214 = arith.constant 1 : index
    %c1540_215 = arith.constant 1540 : index
    %371 = vector.load %arg4[%c0_212, %c0_213, %c1_214, %c1540_215] : memref<1x1x2x4736xf32, #tpu.memory_space<vmem>>, vector<1x1x1x512xf32>
    %372 = vector.shape_cast %371 : vector<1x1x1x512xf32> to vector<1x512xf32>
    %373 = vector.broadcast %10 : vector<8x1xf32> to vector<8x512xf32>
    %374 = vector.broadcast %372 : vector<1x512xf32> to vector<8x512xf32>
    %375 = arith.mulf %373, %374 : vector<8x512xf32>
    %376 = arith.addf %370, %375 : vector<8x512xf32>
    %c0_216 = arith.constant 0 : index
    %c0_217 = arith.constant 0 : index
    %c0_218 = arith.constant 0 : index
    %c1541 = arith.constant 1541 : index
    %377 = vector.load %arg4[%c0_216, %c0_217, %c0_218, %c1541] : memref<1x1x2x4736xf32, #tpu.memory_space<vmem>>, vector<1x1x1x512xf32>
    %378 = vector.shape_cast %377 : vector<1x1x1x512xf32> to vector<1x512xf32>
    %379 = vector.broadcast %11 : vector<8x1xf32> to vector<8x512xf32>
    %380 = vector.broadcast %378 : vector<1x512xf32> to vector<8x512xf32>
    %381 = arith.mulf %379, %380 : vector<8x512xf32>
    %382 = arith.addf %376, %381 : vector<8x512xf32>
    %c0_219 = arith.constant 0 : index
    %c0_220 = arith.constant 0 : index
    %c1_221 = arith.constant 1 : index
    %c1541_222 = arith.constant 1541 : index
    %383 = vector.load %arg4[%c0_219, %c0_220, %c1_221, %c1541_222] : memref<1x1x2x4736xf32, #tpu.memory_space<vmem>>, vector<1x1x1x512xf32>
    %384 = vector.shape_cast %383 : vector<1x1x1x512xf32> to vector<1x512xf32>
    %385 = vector.broadcast %12 : vector<8x1xf32> to vector<8x512xf32>
    %386 = vector.broadcast %384 : vector<1x512xf32> to vector<8x512xf32>
    %387 = arith.mulf %385, %386 : vector<8x512xf32>
    %388 = arith.addf %382, %387 : vector<8x512xf32>
    %c0_223 = arith.constant 0 : index
    %c0_224 = arith.constant 0 : index
    %c0_225 = arith.constant 0 : index
    %c1542 = arith.constant 1542 : index
    %389 = vector.load %arg4[%c0_223, %c0_224, %c0_225, %c1542] : memref<1x1x2x4736xf32, #tpu.memory_space<vmem>>, vector<1x1x1x512xf32>
    %390 = vector.shape_cast %389 : vector<1x1x1x512xf32> to vector<1x512xf32>
    %391 = vector.broadcast %13 : vector<8x1xf32> to vector<8x512xf32>
    %392 = vector.broadcast %390 : vector<1x512xf32> to vector<8x512xf32>
    %393 = arith.mulf %391, %392 : vector<8x512xf32>
    %394 = arith.addf %388, %393 : vector<8x512xf32>
    %c0_226 = arith.constant 0 : index
    %c0_227 = arith.constant 0 : index
    %c1_228 = arith.constant 1 : index
    %c1542_229 = arith.constant 1542 : index
    %395 = vector.load %arg4[%c0_226, %c0_227, %c1_228, %c1542_229] : memref<1x1x2x4736xf32, #tpu.memory_space<vmem>>, vector<1x1x1x512xf32>
    %396 = vector.shape_cast %395 : vector<1x1x1x512xf32> to vector<1x512xf32>
    %397 = vector.broadcast %14 : vector<8x1xf32> to vector<8x512xf32>
    %398 = vector.broadcast %396 : vector<1x512xf32> to vector<8x512xf32>
    %399 = arith.mulf %397, %398 : vector<8x512xf32>
    %400 = arith.addf %394, %399 : vector<8x512xf32>
    %c0_230 = arith.constant 0 : index
    %c0_231 = arith.constant 0 : index
    %c0_232 = arith.constant 0 : index
    %c1543 = arith.constant 1543 : index
    %401 = vector.load %arg4[%c0_230, %c0_231, %c0_232, %c1543] : memref<1x1x2x4736xf32, #tpu.memory_space<vmem>>, vector<1x1x1x512xf32>
    %402 = vector.shape_cast %401 : vector<1x1x1x512xf32> to vector<1x512xf32>
    %403 = vector.broadcast %15 : vector<8x1xf32> to vector<8x512xf32>
    %404 = vector.broadcast %402 : vector<1x512xf32> to vector<8x512xf32>
    %405 = arith.mulf %403, %404 : vector<8x512xf32>
    %406 = arith.addf %400, %405 : vector<8x512xf32>
    %c0_233 = arith.constant 0 : index
    %c0_234 = arith.constant 0 : index
    %c1_235 = arith.constant 1 : index
    %c1543_236 = arith.constant 1543 : index
    %407 = vector.load %arg4[%c0_233, %c0_234, %c1_235, %c1543_236] : memref<1x1x2x4736xf32, #tpu.memory_space<vmem>>, vector<1x1x1x512xf32>
    %408 = vector.shape_cast %407 : vector<1x1x1x512xf32> to vector<1x512xf32>
    %409 = vector.broadcast %16 : vector<8x1xf32> to vector<8x512xf32>
    %410 = vector.broadcast %408 : vector<1x512xf32> to vector<8x512xf32>
    %411 = arith.mulf %409, %410 : vector<8x512xf32>
    %412 = arith.addf %406, %411 : vector<8x512xf32>
    %c0_237 = arith.constant 0 : index
    %c0_238 = arith.constant 0 : index
    %c1536_239 = arith.constant 1536 : index
    %413 = vector.load %arg5[%c0_237, %c0_238, %c1536_239] : memref<1x8x4608xf32, #tpu.memory_space<vmem>>, vector<1x8x512xf32>
    %414 = vector.shape_cast %413 : vector<1x8x512xf32> to vector<8x512xf32>
    %415 = vector.shape_cast %412 : vector<8x512xf32> to vector<1x8x512xf32>
    tpu.vector_store %arg5[%c0_237, %c0_238, %c1536_239], %415 {strides = array<i32>} : memref<1x8x4608xf32, #tpu.memory_space<vmem>>, vector<1x8x512xf32>,
    %c0_240 = arith.constant 0 : index
    %c0_241 = arith.constant 0 : index
    %c0_242 = arith.constant 0 : index
    %c2048 = arith.constant 2048 : index
    %416 = vector.load %arg4[%c0_240, %c0_241, %c0_242, %c2048] : memref<1x1x2x4736xf32, #tpu.memory_space<vmem>>, vector<1x1x1x512xf32>
    %417 = vector.shape_cast %416 : vector<1x1x1x512xf32> to vector<1x512xf32>
    %418 = vector.broadcast %1 : vector<8x1xf32> to vector<8x512xf32>
    %419 = vector.broadcast %417 : vector<1x512xf32> to vector<8x512xf32>
    %420 = arith.mulf %418, %419 : vector<8x512xf32>
    %421 = arith.addf %19, %420 : vector<8x512xf32>
    %c0_243 = arith.constant 0 : index
    %c0_244 = arith.constant 0 : index
    %c1_245 = arith.constant 1 : index
    %c2048_246 = arith.constant 2048 : index
    %422 = vector.load %arg4[%c0_243, %c0_244, %c1_245, %c2048_246] : memref<1x1x2x4736xf32, #tpu.memory_space<vmem>>, vector<1x1x1x512xf32>
    %423 = vector.shape_cast %422 : vector<1x1x1x512xf32> to vector<1x512xf32>
    %424 = vector.broadcast %2 : vector<8x1xf32> to vector<8x512xf32>
    %425 = vector.broadcast %423 : vector<1x512xf32> to vector<8x512xf32>
    %426 = arith.mulf %424, %425 : vector<8x512xf32>
    %427 = arith.addf %421, %426 : vector<8x512xf32>
    %c0_247 = arith.constant 0 : index
    %c0_248 = arith.constant 0 : index
    %c0_249 = arith.constant 0 : index
    %c2049 = arith.constant 2049 : index
    %428 = vector.load %arg4[%c0_247, %c0_248, %c0_249, %c2049] : memref<1x1x2x4736xf32, #tpu.memory_space<vmem>>, vector<1x1x1x512xf32>
    %429 = vector.shape_cast %428 : vector<1x1x1x512xf32> to vector<1x512xf32>
    %430 = vector.broadcast %3 : vector<8x1xf32> to vector<8x512xf32>
    %431 = vector.broadcast %429 : vector<1x512xf32> to vector<8x512xf32>
    %432 = arith.mulf %430, %431 : vector<8x512xf32>
    %433 = arith.addf %427, %432 : vector<8x512xf32>
    %c0_250 = arith.constant 0 : index
    %c0_251 = arith.constant 0 : index
    %c1_252 = arith.constant 1 : index
    %c2049_253 = arith.constant 2049 : index
    %434 = vector.load %arg4[%c0_250, %c0_251, %c1_252, %c2049_253] : memref<1x1x2x4736xf32, #tpu.memory_space<vmem>>, vector<1x1x1x512xf32>
    %435 = vector.shape_cast %434 : vector<1x1x1x512xf32> to vector<1x512xf32>
    %436 = vector.broadcast %4 : vector<8x1xf32> to vector<8x512xf32>
    %437 = vector.broadcast %435 : vector<1x512xf32> to vector<8x512xf32>
    %438 = arith.mulf %436, %437 : vector<8x512xf32>
    %439 = arith.addf %433, %438 : vector<8x512xf32>
    %c0_254 = arith.constant 0 : index
    %c0_255 = arith.constant 0 : index
    %c0_256 = arith.constant 0 : index
    %c2050 = arith.constant 2050 : index
    %440 = vector.load %arg4[%c0_254, %c0_255, %c0_256, %c2050] : memref<1x1x2x4736xf32, #tpu.memory_space<vmem>>, vector<1x1x1x512xf32>
    %441 = vector.shape_cast %440 : vector<1x1x1x512xf32> to vector<1x512xf32>
    %442 = vector.broadcast %5 : vector<8x1xf32> to vector<8x512xf32>
    %443 = vector.broadcast %441 : vector<1x512xf32> to vector<8x512xf32>
    %444 = arith.mulf %442, %443 : vector<8x512xf32>
    %445 = arith.addf %439, %444 : vector<8x512xf32>
    %c0_257 = arith.constant 0 : index
    %c0_258 = arith.constant 0 : index
    %c1_259 = arith.constant 1 : index
    %c2050_260 = arith.constant 2050 : index
    %446 = vector.load %arg4[%c0_257, %c0_258, %c1_259, %c2050_260] : memref<1x1x2x4736xf32, #tpu.memory_space<vmem>>, vector<1x1x1x512xf32>
    %447 = vector.shape_cast %446 : vector<1x1x1x512xf32> to vector<1x512xf32>
    %448 = vector.broadcast %6 : vector<8x1xf32> to vector<8x512xf32>
    %449 = vector.broadcast %447 : vector<1x512xf32> to vector<8x512xf32>
    %450 = arith.mulf %448, %449 : vector<8x512xf32>
    %451 = arith.addf %445, %450 : vector<8x512xf32>
    %c0_261 = arith.constant 0 : index
    %c0_262 = arith.constant 0 : index
    %c0_263 = arith.constant 0 : index
    %c2051 = arith.constant 2051 : index
    %452 = vector.load %arg4[%c0_261, %c0_262, %c0_263, %c2051] : memref<1x1x2x4736xf32, #tpu.memory_space<vmem>>, vector<1x1x1x512xf32>
    %453 = vector.shape_cast %452 : vector<1x1x1x512xf32> to vector<1x512xf32>
    %454 = vector.broadcast %7 : vector<8x1xf32> to vector<8x512xf32>
    %455 = vector.broadcast %453 : vector<1x512xf32> to vector<8x512xf32>
    %456 = arith.mulf %454, %455 : vector<8x512xf32>
    %457 = arith.addf %451, %456 : vector<8x512xf32>
    %c0_264 = arith.constant 0 : index
    %c0_265 = arith.constant 0 : index
    %c1_266 = arith.constant 1 : index
    %c2051_267 = arith.constant 2051 : index
    %458 = vector.load %arg4[%c0_264, %c0_265, %c1_266, %c2051_267] : memref<1x1x2x4736xf32, #tpu.memory_space<vmem>>, vector<1x1x1x512xf32>
    %459 = vector.shape_cast %458 : vector<1x1x1x512xf32> to vector<1x512xf32>
    %460 = vector.broadcast %8 : vector<8x1xf32> to vector<8x512xf32>
    %461 = vector.broadcast %459 : vector<1x512xf32> to vector<8x512xf32>
    %462 = arith.mulf %460, %461 : vector<8x512xf32>
    %463 = arith.addf %457, %462 : vector<8x512xf32>
    %c0_268 = arith.constant 0 : index
    %c0_269 = arith.constant 0 : index
    %c0_270 = arith.constant 0 : index
    %c2052 = arith.constant 2052 : index
    %464 = vector.load %arg4[%c0_268, %c0_269, %c0_270, %c2052] : memref<1x1x2x4736xf32, #tpu.memory_space<vmem>>, vector<1x1x1x512xf32>
    %465 = vector.shape_cast %464 : vector<1x1x1x512xf32> to vector<1x512xf32>
    %466 = vector.broadcast %9 : vector<8x1xf32> to vector<8x512xf32>
    %467 = vector.broadcast %465 : vector<1x512xf32> to vector<8x512xf32>
    %468 = arith.mulf %466, %467 : vector<8x512xf32>
    %469 = arith.addf %463, %468 : vector<8x512xf32>
    %c0_271 = arith.constant 0 : index
    %c0_272 = arith.constant 0 : index
    %c1_273 = arith.constant 1 : index
    %c2052_274 = arith.constant 2052 : index
    %470 = vector.load %arg4[%c0_271, %c0_272, %c1_273, %c2052_274] : memref<1x1x2x4736xf32, #tpu.memory_space<vmem>>, vector<1x1x1x512xf32>
    %471 = vector.shape_cast %470 : vector<1x1x1x512xf32> to vector<1x512xf32>
    %472 = vector.broadcast %10 : vector<8x1xf32> to vector<8x512xf32>
    %473 = vector.broadcast %471 : vector<1x512xf32> to vector<8x512xf32>
    %474 = arith.mulf %472, %473 : vector<8x512xf32>
    %475 = arith.addf %469, %474 : vector<8x512xf32>
    %c0_275 = arith.constant 0 : index
    %c0_276 = arith.constant 0 : index
    %c0_277 = arith.constant 0 : index
    %c2053 = arith.constant 2053 : index
    %476 = vector.load %arg4[%c0_275, %c0_276, %c0_277, %c2053] : memref<1x1x2x4736xf32, #tpu.memory_space<vmem>>, vector<1x1x1x512xf32>
    %477 = vector.shape_cast %476 : vector<1x1x1x512xf32> to vector<1x512xf32>
    %478 = vector.broadcast %11 : vector<8x1xf32> to vector<8x512xf32>
    %479 = vector.broadcast %477 : vector<1x512xf32> to vector<8x512xf32>
    %480 = arith.mulf %478, %479 : vector<8x512xf32>
    %481 = arith.addf %475, %480 : vector<8x512xf32>
    %c0_278 = arith.constant 0 : index
    %c0_279 = arith.constant 0 : index
    %c1_280 = arith.constant 1 : index
    %c2053_281 = arith.constant 2053 : index
    %482 = vector.load %arg4[%c0_278, %c0_279, %c1_280, %c2053_281] : memref<1x1x2x4736xf32, #tpu.memory_space<vmem>>, vector<1x1x1x512xf32>
    %483 = vector.shape_cast %482 : vector<1x1x1x512xf32> to vector<1x512xf32>
    %484 = vector.broadcast %12 : vector<8x1xf32> to vector<8x512xf32>
    %485 = vector.broadcast %483 : vector<1x512xf32> to vector<8x512xf32>
    %486 = arith.mulf %484, %485 : vector<8x512xf32>
    %487 = arith.addf %481, %486 : vector<8x512xf32>
    %c0_282 = arith.constant 0 : index
    %c0_283 = arith.constant 0 : index
    %c0_284 = arith.constant 0 : index
    %c2054 = arith.constant 2054 : index
    %488 = vector.load %arg4[%c0_282, %c0_283, %c0_284, %c2054] : memref<1x1x2x4736xf32, #tpu.memory_space<vmem>>, vector<1x1x1x512xf32>
    %489 = vector.shape_cast %488 : vector<1x1x1x512xf32> to vector<1x512xf32>
    %490 = vector.broadcast %13 : vector<8x1xf32> to vector<8x512xf32>
    %491 = vector.broadcast %489 : vector<1x512xf32> to vector<8x512xf32>
    %492 = arith.mulf %490, %491 : vector<8x512xf32>
    %493 = arith.addf %487, %492 : vector<8x512xf32>
    %c0_285 = arith.constant 0 : index
    %c0_286 = arith.constant 0 : index
    %c1_287 = arith.constant 1 : index
    %c2054_288 = arith.constant 2054 : index
    %494 = vector.load %arg4[%c0_285, %c0_286, %c1_287, %c2054_288] : memref<1x1x2x4736xf32, #tpu.memory_space<vmem>>, vector<1x1x1x512xf32>
    %495 = vector.shape_cast %494 : vector<1x1x1x512xf32> to vector<1x512xf32>
    %496 = vector.broadcast %14 : vector<8x1xf32> to vector<8x512xf32>
    %497 = vector.broadcast %495 : vector<1x512xf32> to vector<8x512xf32>
    %498 = arith.mulf %496, %497 : vector<8x512xf32>
    %499 = arith.addf %493, %498 : vector<8x512xf32>
    %c0_289 = arith.constant 0 : index
    %c0_290 = arith.constant 0 : index
    %c0_291 = arith.constant 0 : index
    %c2055 = arith.constant 2055 : index
    %500 = vector.load %arg4[%c0_289, %c0_290, %c0_291, %c2055] : memref<1x1x2x4736xf32, #tpu.memory_space<vmem>>, vector<1x1x1x512xf32>
    %501 = vector.shape_cast %500 : vector<1x1x1x512xf32> to vector<1x512xf32>
    %502 = vector.broadcast %15 : vector<8x1xf32> to vector<8x512xf32>
    %503 = vector.broadcast %501 : vector<1x512xf32> to vector<8x512xf32>
    %504 = arith.mulf %502, %503 : vector<8x512xf32>
    %505 = arith.addf %499, %504 : vector<8x512xf32>
    %c0_292 = arith.constant 0 : index
    %c0_293 = arith.constant 0 : index
    %c1_294 = arith.constant 1 : index
    %c2055_295 = arith.constant 2055 : index
    %506 = vector.load %arg4[%c0_292, %c0_293, %c1_294, %c2055_295] : memref<1x1x2x4736xf32, #tpu.memory_space<vmem>>, vector<1x1x1x512xf32>
    %507 = vector.shape_cast %506 : vector<1x1x1x512xf32> to vector<1x512xf32>
    %508 = vector.broadcast %16 : vector<8x1xf32> to vector<8x512xf32>
    %509 = vector.broadcast %507 : vector<1x512xf32> to vector<8x512xf32>
    %510 = arith.mulf %508, %509 : vector<8x512xf32>
    %511 = arith.addf %505, %510 : vector<8x512xf32>
    %c0_296 = arith.constant 0 : index
    %c0_297 = arith.constant 0 : index
    %c2048_298 = arith.constant 2048 : index
    %512 = vector.load %arg5[%c0_296, %c0_297, %c2048_298] : memref<1x8x4608xf32, #tpu.memory_space<vmem>>, vector<1x8x512xf32>
    %513 = vector.shape_cast %512 : vector<1x8x512xf32> to vector<8x512xf32>
    %514 = vector.shape_cast %511 : vector<8x512xf32> to vector<1x8x512xf32>
    tpu.vector_store %arg5[%c0_296, %c0_297, %c2048_298], %514 {strides = array<i32>} : memref<1x8x4608xf32, #tpu.memory_space<vmem>>, vector<1x8x512xf32>,
    %c0_299 = arith.constant 0 : index
    %c0_300 = arith.constant 0 : index
    %c0_301 = arith.constant 0 : index
    %c2560 = arith.constant 2560 : index
    %515 = vector.load %arg4[%c0_299, %c0_300, %c0_301, %c2560] : memref<1x1x2x4736xf32, #tpu.memory_space<vmem>>, vector<1x1x1x512xf32>
    %516 = vector.shape_cast %515 : vector<1x1x1x512xf32> to vector<1x512xf32>
    %517 = vector.broadcast %1 : vector<8x1xf32> to vector<8x512xf32>
    %518 = vector.broadcast %516 : vector<1x512xf32> to vector<8x512xf32>
    %519 = arith.mulf %517, %518 : vector<8x512xf32>
    %520 = arith.addf %19, %519 : vector<8x512xf32>
    %c0_302 = arith.constant 0 : index
    %c0_303 = arith.constant 0 : index
    %c1_304 = arith.constant 1 : index
    %c2560_305 = arith.constant 2560 : index
    %521 = vector.load %arg4[%c0_302, %c0_303, %c1_304, %c2560_305] : memref<1x1x2x4736xf32, #tpu.memory_space<vmem>>, vector<1x1x1x512xf32>
    %522 = vector.shape_cast %521 : vector<1x1x1x512xf32> to vector<1x512xf32>
    %523 = vector.broadcast %2 : vector<8x1xf32> to vector<8x512xf32>
    %524 = vector.broadcast %522 : vector<1x512xf32> to vector<8x512xf32>
    %525 = arith.mulf %523, %524 : vector<8x512xf32>
    %526 = arith.addf %520, %525 : vector<8x512xf32>
    %c0_306 = arith.constant 0 : index
    %c0_307 = arith.constant 0 : index
    %c0_308 = arith.constant 0 : index
    %c2561 = arith.constant 2561 : index
    %527 = vector.load %arg4[%c0_306, %c0_307, %c0_308, %c2561] : memref<1x1x2x4736xf32, #tpu.memory_space<vmem>>, vector<1x1x1x512xf32>
    %528 = vector.shape_cast %527 : vector<1x1x1x512xf32> to vector<1x512xf32>
    %529 = vector.broadcast %3 : vector<8x1xf32> to vector<8x512xf32>
    %530 = vector.broadcast %528 : vector<1x512xf32> to vector<8x512xf32>
    %531 = arith.mulf %529, %530 : vector<8x512xf32>
    %532 = arith.addf %526, %531 : vector<8x512xf32>
    %c0_309 = arith.constant 0 : index
    %c0_310 = arith.constant 0 : index
    %c1_311 = arith.constant 1 : index
    %c2561_312 = arith.constant 2561 : index
    %533 = vector.load %arg4[%c0_309, %c0_310, %c1_311, %c2561_312] : memref<1x1x2x4736xf32, #tpu.memory_space<vmem>>, vector<1x1x1x512xf32>
    %534 = vector.shape_cast %533 : vector<1x1x1x512xf32> to vector<1x512xf32>
    %535 = vector.broadcast %4 : vector<8x1xf32> to vector<8x512xf32>
    %536 = vector.broadcast %534 : vector<1x512xf32> to vector<8x512xf32>
    %537 = arith.mulf %535, %536 : vector<8x512xf32>
    %538 = arith.addf %532, %537 : vector<8x512xf32>
    %c0_313 = arith.constant 0 : index
    %c0_314 = arith.constant 0 : index
    %c0_315 = arith.constant 0 : index
    %c2562 = arith.constant 2562 : index
    %539 = vector.load %arg4[%c0_313, %c0_314, %c0_315, %c2562] : memref<1x1x2x4736xf32, #tpu.memory_space<vmem>>, vector<1x1x1x512xf32>
    %540 = vector.shape_cast %539 : vector<1x1x1x512xf32> to vector<1x512xf32>
    %541 = vector.broadcast %5 : vector<8x1xf32> to vector<8x512xf32>
    %542 = vector.broadcast %540 : vector<1x512xf32> to vector<8x512xf32>
    %543 = arith.mulf %541, %542 : vector<8x512xf32>
    %544 = arith.addf %538, %543 : vector<8x512xf32>
    %c0_316 = arith.constant 0 : index
    %c0_317 = arith.constant 0 : index
    %c1_318 = arith.constant 1 : index
    %c2562_319 = arith.constant 2562 : index
    %545 = vector.load %arg4[%c0_316, %c0_317, %c1_318, %c2562_319] : memref<1x1x2x4736xf32, #tpu.memory_space<vmem>>, vector<1x1x1x512xf32>
    %546 = vector.shape_cast %545 : vector<1x1x1x512xf32> to vector<1x512xf32>
    %547 = vector.broadcast %6 : vector<8x1xf32> to vector<8x512xf32>
    %548 = vector.broadcast %546 : vector<1x512xf32> to vector<8x512xf32>
    %549 = arith.mulf %547, %548 : vector<8x512xf32>
    %550 = arith.addf %544, %549 : vector<8x512xf32>
    %c0_320 = arith.constant 0 : index
    %c0_321 = arith.constant 0 : index
    %c0_322 = arith.constant 0 : index
    %c2563 = arith.constant 2563 : index
    %551 = vector.load %arg4[%c0_320, %c0_321, %c0_322, %c2563] : memref<1x1x2x4736xf32, #tpu.memory_space<vmem>>, vector<1x1x1x512xf32>
    %552 = vector.shape_cast %551 : vector<1x1x1x512xf32> to vector<1x512xf32>
    %553 = vector.broadcast %7 : vector<8x1xf32> to vector<8x512xf32>
    %554 = vector.broadcast %552 : vector<1x512xf32> to vector<8x512xf32>
    %555 = arith.mulf %553, %554 : vector<8x512xf32>
    %556 = arith.addf %550, %555 : vector<8x512xf32>
    %c0_323 = arith.constant 0 : index
    %c0_324 = arith.constant 0 : index
    %c1_325 = arith.constant 1 : index
    %c2563_326 = arith.constant 2563 : index
    %557 = vector.load %arg4[%c0_323, %c0_324, %c1_325, %c2563_326] : memref<1x1x2x4736xf32, #tpu.memory_space<vmem>>, vector<1x1x1x512xf32>
    %558 = vector.shape_cast %557 : vector<1x1x1x512xf32> to vector<1x512xf32>
    %559 = vector.broadcast %8 : vector<8x1xf32> to vector<8x512xf32>
    %560 = vector.broadcast %558 : vector<1x512xf32> to vector<8x512xf32>
    %561 = arith.mulf %559, %560 : vector<8x512xf32>
    %562 = arith.addf %556, %561 : vector<8x512xf32>
    %c0_327 = arith.constant 0 : index
    %c0_328 = arith.constant 0 : index
    %c0_329 = arith.constant 0 : index
    %c2564 = arith.constant 2564 : index
    %563 = vector.load %arg4[%c0_327, %c0_328, %c0_329, %c2564] : memref<1x1x2x4736xf32, #tpu.memory_space<vmem>>, vector<1x1x1x512xf32>
    %564 = vector.shape_cast %563 : vector<1x1x1x512xf32> to vector<1x512xf32>
    %565 = vector.broadcast %9 : vector<8x1xf32> to vector<8x512xf32>
    %566 = vector.broadcast %564 : vector<1x512xf32> to vector<8x512xf32>
    %567 = arith.mulf %565, %566 : vector<8x512xf32>
    %568 = arith.addf %562, %567 : vector<8x512xf32>
    %c0_330 = arith.constant 0 : index
    %c0_331 = arith.constant 0 : index
    %c1_332 = arith.constant 1 : index
    %c2564_333 = arith.constant 2564 : index
    %569 = vector.load %arg4[%c0_330, %c0_331, %c1_332, %c2564_333] : memref<1x1x2x4736xf32, #tpu.memory_space<vmem>>, vector<1x1x1x512xf32>
    %570 = vector.shape_cast %569 : vector<1x1x1x512xf32> to vector<1x512xf32>
    %571 = vector.broadcast %10 : vector<8x1xf32> to vector<8x512xf32>
    %572 = vector.broadcast %570 : vector<1x512xf32> to vector<8x512xf32>
    %573 = arith.mulf %571, %572 : vector<8x512xf32>
    %574 = arith.addf %568, %573 : vector<8x512xf32>
    %c0_334 = arith.constant 0 : index
    %c0_335 = arith.constant 0 : index
    %c0_336 = arith.constant 0 : index
    %c2565 = arith.constant 2565 : index
    %575 = vector.load %arg4[%c0_334, %c0_335, %c0_336, %c2565] : memref<1x1x2x4736xf32, #tpu.memory_space<vmem>>, vector<1x1x1x512xf32>
    %576 = vector.shape_cast %575 : vector<1x1x1x512xf32> to vector<1x512xf32>
    %577 = vector.broadcast %11 : vector<8x1xf32> to vector<8x512xf32>
    %578 = vector.broadcast %576 : vector<1x512xf32> to vector<8x512xf32>
    %579 = arith.mulf %577, %578 : vector<8x512xf32>
    %580 = arith.addf %574, %579 : vector<8x512xf32>
    %c0_337 = arith.constant 0 : index
    %c0_338 = arith.constant 0 : index
    %c1_339 = arith.constant 1 : index
    %c2565_340 = arith.constant 2565 : index
    %581 = vector.load %arg4[%c0_337, %c0_338, %c1_339, %c2565_340] : memref<1x1x2x4736xf32, #tpu.memory_space<vmem>>, vector<1x1x1x512xf32>
    %582 = vector.shape_cast %581 : vector<1x1x1x512xf32> to vector<1x512xf32>
    %583 = vector.broadcast %12 : vector<8x1xf32> to vector<8x512xf32>
    %584 = vector.broadcast %582 : vector<1x512xf32> to vector<8x512xf32>
    %585 = arith.mulf %583, %584 : vector<8x512xf32>
    %586 = arith.addf %580, %585 : vector<8x512xf32>
    %c0_341 = arith.constant 0 : index
    %c0_342 = arith.constant 0 : index
    %c0_343 = arith.constant 0 : index
    %c2566 = arith.constant 2566 : index
    %587 = vector.load %arg4[%c0_341, %c0_342, %c0_343, %c2566] : memref<1x1x2x4736xf32, #tpu.memory_space<vmem>>, vector<1x1x1x512xf32>
    %588 = vector.shape_cast %587 : vector<1x1x1x512xf32> to vector<1x512xf32>
    %589 = vector.broadcast %13 : vector<8x1xf32> to vector<8x512xf32>
    %590 = vector.broadcast %588 : vector<1x512xf32> to vector<8x512xf32>
    %591 = arith.mulf %589, %590 : vector<8x512xf32>
    %592 = arith.addf %586, %591 : vector<8x512xf32>
    %c0_344 = arith.constant 0 : index
    %c0_345 = arith.constant 0 : index
    %c1_346 = arith.constant 1 : index
    %c2566_347 = arith.constant 2566 : index
    %593 = vector.load %arg4[%c0_344, %c0_345, %c1_346, %c2566_347] : memref<1x1x2x4736xf32, #tpu.memory_space<vmem>>, vector<1x1x1x512xf32>
    %594 = vector.shape_cast %593 : vector<1x1x1x512xf32> to vector<1x512xf32>
    %595 = vector.broadcast %14 : vector<8x1xf32> to vector<8x512xf32>
    %596 = vector.broadcast %594 : vector<1x512xf32> to vector<8x512xf32>
    %597 = arith.mulf %595, %596 : vector<8x512xf32>
    %598 = arith.addf %592, %597 : vector<8x512xf32>
    %c0_348 = arith.constant 0 : index
    %c0_349 = arith.constant 0 : index
    %c0_350 = arith.constant 0 : index
    %c2567 = arith.constant 2567 : index
    %599 = vector.load %arg4[%c0_348, %c0_349, %c0_350, %c2567] : memref<1x1x2x4736xf32, #tpu.memory_space<vmem>>, vector<1x1x1x512xf32>
    %600 = vector.shape_cast %599 : vector<1x1x1x512xf32> to vector<1x512xf32>
    %601 = vector.broadcast %15 : vector<8x1xf32> to vector<8x512xf32>
    %602 = vector.broadcast %600 : vector<1x512xf32> to vector<8x512xf32>
    %603 = arith.mulf %601, %602 : vector<8x512xf32>
    %604 = arith.addf %598, %603 : vector<8x512xf32>
    %c0_351 = arith.constant 0 : index
    %c0_352 = arith.constant 0 : index
    %c1_353 = arith.constant 1 : index
    %c2567_354 = arith.constant 2567 : index
    %605 = vector.load %arg4[%c0_351, %c0_352, %c1_353, %c2567_354] : memref<1x1x2x4736xf32, #tpu.memory_space<vmem>>, vector<1x1x1x512xf32>
    %606 = vector.shape_cast %605 : vector<1x1x1x512xf32> to vector<1x512xf32>
    %607 = vector.broadcast %16 : vector<8x1xf32> to vector<8x512xf32>
    %608 = vector.broadcast %606 : vector<1x512xf32> to vector<8x512xf32>
    %609 = arith.mulf %607, %608 : vector<8x512xf32>
    %610 = arith.addf %604, %609 : vector<8x512xf32>
    %c0_355 = arith.constant 0 : index
    %c0_356 = arith.constant 0 : index
    %c2560_357 = arith.constant 2560 : index
    %611 = vector.load %arg5[%c0_355, %c0_356, %c2560_357] : memref<1x8x4608xf32, #tpu.memory_space<vmem>>, vector<1x8x512xf32>
    %612 = vector.shape_cast %611 : vector<1x8x512xf32> to vector<8x512xf32>
    %613 = vector.shape_cast %610 : vector<8x512xf32> to vector<1x8x512xf32>
    tpu.vector_store %arg5[%c0_355, %c0_356, %c2560_357], %613 {strides = array<i32>} : memref<1x8x4608xf32, #tpu.memory_space<vmem>>, vector<1x8x512xf32>,
    %c0_358 = arith.constant 0 : index
    %c0_359 = arith.constant 0 : index
    %c0_360 = arith.constant 0 : index
    %c3072 = arith.constant 3072 : index
    %614 = vector.load %arg4[%c0_358, %c0_359, %c0_360, %c3072] : memref<1x1x2x4736xf32, #tpu.memory_space<vmem>>, vector<1x1x1x512xf32>
    %615 = vector.shape_cast %614 : vector<1x1x1x512xf32> to vector<1x512xf32>
    %616 = vector.broadcast %1 : vector<8x1xf32> to vector<8x512xf32>
    %617 = vector.broadcast %615 : vector<1x512xf32> to vector<8x512xf32>
    %618 = arith.mulf %616, %617 : vector<8x512xf32>
    %619 = arith.addf %19, %618 : vector<8x512xf32>
    %c0_361 = arith.constant 0 : index
    %c0_362 = arith.constant 0 : index
    %c1_363 = arith.constant 1 : index
    %c3072_364 = arith.constant 3072 : index
    %620 = vector.load %arg4[%c0_361, %c0_362, %c1_363, %c3072_364] : memref<1x1x2x4736xf32, #tpu.memory_space<vmem>>, vector<1x1x1x512xf32>
    %621 = vector.shape_cast %620 : vector<1x1x1x512xf32> to vector<1x512xf32>
    %622 = vector.broadcast %2 : vector<8x1xf32> to vector<8x512xf32>
    %623 = vector.broadcast %621 : vector<1x512xf32> to vector<8x512xf32>
    %624 = arith.mulf %622, %623 : vector<8x512xf32>
    %625 = arith.addf %619, %624 : vector<8x512xf32>
    %c0_365 = arith.constant 0 : index
    %c0_366 = arith.constant 0 : index
    %c0_367 = arith.constant 0 : index
    %c3073 = arith.constant 3073 : index
    %626 = vector.load %arg4[%c0_365, %c0_366, %c0_367, %c3073] : memref<1x1x2x4736xf32, #tpu.memory_space<vmem>>, vector<1x1x1x512xf32>
    %627 = vector.shape_cast %626 : vector<1x1x1x512xf32> to vector<1x512xf32>
    %628 = vector.broadcast %3 : vector<8x1xf32> to vector<8x512xf32>
    %629 = vector.broadcast %627 : vector<1x512xf32> to vector<8x512xf32>
    %630 = arith.mulf %628, %629 : vector<8x512xf32>
    %631 = arith.addf %625, %630 : vector<8x512xf32>
    %c0_368 = arith.constant 0 : index
    %c0_369 = arith.constant 0 : index
    %c1_370 = arith.constant 1 : index
    %c3073_371 = arith.constant 3073 : index
    %632 = vector.load %arg4[%c0_368, %c0_369, %c1_370, %c3073_371] : memref<1x1x2x4736xf32, #tpu.memory_space<vmem>>, vector<1x1x1x512xf32>
    %633 = vector.shape_cast %632 : vector<1x1x1x512xf32> to vector<1x512xf32>
    %634 = vector.broadcast %4 : vector<8x1xf32> to vector<8x512xf32>
    %635 = vector.broadcast %633 : vector<1x512xf32> to vector<8x512xf32>
    %636 = arith.mulf %634, %635 : vector<8x512xf32>
    %637 = arith.addf %631, %636 : vector<8x512xf32>
    %c0_372 = arith.constant 0 : index
    %c0_373 = arith.constant 0 : index
    %c0_374 = arith.constant 0 : index
    %c3074 = arith.constant 3074 : index
    %638 = vector.load %arg4[%c0_372, %c0_373, %c0_374, %c3074] : memref<1x1x2x4736xf32, #tpu.memory_space<vmem>>, vector<1x1x1x512xf32>
    %639 = vector.shape_cast %638 : vector<1x1x1x512xf32> to vector<1x512xf32>
    %640 = vector.broadcast %5 : vector<8x1xf32> to vector<8x512xf32>
    %641 = vector.broadcast %639 : vector<1x512xf32> to vector<8x512xf32>
    %642 = arith.mulf %640, %641 : vector<8x512xf32>
    %643 = arith.addf %637, %642 : vector<8x512xf32>
    %c0_375 = arith.constant 0 : index
    %c0_376 = arith.constant 0 : index
    %c1_377 = arith.constant 1 : index
    %c3074_378 = arith.constant 3074 : index
    %644 = vector.load %arg4[%c0_375, %c0_376, %c1_377, %c3074_378] : memref<1x1x2x4736xf32, #tpu.memory_space<vmem>>, vector<1x1x1x512xf32>
    %645 = vector.shape_cast %644 : vector<1x1x1x512xf32> to vector<1x512xf32>
    %646 = vector.broadcast %6 : vector<8x1xf32> to vector<8x512xf32>
    %647 = vector.broadcast %645 : vector<1x512xf32> to vector<8x512xf32>
    %648 = arith.mulf %646, %647 : vector<8x512xf32>
    %649 = arith.addf %643, %648 : vector<8x512xf32>
    %c0_379 = arith.constant 0 : index
    %c0_380 = arith.constant 0 : index
    %c0_381 = arith.constant 0 : index
    %c3075 = arith.constant 3075 : index
    %650 = vector.load %arg4[%c0_379, %c0_380, %c0_381, %c3075] : memref<1x1x2x4736xf32, #tpu.memory_space<vmem>>, vector<1x1x1x512xf32>
    %651 = vector.shape_cast %650 : vector<1x1x1x512xf32> to vector<1x512xf32>
    %652 = vector.broadcast %7 : vector<8x1xf32> to vector<8x512xf32>
    %653 = vector.broadcast %651 : vector<1x512xf32> to vector<8x512xf32>
    %654 = arith.mulf %652, %653 : vector<8x512xf32>
    %655 = arith.addf %649, %654 : vector<8x512xf32>
    %c0_382 = arith.constant 0 : index
    %c0_383 = arith.constant 0 : index
    %c1_384 = arith.constant 1 : index
    %c3075_385 = arith.constant 3075 : index
    %656 = vector.load %arg4[%c0_382, %c0_383, %c1_384, %c3075_385] : memref<1x1x2x4736xf32, #tpu.memory_space<vmem>>, vector<1x1x1x512xf32>
    %657 = vector.shape_cast %656 : vector<1x1x1x512xf32> to vector<1x512xf32>
    %658 = vector.broadcast %8 : vector<8x1xf32> to vector<8x512xf32>
    %659 = vector.broadcast %657 : vector<1x512xf32> to vector<8x512xf32>
    %660 = arith.mulf %658, %659 : vector<8x512xf32>
    %661 = arith.addf %655, %660 : vector<8x512xf32>
    %c0_386 = arith.constant 0 : index
    %c0_387 = arith.constant 0 : index
    %c0_388 = arith.constant 0 : index
    %c3076 = arith.constant 3076 : index
    %662 = vector.load %arg4[%c0_386, %c0_387, %c0_388, %c3076] : memref<1x1x2x4736xf32, #tpu.memory_space<vmem>>, vector<1x1x1x512xf32>
    %663 = vector.shape_cast %662 : vector<1x1x1x512xf32> to vector<1x512xf32>
    %664 = vector.broadcast %9 : vector<8x1xf32> to vector<8x512xf32>
    %665 = vector.broadcast %663 : vector<1x512xf32> to vector<8x512xf32>
    %666 = arith.mulf %664, %665 : vector<8x512xf32>
    %667 = arith.addf %661, %666 : vector<8x512xf32>
    %c0_389 = arith.constant 0 : index
    %c0_390 = arith.constant 0 : index
    %c1_391 = arith.constant 1 : index
    %c3076_392 = arith.constant 3076 : index
    %668 = vector.load %arg4[%c0_389, %c0_390, %c1_391, %c3076_392] : memref<1x1x2x4736xf32, #tpu.memory_space<vmem>>, vector<1x1x1x512xf32>
    %669 = vector.shape_cast %668 : vector<1x1x1x512xf32> to vector<1x512xf32>
    %670 = vector.broadcast %10 : vector<8x1xf32> to vector<8x512xf32>
    %671 = vector.broadcast %669 : vector<1x512xf32> to vector<8x512xf32>
    %672 = arith.mulf %670, %671 : vector<8x512xf32>
    %673 = arith.addf %667, %672 : vector<8x512xf32>
    %c0_393 = arith.constant 0 : index
    %c0_394 = arith.constant 0 : index
    %c0_395 = arith.constant 0 : index
    %c3077 = arith.constant 3077 : index
    %674 = vector.load %arg4[%c0_393, %c0_394, %c0_395, %c3077] : memref<1x1x2x4736xf32, #tpu.memory_space<vmem>>, vector<1x1x1x512xf32>
    %675 = vector.shape_cast %674 : vector<1x1x1x512xf32> to vector<1x512xf32>
    %676 = vector.broadcast %11 : vector<8x1xf32> to vector<8x512xf32>
    %677 = vector.broadcast %675 : vector<1x512xf32> to vector<8x512xf32>
    %678 = arith.mulf %676, %677 : vector<8x512xf32>
    %679 = arith.addf %673, %678 : vector<8x512xf32>
    %c0_396 = arith.constant 0 : index
    %c0_397 = arith.constant 0 : index
    %c1_398 = arith.constant 1 : index
    %c3077_399 = arith.constant 3077 : index
    %680 = vector.load %arg4[%c0_396, %c0_397, %c1_398, %c3077_399] : memref<1x1x2x4736xf32, #tpu.memory_space<vmem>>, vector<1x1x1x512xf32>
    %681 = vector.shape_cast %680 : vector<1x1x1x512xf32> to vector<1x512xf32>
    %682 = vector.broadcast %12 : vector<8x1xf32> to vector<8x512xf32>
    %683 = vector.broadcast %681 : vector<1x512xf32> to vector<8x512xf32>
    %684 = arith.mulf %682, %683 : vector<8x512xf32>
    %685 = arith.addf %679, %684 : vector<8x512xf32>
    %c0_400 = arith.constant 0 : index
    %c0_401 = arith.constant 0 : index
    %c0_402 = arith.constant 0 : index
    %c3078 = arith.constant 3078 : index
    %686 = vector.load %arg4[%c0_400, %c0_401, %c0_402, %c3078] : memref<1x1x2x4736xf32, #tpu.memory_space<vmem>>, vector<1x1x1x512xf32>
    %687 = vector.shape_cast %686 : vector<1x1x1x512xf32> to vector<1x512xf32>
    %688 = vector.broadcast %13 : vector<8x1xf32> to vector<8x512xf32>
    %689 = vector.broadcast %687 : vector<1x512xf32> to vector<8x512xf32>
    %690 = arith.mulf %688, %689 : vector<8x512xf32>
    %691 = arith.addf %685, %690 : vector<8x512xf32>
    %c0_403 = arith.constant 0 : index
    %c0_404 = arith.constant 0 : index
    %c1_405 = arith.constant 1 : index
    %c3078_406 = arith.constant 3078 : index
    %692 = vector.load %arg4[%c0_403, %c0_404, %c1_405, %c3078_406] : memref<1x1x2x4736xf32, #tpu.memory_space<vmem>>, vector<1x1x1x512xf32>
    %693 = vector.shape_cast %692 : vector<1x1x1x512xf32> to vector<1x512xf32>
    %694 = vector.broadcast %14 : vector<8x1xf32> to vector<8x512xf32>
    %695 = vector.broadcast %693 : vector<1x512xf32> to vector<8x512xf32>
    %696 = arith.mulf %694, %695 : vector<8x512xf32>
    %697 = arith.addf %691, %696 : vector<8x512xf32>
    %c0_407 = arith.constant 0 : index
    %c0_408 = arith.constant 0 : index
    %c0_409 = arith.constant 0 : index
    %c3079 = arith.constant 3079 : index
    %698 = vector.load %arg4[%c0_407, %c0_408, %c0_409, %c3079] : memref<1x1x2x4736xf32, #tpu.memory_space<vmem>>, vector<1x1x1x512xf32>
    %699 = vector.shape_cast %698 : vector<1x1x1x512xf32> to vector<1x512xf32>
    %700 = vector.broadcast %15 : vector<8x1xf32> to vector<8x512xf32>
    %701 = vector.broadcast %699 : vector<1x512xf32> to vector<8x512xf32>
    %702 = arith.mulf %700, %701 : vector<8x512xf32>
    %703 = arith.addf %697, %702 : vector<8x512xf32>
    %c0_410 = arith.constant 0 : index
    %c0_411 = arith.constant 0 : index
    %c1_412 = arith.constant 1 : index
    %c3079_413 = arith.constant 3079 : index
    %704 = vector.load %arg4[%c0_410, %c0_411, %c1_412, %c3079_413] : memref<1x1x2x4736xf32, #tpu.memory_space<vmem>>, vector<1x1x1x512xf32>
    %705 = vector.shape_cast %704 : vector<1x1x1x512xf32> to vector<1x512xf32>
    %706 = vector.broadcast %16 : vector<8x1xf32> to vector<8x512xf32>
    %707 = vector.broadcast %705 : vector<1x512xf32> to vector<8x512xf32>
    %708 = arith.mulf %706, %707 : vector<8x512xf32>
    %709 = arith.addf %703, %708 : vector<8x512xf32>
    %c0_414 = arith.constant 0 : index
    %c0_415 = arith.constant 0 : index
    %c3072_416 = arith.constant 3072 : index
    %710 = vector.load %arg5[%c0_414, %c0_415, %c3072_416] : memref<1x8x4608xf32, #tpu.memory_space<vmem>>, vector<1x8x512xf32>
    %711 = vector.shape_cast %710 : vector<1x8x512xf32> to vector<8x512xf32>
    %712 = vector.shape_cast %709 : vector<8x512xf32> to vector<1x8x512xf32>
    tpu.vector_store %arg5[%c0_414, %c0_415, %c3072_416], %712 {strides = array<i32>} : memref<1x8x4608xf32, #tpu.memory_space<vmem>>, vector<1x8x512xf32>,
    %c0_417 = arith.constant 0 : index
    %c0_418 = arith.constant 0 : index
    %c0_419 = arith.constant 0 : index
    %c3584 = arith.constant 3584 : index
    %713 = vector.load %arg4[%c0_417, %c0_418, %c0_419, %c3584] : memref<1x1x2x4736xf32, #tpu.memory_space<vmem>>, vector<1x1x1x512xf32>
    %714 = vector.shape_cast %713 : vector<1x1x1x512xf32> to vector<1x512xf32>
    %715 = vector.broadcast %1 : vector<8x1xf32> to vector<8x512xf32>
    %716 = vector.broadcast %714 : vector<1x512xf32> to vector<8x512xf32>
    %717 = arith.mulf %715, %716 : vector<8x512xf32>
    %718 = arith.addf %19, %717 : vector<8x512xf32>
    %c0_420 = arith.constant 0 : index
    %c0_421 = arith.constant 0 : index
    %c1_422 = arith.constant 1 : index
    %c3584_423 = arith.constant 3584 : index
    %719 = vector.load %arg4[%c0_420, %c0_421, %c1_422, %c3584_423] : memref<1x1x2x4736xf32, #tpu.memory_space<vmem>>, vector<1x1x1x512xf32>
    %720 = vector.shape_cast %719 : vector<1x1x1x512xf32> to vector<1x512xf32>
    %721 = vector.broadcast %2 : vector<8x1xf32> to vector<8x512xf32>
    %722 = vector.broadcast %720 : vector<1x512xf32> to vector<8x512xf32>
    %723 = arith.mulf %721, %722 : vector<8x512xf32>
    %724 = arith.addf %718, %723 : vector<8x512xf32>
    %c0_424 = arith.constant 0 : index
    %c0_425 = arith.constant 0 : index
    %c0_426 = arith.constant 0 : index
    %c3585 = arith.constant 3585 : index
    %725 = vector.load %arg4[%c0_424, %c0_425, %c0_426, %c3585] : memref<1x1x2x4736xf32, #tpu.memory_space<vmem>>, vector<1x1x1x512xf32>
    %726 = vector.shape_cast %725 : vector<1x1x1x512xf32> to vector<1x512xf32>
    %727 = vector.broadcast %3 : vector<8x1xf32> to vector<8x512xf32>
    %728 = vector.broadcast %726 : vector<1x512xf32> to vector<8x512xf32>
    %729 = arith.mulf %727, %728 : vector<8x512xf32>
    %730 = arith.addf %724, %729 : vector<8x512xf32>
    %c0_427 = arith.constant 0 : index
    %c0_428 = arith.constant 0 : index
    %c1_429 = arith.constant 1 : index
    %c3585_430 = arith.constant 3585 : index
    %731 = vector.load %arg4[%c0_427, %c0_428, %c1_429, %c3585_430] : memref<1x1x2x4736xf32, #tpu.memory_space<vmem>>, vector<1x1x1x512xf32>
    %732 = vector.shape_cast %731 : vector<1x1x1x512xf32> to vector<1x512xf32>
    %733 = vector.broadcast %4 : vector<8x1xf32> to vector<8x512xf32>
    %734 = vector.broadcast %732 : vector<1x512xf32> to vector<8x512xf32>
    %735 = arith.mulf %733, %734 : vector<8x512xf32>
    %736 = arith.addf %730, %735 : vector<8x512xf32>
    %c0_431 = arith.constant 0 : index
    %c0_432 = arith.constant 0 : index
    %c0_433 = arith.constant 0 : index
    %c3586 = arith.constant 3586 : index
    %737 = vector.load %arg4[%c0_431, %c0_432, %c0_433, %c3586] : memref<1x1x2x4736xf32, #tpu.memory_space<vmem>>, vector<1x1x1x512xf32>
    %738 = vector.shape_cast %737 : vector<1x1x1x512xf32> to vector<1x512xf32>
    %739 = vector.broadcast %5 : vector<8x1xf32> to vector<8x512xf32>
    %740 = vector.broadcast %738 : vector<1x512xf32> to vector<8x512xf32>
    %741 = arith.mulf %739, %740 : vector<8x512xf32>
    %742 = arith.addf %736, %741 : vector<8x512xf32>
    %c0_434 = arith.constant 0 : index
    %c0_435 = arith.constant 0 : index
    %c1_436 = arith.constant 1 : index
    %c3586_437 = arith.constant 3586 : index
    %743 = vector.load %arg4[%c0_434, %c0_435, %c1_436, %c3586_437] : memref<1x1x2x4736xf32, #tpu.memory_space<vmem>>, vector<1x1x1x512xf32>
    %744 = vector.shape_cast %743 : vector<1x1x1x512xf32> to vector<1x512xf32>
    %745 = vector.broadcast %6 : vector<8x1xf32> to vector<8x512xf32>
    %746 = vector.broadcast %744 : vector<1x512xf32> to vector<8x512xf32>
    %747 = arith.mulf %745, %746 : vector<8x512xf32>
    %748 = arith.addf %742, %747 : vector<8x512xf32>
    %c0_438 = arith.constant 0 : index
    %c0_439 = arith.constant 0 : index
    %c0_440 = arith.constant 0 : index
    %c3587 = arith.constant 3587 : index
    %749 = vector.load %arg4[%c0_438, %c0_439, %c0_440, %c3587] : memref<1x1x2x4736xf32, #tpu.memory_space<vmem>>, vector<1x1x1x512xf32>
    %750 = vector.shape_cast %749 : vector<1x1x1x512xf32> to vector<1x512xf32>
    %751 = vector.broadcast %7 : vector<8x1xf32> to vector<8x512xf32>
    %752 = vector.broadcast %750 : vector<1x512xf32> to vector<8x512xf32>
    %753 = arith.mulf %751, %752 : vector<8x512xf32>
    %754 = arith.addf %748, %753 : vector<8x512xf32>
    %c0_441 = arith.constant 0 : index
    %c0_442 = arith.constant 0 : index
    %c1_443 = arith.constant 1 : index
    %c3587_444 = arith.constant 3587 : index
    %755 = vector.load %arg4[%c0_441, %c0_442, %c1_443, %c3587_444] : memref<1x1x2x4736xf32, #tpu.memory_space<vmem>>, vector<1x1x1x512xf32>
    %756 = vector.shape_cast %755 : vector<1x1x1x512xf32> to vector<1x512xf32>
    %757 = vector.broadcast %8 : vector<8x1xf32> to vector<8x512xf32>
    %758 = vector.broadcast %756 : vector<1x512xf32> to vector<8x512xf32>
    %759 = arith.mulf %757, %758 : vector<8x512xf32>
    %760 = arith.addf %754, %759 : vector<8x512xf32>
    %c0_445 = arith.constant 0 : index
    %c0_446 = arith.constant 0 : index
    %c0_447 = arith.constant 0 : index
    %c3588 = arith.constant 3588 : index
    %761 = vector.load %arg4[%c0_445, %c0_446, %c0_447, %c3588] : memref<1x1x2x4736xf32, #tpu.memory_space<vmem>>, vector<1x1x1x512xf32>
    %762 = vector.shape_cast %761 : vector<1x1x1x512xf32> to vector<1x512xf32>
    %763 = vector.broadcast %9 : vector<8x1xf32> to vector<8x512xf32>
    %764 = vector.broadcast %762 : vector<1x512xf32> to vector<8x512xf32>
    %765 = arith.mulf %763, %764 : vector<8x512xf32>
    %766 = arith.addf %760, %765 : vector<8x512xf32>
    %c0_448 = arith.constant 0 : index
    %c0_449 = arith.constant 0 : index
    %c1_450 = arith.constant 1 : index
    %c3588_451 = arith.constant 3588 : index
    %767 = vector.load %arg4[%c0_448, %c0_449, %c1_450, %c3588_451] : memref<1x1x2x4736xf32, #tpu.memory_space<vmem>>, vector<1x1x1x512xf32>
    %768 = vector.shape_cast %767 : vector<1x1x1x512xf32> to vector<1x512xf32>
    %769 = vector.broadcast %10 : vector<8x1xf32> to vector<8x512xf32>
    %770 = vector.broadcast %768 : vector<1x512xf32> to vector<8x512xf32>
    %771 = arith.mulf %769, %770 : vector<8x512xf32>
    %772 = arith.addf %766, %771 : vector<8x512xf32>
    %c0_452 = arith.constant 0 : index
    %c0_453 = arith.constant 0 : index
    %c0_454 = arith.constant 0 : index
    %c3589 = arith.constant 3589 : index
    %773 = vector.load %arg4[%c0_452, %c0_453, %c0_454, %c3589] : memref<1x1x2x4736xf32, #tpu.memory_space<vmem>>, vector<1x1x1x512xf32>
    %774 = vector.shape_cast %773 : vector<1x1x1x512xf32> to vector<1x512xf32>
    %775 = vector.broadcast %11 : vector<8x1xf32> to vector<8x512xf32>
    %776 = vector.broadcast %774 : vector<1x512xf32> to vector<8x512xf32>
    %777 = arith.mulf %775, %776 : vector<8x512xf32>
    %778 = arith.addf %772, %777 : vector<8x512xf32>
    %c0_455 = arith.constant 0 : index
    %c0_456 = arith.constant 0 : index
    %c1_457 = arith.constant 1 : index
    %c3589_458 = arith.constant 3589 : index
    %779 = vector.load %arg4[%c0_455, %c0_456, %c1_457, %c3589_458] : memref<1x1x2x4736xf32, #tpu.memory_space<vmem>>, vector<1x1x1x512xf32>
    %780 = vector.shape_cast %779 : vector<1x1x1x512xf32> to vector<1x512xf32>
    %781 = vector.broadcast %12 : vector<8x1xf32> to vector<8x512xf32>
    %782 = vector.broadcast %780 : vector<1x512xf32> to vector<8x512xf32>
    %783 = arith.mulf %781, %782 : vector<8x512xf32>
    %784 = arith.addf %778, %783 : vector<8x512xf32>
    %c0_459 = arith.constant 0 : index
    %c0_460 = arith.constant 0 : index
    %c0_461 = arith.constant 0 : index
    %c3590 = arith.constant 3590 : index
    %785 = vector.load %arg4[%c0_459, %c0_460, %c0_461, %c3590] : memref<1x1x2x4736xf32, #tpu.memory_space<vmem>>, vector<1x1x1x512xf32>
    %786 = vector.shape_cast %785 : vector<1x1x1x512xf32> to vector<1x512xf32>
    %787 = vector.broadcast %13 : vector<8x1xf32> to vector<8x512xf32>
    %788 = vector.broadcast %786 : vector<1x512xf32> to vector<8x512xf32>
    %789 = arith.mulf %787, %788 : vector<8x512xf32>
    %790 = arith.addf %784, %789 : vector<8x512xf32>
    %c0_462 = arith.constant 0 : index
    %c0_463 = arith.constant 0 : index
    %c1_464 = arith.constant 1 : index
    %c3590_465 = arith.constant 3590 : index
    %791 = vector.load %arg4[%c0_462, %c0_463, %c1_464, %c3590_465] : memref<1x1x2x4736xf32, #tpu.memory_space<vmem>>, vector<1x1x1x512xf32>
    %792 = vector.shape_cast %791 : vector<1x1x1x512xf32> to vector<1x512xf32>
    %793 = vector.broadcast %14 : vector<8x1xf32> to vector<8x512xf32>
    %794 = vector.broadcast %792 : vector<1x512xf32> to vector<8x512xf32>
    %795 = arith.mulf %793, %794 : vector<8x512xf32>
    %796 = arith.addf %790, %795 : vector<8x512xf32>
    %c0_466 = arith.constant 0 : index
    %c0_467 = arith.constant 0 : index
    %c0_468 = arith.constant 0 : index
    %c3591 = arith.constant 3591 : index
    %797 = vector.load %arg4[%c0_466, %c0_467, %c0_468, %c3591] : memref<1x1x2x4736xf32, #tpu.memory_space<vmem>>, vector<1x1x1x512xf32>
    %798 = vector.shape_cast %797 : vector<1x1x1x512xf32> to vector<1x512xf32>
    %799 = vector.broadcast %15 : vector<8x1xf32> to vector<8x512xf32>
    %800 = vector.broadcast %798 : vector<1x512xf32> to vector<8x512xf32>
    %801 = arith.mulf %799, %800 : vector<8x512xf32>
    %802 = arith.addf %796, %801 : vector<8x512xf32>
    %c0_469 = arith.constant 0 : index
    %c0_470 = arith.constant 0 : index
    %c1_471 = arith.constant 1 : index
    %c3591_472 = arith.constant 3591 : index
    %803 = vector.load %arg4[%c0_469, %c0_470, %c1_471, %c3591_472] : memref<1x1x2x4736xf32, #tpu.memory_space<vmem>>, vector<1x1x1x512xf32>
    %804 = vector.shape_cast %803 : vector<1x1x1x512xf32> to vector<1x512xf32>
    %805 = vector.broadcast %16 : vector<8x1xf32> to vector<8x512xf32>
    %806 = vector.broadcast %804 : vector<1x512xf32> to vector<8x512xf32>
    %807 = arith.mulf %805, %806 : vector<8x512xf32>
    %808 = arith.addf %802, %807 : vector<8x512xf32>
    %c0_473 = arith.constant 0 : index
    %c0_474 = arith.constant 0 : index
    %c3584_475 = arith.constant 3584 : index
    %809 = vector.load %arg5[%c0_473, %c0_474, %c3584_475] : memref<1x8x4608xf32, #tpu.memory_space<vmem>>, vector<1x8x512xf32>
    %810 = vector.shape_cast %809 : vector<1x8x512xf32> to vector<8x512xf32>
    %811 = vector.shape_cast %808 : vector<8x512xf32> to vector<1x8x512xf32>
    tpu.vector_store %arg5[%c0_473, %c0_474, %c3584_475], %811 {strides = array<i32>} : memref<1x8x4608xf32, #tpu.memory_space<vmem>>, vector<1x8x512xf32>,
    %c0_476 = arith.constant 0 : index
    %c0_477 = arith.constant 0 : index
    %c0_478 = arith.constant 0 : index
    %c4096 = arith.constant 4096 : index
    %812 = vector.load %arg4[%c0_476, %c0_477, %c0_478, %c4096] : memref<1x1x2x4736xf32, #tpu.memory_space<vmem>>, vector<1x1x1x512xf32>
    %813 = vector.shape_cast %812 : vector<1x1x1x512xf32> to vector<1x512xf32>
    %814 = vector.broadcast %1 : vector<8x1xf32> to vector<8x512xf32>
    %815 = vector.broadcast %813 : vector<1x512xf32> to vector<8x512xf32>
    %816 = arith.mulf %814, %815 : vector<8x512xf32>
    %817 = arith.addf %19, %816 : vector<8x512xf32>
    %c0_479 = arith.constant 0 : index
    %c0_480 = arith.constant 0 : index
    %c1_481 = arith.constant 1 : index
    %c4096_482 = arith.constant 4096 : index
    %818 = vector.load %arg4[%c0_479, %c0_480, %c1_481, %c4096_482] : memref<1x1x2x4736xf32, #tpu.memory_space<vmem>>, vector<1x1x1x512xf32>
    %819 = vector.shape_cast %818 : vector<1x1x1x512xf32> to vector<1x512xf32>
    %820 = vector.broadcast %2 : vector<8x1xf32> to vector<8x512xf32>
    %821 = vector.broadcast %819 : vector<1x512xf32> to vector<8x512xf32>
    %822 = arith.mulf %820, %821 : vector<8x512xf32>
    %823 = arith.addf %817, %822 : vector<8x512xf32>
    %c0_483 = arith.constant 0 : index
    %c0_484 = arith.constant 0 : index
    %c0_485 = arith.constant 0 : index
    %c4097 = arith.constant 4097 : index
    %824 = vector.load %arg4[%c0_483, %c0_484, %c0_485, %c4097] : memref<1x1x2x4736xf32, #tpu.memory_space<vmem>>, vector<1x1x1x512xf32>
    %825 = vector.shape_cast %824 : vector<1x1x1x512xf32> to vector<1x512xf32>
    %826 = vector.broadcast %3 : vector<8x1xf32> to vector<8x512xf32>
    %827 = vector.broadcast %825 : vector<1x512xf32> to vector<8x512xf32>
    %828 = arith.mulf %826, %827 : vector<8x512xf32>
    %829 = arith.addf %823, %828 : vector<8x512xf32>
    %c0_486 = arith.constant 0 : index
    %c0_487 = arith.constant 0 : index
    %c1_488 = arith.constant 1 : index
    %c4097_489 = arith.constant 4097 : index
    %830 = vector.load %arg4[%c0_486, %c0_487, %c1_488, %c4097_489] : memref<1x1x2x4736xf32, #tpu.memory_space<vmem>>, vector<1x1x1x512xf32>
    %831 = vector.shape_cast %830 : vector<1x1x1x512xf32> to vector<1x512xf32>
    %832 = vector.broadcast %4 : vector<8x1xf32> to vector<8x512xf32>
    %833 = vector.broadcast %831 : vector<1x512xf32> to vector<8x512xf32>
    %834 = arith.mulf %832, %833 : vector<8x512xf32>
    %835 = arith.addf %829, %834 : vector<8x512xf32>
    %c0_490 = arith.constant 0 : index
    %c0_491 = arith.constant 0 : index
    %c0_492 = arith.constant 0 : index
    %c4098 = arith.constant 4098 : index
    %836 = vector.load %arg4[%c0_490, %c0_491, %c0_492, %c4098] : memref<1x1x2x4736xf32, #tpu.memory_space<vmem>>, vector<1x1x1x512xf32>
    %837 = vector.shape_cast %836 : vector<1x1x1x512xf32> to vector<1x512xf32>
    %838 = vector.broadcast %5 : vector<8x1xf32> to vector<8x512xf32>
    %839 = vector.broadcast %837 : vector<1x512xf32> to vector<8x512xf32>
    %840 = arith.mulf %838, %839 : vector<8x512xf32>
    %841 = arith.addf %835, %840 : vector<8x512xf32>
    %c0_493 = arith.constant 0 : index
    %c0_494 = arith.constant 0 : index
    %c1_495 = arith.constant 1 : index
    %c4098_496 = arith.constant 4098 : index
    %842 = vector.load %arg4[%c0_493, %c0_494, %c1_495, %c4098_496] : memref<1x1x2x4736xf32, #tpu.memory_space<vmem>>, vector<1x1x1x512xf32>
    %843 = vector.shape_cast %842 : vector<1x1x1x512xf32> to vector<1x512xf32>
    %844 = vector.broadcast %6 : vector<8x1xf32> to vector<8x512xf32>
    %845 = vector.broadcast %843 : vector<1x512xf32> to vector<8x512xf32>
    %846 = arith.mulf %844, %845 : vector<8x512xf32>
    %847 = arith.addf %841, %846 : vector<8x512xf32>
    %c0_497 = arith.constant 0 : index
    %c0_498 = arith.constant 0 : index
    %c0_499 = arith.constant 0 : index
    %c4099 = arith.constant 4099 : index
    %848 = vector.load %arg4[%c0_497, %c0_498, %c0_499, %c4099] : memref<1x1x2x4736xf32, #tpu.memory_space<vmem>>, vector<1x1x1x512xf32>
    %849 = vector.shape_cast %848 : vector<1x1x1x512xf32> to vector<1x512xf32>
    %850 = vector.broadcast %7 : vector<8x1xf32> to vector<8x512xf32>
    %851 = vector.broadcast %849 : vector<1x512xf32> to vector<8x512xf32>
    %852 = arith.mulf %850, %851 : vector<8x512xf32>
    %853 = arith.addf %847, %852 : vector<8x512xf32>
    %c0_500 = arith.constant 0 : index
    %c0_501 = arith.constant 0 : index
    %c1_502 = arith.constant 1 : index
    %c4099_503 = arith.constant 4099 : index
    %854 = vector.load %arg4[%c0_500, %c0_501, %c1_502, %c4099_503] : memref<1x1x2x4736xf32, #tpu.memory_space<vmem>>, vector<1x1x1x512xf32>
    %855 = vector.shape_cast %854 : vector<1x1x1x512xf32> to vector<1x512xf32>
    %856 = vector.broadcast %8 : vector<8x1xf32> to vector<8x512xf32>
    %857 = vector.broadcast %855 : vector<1x512xf32> to vector<8x512xf32>
    %858 = arith.mulf %856, %857 : vector<8x512xf32>
    %859 = arith.addf %853, %858 : vector<8x512xf32>
    %c0_504 = arith.constant 0 : index
    %c0_505 = arith.constant 0 : index
    %c0_506 = arith.constant 0 : index
    %c4100 = arith.constant 4100 : index
    %860 = vector.load %arg4[%c0_504, %c0_505, %c0_506, %c4100] : memref<1x1x2x4736xf32, #tpu.memory_space<vmem>>, vector<1x1x1x512xf32>
    %861 = vector.shape_cast %860 : vector<1x1x1x512xf32> to vector<1x512xf32>
    %862 = vector.broadcast %9 : vector<8x1xf32> to vector<8x512xf32>
    %863 = vector.broadcast %861 : vector<1x512xf32> to vector<8x512xf32>
    %864 = arith.mulf %862, %863 : vector<8x512xf32>
    %865 = arith.addf %859, %864 : vector<8x512xf32>
    %c0_507 = arith.constant 0 : index
    %c0_508 = arith.constant 0 : index
    %c1_509 = arith.constant 1 : index
    %c4100_510 = arith.constant 4100 : index
    %866 = vector.load %arg4[%c0_507, %c0_508, %c1_509, %c4100_510] : memref<1x1x2x4736xf32, #tpu.memory_space<vmem>>, vector<1x1x1x512xf32>
    %867 = vector.shape_cast %866 : vector<1x1x1x512xf32> to vector<1x512xf32>
    %868 = vector.broadcast %10 : vector<8x1xf32> to vector<8x512xf32>
    %869 = vector.broadcast %867 : vector<1x512xf32> to vector<8x512xf32>
    %870 = arith.mulf %868, %869 : vector<8x512xf32>
    %871 = arith.addf %865, %870 : vector<8x512xf32>
    %c0_511 = arith.constant 0 : index
    %c0_512 = arith.constant 0 : index
    %c0_513 = arith.constant 0 : index
    %c4101 = arith.constant 4101 : index
    %872 = vector.load %arg4[%c0_511, %c0_512, %c0_513, %c4101] : memref<1x1x2x4736xf32, #tpu.memory_space<vmem>>, vector<1x1x1x512xf32>
    %873 = vector.shape_cast %872 : vector<1x1x1x512xf32> to vector<1x512xf32>
    %874 = vector.broadcast %11 : vector<8x1xf32> to vector<8x512xf32>
    %875 = vector.broadcast %873 : vector<1x512xf32> to vector<8x512xf32>
    %876 = arith.mulf %874, %875 : vector<8x512xf32>
    %877 = arith.addf %871, %876 : vector<8x512xf32>
    %c0_514 = arith.constant 0 : index
    %c0_515 = arith.constant 0 : index
    %c1_516 = arith.constant 1 : index
    %c4101_517 = arith.constant 4101 : index
    %878 = vector.load %arg4[%c0_514, %c0_515, %c1_516, %c4101_517] : memref<1x1x2x4736xf32, #tpu.memory_space<vmem>>, vector<1x1x1x512xf32>
    %879 = vector.shape_cast %878 : vector<1x1x1x512xf32> to vector<1x512xf32>
    %880 = vector.broadcast %12 : vector<8x1xf32> to vector<8x512xf32>
    %881 = vector.broadcast %879 : vector<1x512xf32> to vector<8x512xf32>
    %882 = arith.mulf %880, %881 : vector<8x512xf32>
    %883 = arith.addf %877, %882 : vector<8x512xf32>
    %c0_518 = arith.constant 0 : index
    %c0_519 = arith.constant 0 : index
    %c0_520 = arith.constant 0 : index
    %c4102 = arith.constant 4102 : index
    %884 = vector.load %arg4[%c0_518, %c0_519, %c0_520, %c4102] : memref<1x1x2x4736xf32, #tpu.memory_space<vmem>>, vector<1x1x1x512xf32>
    %885 = vector.shape_cast %884 : vector<1x1x1x512xf32> to vector<1x512xf32>
    %886 = vector.broadcast %13 : vector<8x1xf32> to vector<8x512xf32>
    %887 = vector.broadcast %885 : vector<1x512xf32> to vector<8x512xf32>
    %888 = arith.mulf %886, %887 : vector<8x512xf32>
    %889 = arith.addf %883, %888 : vector<8x512xf32>
    %c0_521 = arith.constant 0 : index
    %c0_522 = arith.constant 0 : index
    %c1_523 = arith.constant 1 : index
    %c4102_524 = arith.constant 4102 : index
    %890 = vector.load %arg4[%c0_521, %c0_522, %c1_523, %c4102_524] : memref<1x1x2x4736xf32, #tpu.memory_space<vmem>>, vector<1x1x1x512xf32>
    %891 = vector.shape_cast %890 : vector<1x1x1x512xf32> to vector<1x512xf32>
    %892 = vector.broadcast %14 : vector<8x1xf32> to vector<8x512xf32>
    %893 = vector.broadcast %891 : vector<1x512xf32> to vector<8x512xf32>
    %894 = arith.mulf %892, %893 : vector<8x512xf32>
    %895 = arith.addf %889, %894 : vector<8x512xf32>
    %c0_525 = arith.constant 0 : index
    %c0_526 = arith.constant 0 : index
    %c0_527 = arith.constant 0 : index
    %c4103 = arith.constant 4103 : index
    %896 = vector.load %arg4[%c0_525, %c0_526, %c0_527, %c4103] : memref<1x1x2x4736xf32, #tpu.memory_space<vmem>>, vector<1x1x1x512xf32>
    %897 = vector.shape_cast %896 : vector<1x1x1x512xf32> to vector<1x512xf32>
    %898 = vector.broadcast %15 : vector<8x1xf32> to vector<8x512xf32>
    %899 = vector.broadcast %897 : vector<1x512xf32> to vector<8x512xf32>
    %900 = arith.mulf %898, %899 : vector<8x512xf32>
    %901 = arith.addf %895, %900 : vector<8x512xf32>
    %c0_528 = arith.constant 0 : index
    %c0_529 = arith.constant 0 : index
    %c1_530 = arith.constant 1 : index
    %c4103_531 = arith.constant 4103 : index
    %902 = vector.load %arg4[%c0_528, %c0_529, %c1_530, %c4103_531] : memref<1x1x2x4736xf32, #tpu.memory_space<vmem>>, vector<1x1x1x512xf32>
    %903 = vector.shape_cast %902 : vector<1x1x1x512xf32> to vector<1x512xf32>
    %904 = vector.broadcast %16 : vector<8x1xf32> to vector<8x512xf32>
    %905 = vector.broadcast %903 : vector<1x512xf32> to vector<8x512xf32>
    %906 = arith.mulf %904, %905 : vector<8x512xf32>
    %907 = arith.addf %901, %906 : vector<8x512xf32>
    %c0_532 = arith.constant 0 : index
    %c0_533 = arith.constant 0 : index
    %c4096_534 = arith.constant 4096 : index
    %908 = vector.load %arg5[%c0_532, %c0_533, %c4096_534] : memref<1x8x4608xf32, #tpu.memory_space<vmem>>, vector<1x8x512xf32>
    %909 = vector.shape_cast %908 : vector<1x8x512xf32> to vector<8x512xf32>
    %910 = vector.shape_cast %907 : vector<8x512xf32> to vector<1x8x512xf32>
    tpu.vector_store %arg5[%c0_532, %c0_533, %c4096_534], %910 {strides = array<i32>} : memref<1x8x4608xf32, #tpu.memory_space<vmem>>, vector<1x8x512xf32>,
    return
  }
  func.func @transform_0(%arg0: i32, %arg1: i32) -> (i32, i32) {
    %c0_i32 = arith.constant 0 : i32
    %c0_i32_0 = arith.constant 0 : i32
    %c0_i32_1 = arith.constant 0 : i32
    return %c0_i32, %c0_i32_0 : i32, i32
  }
  func.func @transform_1(%arg0: i32, %arg1: i32) -> (i32, i32) {
    %c0_i32 = arith.constant 0 : i32
    %c0_i32_0 = arith.constant 0 : i32
    %c0_i32_1 = arith.constant 0 : i32
    return %c0_i32, %c0_i32_0 : i32, i32
  }
  func.func @transform_2(%arg0: i32, %arg1: i32) -> (i32, i32, i32, i32) {
    %c0_i32 = arith.constant 0 : i32
    %c0_i32_0 = arith.constant 0 : i32
    %c0_i32_1 = arith.constant 0 : i32
    return %arg0, %arg1, %c0_i32, %c0_i32_0 : i32, i32, i32, i32
  }
  func.func @transform_3(%arg0: i32, %arg1: i32) -> (i32, i32, i32) {
    %c0_i32 = arith.constant 0 : i32
    %c0_i32_0 = arith.constant 0 : i32
    return %arg0, %c0_i32, %arg1 : i32, i32, i32
  }
}

</mosaic_0001>

<llo_original>
// kernel: tpu_custom_call.1
$region0: #{tpu_custom_call.1}
  #allocation0 [shape = 'u32[]', space=smem, size = 0x4, offset = 0x4, fixed_abs, tag = 'smem constant byte address 0x4 - core index']
  #allocation1 [shape = 'u32[72,128]{1,0:T(1,128)}', space=vmem, size = 0x9000, scoped, tag = 'internal scratch']
  %s0 = inlined_call_operand.vmem [shape: f32[8,16], index: 0, kind: input, shape index: {}]
  %s1 = inlined_call_operand.vmem [shape: f32[8,1], index: 1, kind: input, shape index: {}]
  %s2 = inlined_call_operand.hbm [shape: f32[2,1,2,4736], index: 2, kind: input, shape index: {}]
  %s3 = inlined_call_operand.hbm [shape: f32[2,8,4608], index: 3, kind: output, shape index: {}]
  %s4 = sld [smem:[#allocation0]]
  $region49: #{tpu_custom_call.1} parent=0
    _
  %s6 = ssub.s32 1, %s4
  %s7 = scalar_select 0, %s6, %s4
  $region1: #{tpu_custom_call.1} parent=0
    #allocation2 [shape = 'u8[75776]{0}', space=vmem, size = 0x12800, scoped, tag = 'input window, operand 2']
    #allocation3 [shape = 's32[2]{0}', space=sflag, size = 0x8, scoped, tag = 'scoped memory for tpu_custom_call.1']
    #allocation4 [shape = 's32[2]{0}', space=sflag, size = 0x8, scoped, tag = 'scoped memory for tpu_custom_call.1']
    #allocation5 [shape = 'u8[294912]{0}', space=vmem, size = 0x48000, scoped, tag = 'output window, operand 0']
    %8 = vsyncpa [#allocation3], 0
    %s9 = scalar_lea.sflag [#allocation3], 1
    %10 = vsyncpa %s9, 0
    %11 = vsyncpa [#allocation4], 0
    %s12 = scalar_lea.sflag [#allocation4], 1
    %13 = vsyncpa %s12, 0
    loop: start=0, step=1, limit=4
    $region2: #{tpu_custom_call.1} parent=1 // loop_pre_header
      _
    $region3: #{tpu_custom_call.1} parent=1 // loop_header
      %s15 = sphi 0, %s19
      %p16 = scmp.ge.s32.totalorder %s15, 4
      %s22 = sphi 0, %s34
      %s23 = sphi 0, %s30
      %s24 = sphi 0, %s22
      %s25 = sphi 0, %s23
      %s26 = sphi 0, %s24
      %s27 = sphi 0, %s25
      %s35 = sphi 0, %s35
      %s37 = sphi 0, %s35
      %s38 = sphi 0, %s37
      %s52 = sphi 0, %s38
      %s56 = sphi 0, %s56
      %s58 = sphi 0, %s56
      %s59 = sphi 0, %s58
      %s73 = sphi 0, %s59
      %s81 = sphi 0, %s83
      %s84 = sphi 0, %s81
      %s85 = sphi 0, %s84
      %s101 = sphi 0, %s85
      %s109 = sphi 0, %s111
      %s112 = sphi 0, %s109
      %s113 = sphi 0, %s112
      %s129 = sphi 0, %s113
    $region4: #{tpu_custom_call.1} parent=1 // loop_header_branch
      %18 = sbr.rel (%p16) target = $region8
    $region5: #{tpu_custom_call.1} parent=1 // loop_body
      %s20 = ssub.s32 %s15, 1
      %s21 = ssub.s32 %s15, 2
      %s28 = sadd.s32 1, %s23
      %p29 = scmp.ge.s32.totalorder %s28, 1
      %s30 = scalar_select %p29, 0, %s28
      %s31 = sadd.s32 1, %s22
      %s32 = scalar_select %p29, %s31, %s22
      %p33 = scmp.ge.s32.totalorder %s32, 2
      %s34 = scalar_select %p33, 0, %s32
      %s36 = sadd.s32 %s35, 1
      %p39 = scmp.eq.s32.totalorder %s15, 1
      %p40 = scmp.ne.s32.totalorder %s35, %s37
      %p41 = scmp.eq.s32.totalorder %s15, 0
      %p42 = por %p40, %p41
      %p43 = scmp.ne.s32.totalorder %s35, %s37
      %p44 = scmp.eq.s32.totalorder %s20, 1
      %p45 = por %p43, %p44
      %p46 = scmp.ne.s32.totalorder %s37, %s38
      %p47 = scmp.eq.s32.totalorder %s20, 0
      %p48 = por %p46, %p47
      %p49 = scmp.ne.s32.totalorder %s37, %s38
      %p50 = scmp.eq.s32.totalorder %s21, 1
      %p51 = por %p49, %p50
      %p53 = scmp.ne.s32.totalorder %s38, %s52
      %p54 = scmp.eq.s32.totalorder %s21, 0
      %p55 = por %p53, %p54
      %s57 = sadd.s32 %s56, 1
      %p60 = scmp.eq.s32.totalorder %s15, 1
      %p61 = scmp.ne.s32.totalorder %s56, %s58
      %p62 = scmp.eq.s32.totalorder %s15, 0
      %p63 = por %p61, %p62
      %p64 = scmp.ne.s32.totalorder %s56, %s58
      %p65 = scmp.eq.s32.totalorder %s20, 1
      %p66 = por %p64, %p65
      %p67 = scmp.ne.s32.totalorder %s58, %s59
      %p68 = scmp.eq.s32.totalorder %s20, 0
      %p69 = por %p67, %p68
      %p70 = scmp.ne.s32.totalorder %s58, %s59
      %p71 = scmp.eq.s32.totalorder %s21, 1
      %p72 = por %p70, %p71
      %p74 = scmp.ne.s32.totalorder %s59, %s73
      %p75 = scmp.eq.s32.totalorder %s21, 0
      %p76 = por %p74, %p75
      %s77 = ssub.s32 %s22, %s34
      %s78 = ssub.s32 %s23, %s30
      %s79 = sor.u32 %s77, %s78
      %p80 = scmp.eq.s32.totalorder %s79, 0
      %s82 = sadd.s32 %s81, 1
      %s83 = scalar_select %p80, %s81, %s82
      %p86 = pneg %p80
      %p87 = scmp.eq.s32.totalorder %s15, 1
      %p88 = por %p86, %p87
      %p89 = scmp.ne.s32.totalorder %s81, %s84
      %p90 = scmp.eq.s32.totalorder %s15, 0
      %p91 = por %p89, %p90
      %p92 = scmp.ne.s32.totalorder %s81, %s84
      %p93 = scmp.eq.s32.totalorder %s20, 1
      %p94 = por %p92, %p93
      %p95 = scmp.ne.s32.totalorder %s84, %s85
      %p96 = scmp.eq.s32.totalorder %s20, 0
      %p97 = por %p95, %p96
      %p98 = scmp.ne.s32.totalorder %s84, %s85
      %p99 = scmp.eq.s32.totalorder %s21, 1
      %p100 = por %p98, %p99
      %p102 = scmp.ne.s32.totalorder %s85, %s101
      %p103 = scmp.eq.s32.totalorder %s21, 0
      %p104 = por %p102, %p103
      %s105 = ssub.s32 %s22, %s34
      %s106 = ssub.s32 %s23, %s30
      %s107 = sor.u32 %s105, %s106
      %p108 = scmp.eq.s32.totalorder %s107, 0
      %s110 = sadd.s32 %s109, 1
      %s111 = scalar_select %p108, %s109, %s110
      %p114 = pneg %p108
      %p115 = scmp.eq.s32.totalorder %s15, 1
      %p116 = por %p114, %p115
      %p117 = scmp.ne.s32.totalorder %s109, %s112
      %p118 = scmp.eq.s32.totalorder %s15, 0
      %p119 = por %p117, %p118
      %p120 = scmp.ne.s32.totalorder %s109, %s112
      %p121 = scmp.eq.s32.totalorder %s20, 1
      %p122 = por %p120, %p121
      %p123 = scmp.ne.s32.totalorder %s112, %s113
      %p124 = scmp.eq.s32.totalorder %s20, 0
      %p125 = por %p123, %p124
      %p126 = scmp.ne.s32.totalorder %s112, %s113
      %p127 = scmp.eq.s32.totalorder %s21, 1
      %p128 = por %p126, %p127
      %p130 = scmp.ne.s32.totalorder %s113, %s129
      %p131 = scmp.eq.s32.totalorder %s21, 0
      %p132 = por %p130, %p131
      %p133 = scmp.le.s32.totalorder 1, %s15
      %p134 = scmp.lt.s32.totalorder %s15, 3
      %p135 = pnand %p133, %p134
      %p136 = pneg %p135
      // Predicated region
      $region9: #{tpu_custom_call.1} parent=5 // pred_check
        _
      $region10: #{tpu_custom_call.1} parent=5 // pred_check_branch
        %138 = sbr.rel (%p135) target = $region12
      $region11: #{tpu_custom_call.1} parent=5 // pred_region
        %s139 = ssub.s32 %s15, 1
        // Predicated region
        $region13: #{tpu_custom_call.1} parent=11 // pred_check
          %p140 = pneg %p48
        $region14: #{tpu_custom_call.1} parent=11 // pred_check_branch
          %142 = sbr.rel (%p140) target = $region16
        $region15: #{tpu_custom_call.1} parent=11 // pred_region
          _
        $region16: #{tpu_custom_call.1} parent=11 // pred_fallthru
          _
        // Predicated region
        $region17: #{tpu_custom_call.1} parent=11 // pred_check
          %p143 = pneg %p69
        $region18: #{tpu_custom_call.1} parent=11 // pred_check_branch
          %145 = sbr.rel (%p143) target = $region20
        $region19: #{tpu_custom_call.1} parent=11 // pred_region
          _
        $region20: #{tpu_custom_call.1} parent=11 // pred_fallthru
          _
      $region12: #{tpu_custom_call.1} parent=5 // pred_fallthru
        _
      %p146 = scmp.lt.s32.totalorder %s15, 2
      // Predicated region
      $region21: #{tpu_custom_call.1} parent=5 // pred_check
        %p147 = pneg %p146
      $region22: #{tpu_custom_call.1} parent=5 // pred_check_branch
        %149 = sbr.rel (%p147) target = $region24
      $region23: #{tpu_custom_call.1} parent=5 // pred_region
        // Predicated region
        $region25: #{tpu_custom_call.1} parent=23 // pred_check
          %p150 = pneg %p91
        $region26: #{tpu_custom_call.1} parent=23 // pred_check_branch
          %152 = sbr.rel (%p150) target = $region28
        $region27: #{tpu_custom_call.1} parent=23 // pred_region
          %s153 = sand.u32 %s81, 1
          %s154 = scalar_lea.sflag [#allocation3], %s153
          %s155 = sand.u32 %s81, 1
          %s156 = smul.addr %s155, 74
          %s157 = scalar_lea.vmem [#allocation2], %s156
          %159 = vsyncadd %s154, 0
          %s160 = smul.addr %s23, 37
          %s161 = smul.addr %s22, 37
          %s162 = sadd.s32 %s160, %s161
          %s163 = smul.addr %s162, 2
          %s164 = scalar_lea.hbm %s2, %s163
          %s166 = sshll.u32 %s164, 4
          %s167 = int_to_ptr.hbm [resolvable:$true] %s166
          %s168 = sshll.u32 %s157, 4
          %s169 = int_to_ptr.vmem [resolvable:$true] %s168
          %171 = dma.hbm_to_vmem [thread:$0]  %s167, 1184, %s169, %s154
        $region28: #{tpu_custom_call.1} parent=23 // pred_fallthru
          _
      $region24: #{tpu_custom_call.1} parent=5 // pred_fallthru
        _
      %p172 = scmp.le.s32.totalorder 1, %s15
      %p173 = scmp.lt.s32.totalorder %s15, 3
      %p174 = pnand %p172, %p173
      %p175 = pneg %p174
      // Predicated region
      $region29: #{tpu_custom_call.1} parent=5 // pred_check
        _
      $region30: #{tpu_custom_call.1} parent=5 // pred_check_branch
        %177 = sbr.rel (%p174) target = $region32
      $region31: #{tpu_custom_call.1} parent=5 // pred_region
        %s178 = ssub.s32 %s15, 1
        %s179 = sand.u32 %s84, 1
        %s180 = scalar_lea.sflag [#allocation3], %s179
        %s181 = sand.u32 %s84, 1
        %s182 = smul.addr %s181, 74
        %s183 = scalar_lea.vmem [#allocation2], %s182
        // Predicated region
        $region33: #{tpu_custom_call.1} parent=31 // pred_check
          %p184 = pneg %p97
        $region34: #{tpu_custom_call.1} parent=31 // pred_check_branch
          %186 = sbr.rel (%p184) target = $region36
        $region35: #{tpu_custom_call.1} parent=31 // pred_region
          %188 = dma.done %s180, 1184
        $region36: #{tpu_custom_call.1} parent=31 // pred_fallthru
          _
        %p189 = pneg %p48
        %p190 = pneg %p45
        %p191 = pneg %p69
        %p192 = pneg %p66
        %s193 = sand.u32 %s84, 1
        %s194 = scalar_lea.sflag [#allocation3], %s193
        %s195 = sand.u32 %s84, 1
        %s196 = smul.addr %s195, 74
        %s197 = scalar_lea.vmem [#allocation2], %s196
        %p198 = pneg %p97
        %p199 = pneg %p94
        %p200 = pneg %p125
        %p201 = pneg %p122
        %s202 = sand.u32 %s112, 1
        %s203 = scalar_lea.sflag [#allocation4], %s202
        %s204 = sand.u32 %s112, 1
        %s205 = smul.addr %s204, 288
        %s206 = scalar_lea.vmem [#allocation5], %s205
        %s207 = smul.u32 36, %s25
        %v208 = vld [vmem:[%s0] sm:$0xff]
        %v209 = vld [vmem:[%s1] sm:$0xff]
        %211 = vset.pattern.permute.xlu0 0
        %212 = vperm.xlu0 %211, %v209
        %v213 = vpop.permute.xlu0 %212
        %v215 = vld [vmem:[%s183] ss:$2 sm:$0xf]
        %217 = vset.pattern.permute.xlu0 0
        %218 = vperm.xlu0 %217, %v208
        %v219 = vpop.permute.xlu0 %218
        %v222 = vperm.slane %v215, 0
        %v223 = vperm.slane %v215, 1
        %v224 = vperm.slane %v215, 2
        %v225 = vperm.slane %v215, 3
        %v230 = vmul.f32 %v219, %v222
        %v231 = vmul.f32 %v219, %v223
        %v232 = vmul.f32 %v219, %v224
        %v233 = vmul.f32 %v219, %v225
        %v234 = vadd.f32 %v213, %v230
        %v235 = vadd.f32 %v213, %v231
        %v236 = vadd.f32 %v213, %v232
        %v237 = vadd.f32 %v213, %v233
        %s238 = scalar_lea.vmem %s183, 1 [#allocation2]
        %v239 = vld [vmem:[%s238] ss:$2 sm:$0xf]
        %240 = vset.pattern.permute.xlu0 1
        %241 = vperm.xlu0 %240, %v208
        %v242 = vpop.permute.xlu0 %241
        %v245 = vperm.slane %v239, 0
        %v246 = vperm.slane %v239, 1
        %v247 = vperm.slane %v239, 2
        %v248 = vperm.slane %v239, 3
        %v253 = vmul.f32 %v242, %v245
        %v254 = vmul.f32 %v242, %v246
        %v255 = vmul.f32 %v242, %v247
        %v256 = vmul.f32 %v242, %v248
        %v257 = vadd.f32 %v234, %v253
        %v258 = vadd.f32 %v235, %v254
        %v259 = vadd.f32 %v236, %v255
        %v260 = vadd.f32 %v237, %v256
        %v261 = vld [vmem:[%s183] ss:$2 sm:$0x1f]
        %262 = vset.pattern.permute.xlu0 2
        %263 = vperm.xlu0 %262, %v208
        %v264 = vpop.permute.xlu0 %263
        %v267 = vperm.slane %v261, 0
        %v268 = vperm.slane %v261, 1
        %v269 = vperm.slane %v261, 2
        %v270 = vperm.slane %v261, 3
        %v271 = vperm.slane %v261, 4
        %v277 = vmul.f32 %v264, %v267
        %v278 = vmul.f32 %v264, %v268
        %v279 = vmul.f32 %v264, %v269
        %v280 = vmul.f32 %v264, %v270
        %v281 = vmul.f32 %v264, %v271
        %287 = vrot.lane.b32.xlu0 %v277, 127
        %v288 = vpop.permute.xlu0 %287
        %289 = vrot.lane.b32.xlu0 %v278, 127
        %v290 = vpop.permute.xlu0 %289
        %291 = vrot.lane.b32.xlu0 %v279, 127
        %v292 = vpop.permute.xlu0 %291
        %293 = vrot.lane.b32.xlu0 %v280, 127
        %v294 = vpop.permute.xlu0 %293
        %295 = vrot.lane.b32.xlu0 %v281, 127
        %v296 = vpop.permute.xlu0 %295
        %vm297 = vcmask 1039360
        %v298 = vsel %vm297, %v288, %v290
        %v299 = vsel %vm297, %v290, %v292
        %v300 = vsel %vm297, %v292, %v294
        %v301 = vsel %vm297, %v294, %v296
        %v306 = vadd.f32 %v257, %v298
        %v307 = vadd.f32 %v258, %v299
        %v308 = vadd.f32 %v259, %v300
        %v309 = vadd.f32 %v260, %v301
        %v310 = vld [vmem:[%s238] ss:$2 sm:$0x1f]
        %311 = vset.pattern.permute.xlu0 3
        %312 = vperm.xlu0 %311, %v208
        %v313 = vpop.permute.xlu0 %312
        %v316 = vperm.slane %v310, 0
        %v317 = vperm.slane %v310, 1
        %v318 = vperm.slane %v310, 2
        %v319 = vperm.slane %v310, 3
        %v320 = vperm.slane %v310, 4
        %v326 = vmul.f32 %v313, %v316
        %v327 = vmul.f32 %v313, %v317
        %v328 = vmul.f32 %v313, %v318
        %v329 = vmul.f32 %v313, %v319
        %v330 = vmul.f32 %v313, %v320
        %336 = vrot.lane.b32.xlu0 %v326, 127
        %v337 = vpop.permute.xlu0 %336
        %338 = vrot.lane.b32.xlu0 %v327, 127
        %v339 = vpop.permute.xlu0 %338
        %340 = vrot.lane.b32.xlu0 %v328, 127
        %v341 = vpop.permute.xlu0 %340
        %342 = vrot.lane.b32.xlu0 %v329, 127
        %v343 = vpop.permute.xlu0 %342
        %344 = vrot.lane.b32.xlu0 %v330, 127
        %v345 = vpop.permute.xlu0 %344
        %v346 = vsel %vm297, %v337, %v339
        %v347 = vsel %vm297, %v339, %v341
        %v348 = vsel %vm297, %v341, %v343
        %v349 = vsel %vm297, %v343, %v345
        %v354 = vadd.f32 %v306, %v346
        %v355 = vadd.f32 %v307, %v347
        %v356 = vadd.f32 %v308, %v348
        %v357 = vadd.f32 %v309, %v349
        %358 = vset.pattern.permute.xlu0 4
        %359 = vperm.xlu0 %358, %v208
        %v360 = vpop.permute.xlu0 %359
        %v362 = vmul.f32 %v360, %v267
        %v363 = vmul.f32 %v360, %v268
        %v364 = vmul.f32 %v360, %v269
        %v365 = vmul.f32 %v360, %v270
        %v366 = vmul.f32 %v360, %v271
        %372 = vrot.lane.b32.xlu0 %v362, 126
        %v373 = vpop.permute.xlu0 %372
        %374 = vrot.lane.b32.xlu0 %v363, 126
        %v375 = vpop.permute.xlu0 %374
        %376 = vrot.lane.b32.xlu0 %v364, 126
        %v377 = vpop.permute.xlu0 %376
        %378 = vrot.lane.b32.xlu0 %v365, 126
        %v379 = vpop.permute.xlu0 %378
        %380 = vrot.lane.b32.xlu0 %v366, 126
        %v381 = vpop.permute.xlu0 %380
        %vm382 = vcmask 1031168
        %v383 = vsel %vm382, %v373, %v375
        %v384 = vsel %vm382, %v375, %v377
        %v385 = vsel %vm382, %v377, %v379
        %v386 = vsel %vm382, %v379, %v381
        %v391 = vadd.f32 %v354, %v383
        %v392 = vadd.f32 %v355, %v384
        %v393 = vadd.f32 %v356, %v385
        %v394 = vadd.f32 %v357, %v386
        %395 = vset.pattern.permute.xlu0 5
        %396 = vperm.xlu0 %395, %v208
        %v397 = vpop.permute.xlu0 %396
        %v399 = vmul.f32 %v397, %v316
        %v400 = vmul.f32 %v397, %v317
        %v401 = vmul.f32 %v397, %v318
        %v402 = vmul.f32 %v397, %v319
        %v403 = vmul.f32 %v397, %v320
        %409 = vrot.lane.b32.xlu0 %v399, 126
        %v410 = vpop.permute.xlu0 %409
        %411 = vrot.lane.b32.xlu0 %v400, 126
        %v412 = vpop.permute.xlu0 %411
        %413 = vrot.lane.b32.xlu0 %v401, 126
        %v414 = vpop.permute.xlu0 %413
        %415 = vrot.lane.b32.xlu0 %v402, 126
        %v416 = vpop.permute.xlu0 %415
        %417 = vrot.lane.b32.xlu0 %v403, 126
        %v418 = vpop.permute.xlu0 %417
        %v419 = vsel %vm382, %v410, %v412
        %v420 = vsel %vm382, %v412, %v414
        %v421 = vsel %vm382, %v414, %v416
        %v422 = vsel %vm382, %v416, %v418
        %v427 = vadd.f32 %v391, %v419
        %v428 = vadd.f32 %v392, %v420
        %v429 = vadd.f32 %v393, %v421
        %v430 = vadd.f32 %v394, %v422
        %431 = vset.pattern.permute.xlu0 6
        %432 = vperm.xlu0 %431, %v208
        %v433 = vpop.permute.xlu0 %432
        %v435 = vmul.f32 %v433, %v267
        %v436 = vmul.f32 %v433, %v268
        %v437 = vmul.f32 %v433, %v269
        %v438 = vmul.f32 %v433, %v270
        %v439 = vmul.f32 %v433, %v271
        %445 = vrot.lane.b32.xlu0 %v435, 125
        %v446 = vpop.permute.xlu0 %445
        %447 = vrot.lane.b32.xlu0 %v436, 125
        %v448 = vpop.permute.xlu0 %447
        %449 = vrot.lane.b32.xlu0 %v437, 125
        %v450 = vpop.permute.xlu0 %449
        %451 = vrot.lane.b32.xlu0 %v438, 125
        %v452 = vpop.permute.xlu0 %451
        %453 = vrot.lane.b32.xlu0 %v439, 125
        %v454 = vpop.permute.xlu0 %453
        %vm455 = vcmask 1022976
        %v456 = vsel %vm455, %v446, %v448
        %v457 = vsel %vm455, %v448, %v450
        %v458 = vsel %vm455, %v450, %v452
        %v459 = vsel %vm455, %v452, %v454
        %v464 = vadd.f32 %v427, %v456
        %v465 = vadd.f32 %v428, %v457
        %v466 = vadd.f32 %v429, %v458
        %v467 = vadd.f32 %v430, %v459
        %468 = vset.pattern.permute.xlu0 7
        %469 = vperm.xlu0 %468, %v208
        %v470 = vpop.permute.xlu0 %469
        %v472 = vmul.f32 %v470, %v316
        %v473 = vmul.f32 %v470, %v317
        %v474 = vmul.f32 %v470, %v318
        %v475 = vmul.f32 %v470, %v319
        %v476 = vmul.f32 %v470, %v320
        %482 = vrot.lane.b32.xlu0 %v472, 125
        %v483 = vpop.permute.xlu0 %482
        %484 = vrot.lane.b32.xlu0 %v473, 125
        %v485 = vpop.permute.xlu0 %484
        %486 = vrot.lane.b32.xlu0 %v474, 125
        %v487 = vpop.permute.xlu0 %486
        %488 = vrot.lane.b32.xlu0 %v475, 125
        %v489 = vpop.permute.xlu0 %488
        %490 = vrot.lane.b32.xlu0 %v476, 125
        %v491 = vpop.permute.xlu0 %490
        %v492 = vsel %vm455, %v483, %v485
        %v493 = vsel %vm455, %v485, %v487
        %v494 = vsel %vm455, %v487, %v489
        %v495 = vsel %vm455, %v489, %v491
        %v500 = vadd.f32 %v464, %v492
        %v501 = vadd.f32 %v465, %v493
        %v502 = vadd.f32 %v466, %v494
        %v503 = vadd.f32 %v467, %v495
        %504 = vset.pattern.permute.xlu0 8
        %505 = vperm.xlu0 %504, %v208
        %v506 = vpop.permute.xlu0 %505
        %v508 = vmul.f32 %v506, %v267
        %v509 = vmul.f32 %v506, %v268
        %v510 = vmul.f32 %v506, %v269
        %v511 = vmul.f32 %v506, %v270
        %v512 = vmul.f32 %v506, %v271
        %518 = vrot.lane.b32.xlu0 %v508, 124
        %v519 = vpop.permute.xlu0 %518
        %520 = vrot.lane.b32.xlu0 %v509, 124
        %v521 = vpop.permute.xlu0 %520
        %522 = vrot.lane.b32.xlu0 %v510, 124
        %v523 = vpop.permute.xlu0 %522
        %524 = vrot.lane.b32.xlu0 %v511, 124
        %v525 = vpop.permute.xlu0 %524
        %526 = vrot.lane.b32.xlu0 %v512, 124
        %v527 = vpop.permute.xlu0 %526
        %vm528 = vcmask 1014784
        %v529 = vsel %vm528, %v519, %v521
        %v530 = vsel %vm528, %v521, %v523
        %v531 = vsel %vm528, %v523, %v525
        %v532 = vsel %vm528, %v525, %v527
        %v537 = vadd.f32 %v500, %v529
        %v538 = vadd.f32 %v501, %v530
        %v539 = vadd.f32 %v502, %v531
        %v540 = vadd.f32 %v503, %v532
        %541 = vset.pattern.permute.xlu0 9
        %542 = vperm.xlu0 %541, %v208
        %v543 = vpop.permute.xlu0 %542
        %v545 = vmul.f32 %v543, %v316
        %v546 = vmul.f32 %v543, %v317
        %v547 = vmul.f32 %v543, %v318
        %v548 = vmul.f32 %v543, %v319
        %v549 = vmul.f32 %v543, %v320
        %555 = vrot.lane.b32.xlu0 %v545, 124
        %v556 = vpop.permute.xlu0 %555
        %557 = vrot.lane.b32.xlu0 %v546, 124
        %v558 = vpop.permute.xlu0 %557
        %559 = vrot.lane.b32.xlu0 %v547, 124
        %v560 = vpop.permute.xlu0 %559
        %561 = vrot.lane.b32.xlu0 %v548, 124
        %v562 = vpop.permute.xlu0 %561
        %563 = vrot.lane.b32.xlu0 %v549, 124
        %v564 = vpop.permute.xlu0 %563
        %v565 = vsel %vm528, %v556, %v558
        %v566 = vsel %vm528, %v558, %v560
        %v567 = vsel %vm528, %v560, %v562
        %v568 = vsel %vm528, %v562, %v564
        %v573 = vadd.f32 %v537, %v565
        %v574 = vadd.f32 %v538, %v566
        %v575 = vadd.f32 %v539, %v567
        %v576 = vadd.f32 %v540, %v568
        %577 = vset.pattern.permute.xlu0 10
        %578 = vperm.xlu0 %577, %v208
        %v579 = vpop.permute.xlu0 %578
        %v581 = vmul.f32 %v579, %v267
        %v582 = vmul.f32 %v579, %v268
        %v583 = vmul.f32 %v579, %v269
        %v584 = vmul.f32 %v579, %v270
        %v585 = vmul.f32 %v579, %v271
        %591 = vrot.lane.b32.xlu0 %v581, 123
        %v592 = vpop.permute.xlu0 %591
        %593 = vrot.lane.b32.xlu0 %v582, 123
        %v594 = vpop.permute.xlu0 %593
        %595 = vrot.lane.b32.xlu0 %v583, 123
        %v596 = vpop.permute.xlu0 %595
        %597 = vrot.lane.b32.xlu0 %v584, 123
        %v598 = vpop.permute.xlu0 %597
        %599 = vrot.lane.b32.xlu0 %v585, 123
        %v600 = vpop.permute.xlu0 %599
        %vm601 = vcmask 1006592
        %v602 = vsel %vm601, %v592, %v594
        %v603 = vsel %vm601, %v594, %v596
        %v604 = vsel %vm601, %v596, %v598
        %v605 = vsel %vm601, %v598, %v600
        %v610 = vadd.f32 %v573, %v602
        %v611 = vadd.f32 %v574, %v603
        %v612 = vadd.f32 %v575, %v604
        %v613 = vadd.f32 %v576, %v605
        %614 = vset.pattern.permute.xlu0 11
        %615 = vperm.xlu0 %614, %v208
        %v616 = vpop.permute.xlu0 %615
        %v618 = vmul.f32 %v616, %v316
        %v619 = vmul.f32 %v616, %v317
        %v620 = vmul.f32 %v616, %v318
        %v621 = vmul.f32 %v616, %v319
        %v622 = vmul.f32 %v616, %v320
        %628 = vrot.lane.b32.xlu0 %v618, 123
        %v629 = vpop.permute.xlu0 %628
        %630 = vrot.lane.b32.xlu0 %v619, 123
        %v631 = vpop.permute.xlu0 %630
        %632 = vrot.lane.b32.xlu0 %v620, 123
        %v633 = vpop.permute.xlu0 %632
        %634 = vrot.lane.b32.xlu0 %v621, 123
        %v635 = vpop.permute.xlu0 %634
        %636 = vrot.lane.b32.xlu0 %v622, 123
        %v637 = vpop.permute.xlu0 %636
        %v638 = vsel %vm601, %v629, %v631
        %v639 = vsel %vm601, %v631, %v633
        %v640 = vsel %vm601, %v633, %v635
        %v641 = vsel %vm601, %v635, %v637
        %v646 = vadd.f32 %v610, %v638
        %v647 = vadd.f32 %v611, %v639
        %v648 = vadd.f32 %v612, %v640
        %v649 = vadd.f32 %v613, %v641
        %650 = vset.pattern.permute.xlu0 12
        %651 = vperm.xlu0 %650, %v208
        %v652 = vpop.permute.xlu0 %651
        %v654 = vmul.f32 %v652, %v267
        %v655 = vmul.f32 %v652, %v268
        %v656 = vmul.f32 %v652, %v269
        %v657 = vmul.f32 %v652, %v270
        %v658 = vmul.f32 %v652, %v271
        %664 = vrot.lane.b32.xlu0 %v654, 122
        %v665 = vpop.permute.xlu0 %664
        %666 = vrot.lane.b32.xlu0 %v655, 122
        %v667 = vpop.permute.xlu0 %666
        %668 = vrot.lane.b32.xlu0 %v656, 122
        %v669 = vpop.permute.xlu0 %668
        %670 = vrot.lane.b32.xlu0 %v657, 122
        %v671 = vpop.permute.xlu0 %670
        %672 = vrot.lane.b32.xlu0 %v658, 122
        %v673 = vpop.permute.xlu0 %672
        %vm674 = vcmask 998400
        %v675 = vsel %vm674, %v665, %v667
        %v676 = vsel %vm674, %v667, %v669
        %v677 = vsel %vm674, %v669, %v671
        %v678 = vsel %vm674, %v671, %v673
        %v683 = vadd.f32 %v646, %v675
        %v684 = vadd.f32 %v647, %v676
        %v685 = vadd.f32 %v648, %v677
        %v686 = vadd.f32 %v649, %v678
        %687 = vset.pattern.permute.xlu0 13
        %688 = vperm.xlu0 %687, %v208
        %v689 = vpop.permute.xlu0 %688
        %v691 = vmul.f32 %v689, %v316
        %v692 = vmul.f32 %v689, %v317
        %v693 = vmul.f32 %v689, %v318
        %v694 = vmul.f32 %v689, %v319
        %v695 = vmul.f32 %v689, %v320
        %701 = vrot.lane.b32.xlu0 %v691, 122
        %v702 = vpop.permute.xlu0 %701
        %703 = vrot.lane.b32.xlu0 %v692, 122
        %v704 = vpop.permute.xlu0 %703
        %705 = vrot.lane.b32.xlu0 %v693, 122
        %v706 = vpop.permute.xlu0 %705
        %707 = vrot.lane.b32.xlu0 %v694, 122
        %v708 = vpop.permute.xlu0 %707
        %709 = vrot.lane.b32.xlu0 %v695, 122
        %v710 = vpop.permute.xlu0 %709
        %v711 = vsel %vm674, %v702, %v704
        %v712 = vsel %vm674, %v704, %v706
        %v713 = vsel %vm674, %v706, %v708
        %v714 = vsel %vm674, %v708, %v710
        %v719 = vadd.f32 %v683, %v711
        %v720 = vadd.f32 %v684, %v712
        %v721 = vadd.f32 %v685, %v713
        %v722 = vadd.f32 %v686, %v714
        %723 = vset.pattern.permute.xlu0 14
        %724 = vperm.xlu0 %723, %v208
        %v725 = vpop.permute.xlu0 %724
        %v727 = vmul.f32 %v725, %v267
        %v728 = vmul.f32 %v725, %v268
        %v729 = vmul.f32 %v725, %v269
        %v730 = vmul.f32 %v725, %v270
        %v731 = vmul.f32 %v725, %v271
        %737 = vrot.lane.b32.xlu0 %v727, 121
        %v738 = vpop.permute.xlu0 %737
        %739 = vrot.lane.b32.xlu0 %v728, 121
        %v740 = vpop.permute.xlu0 %739
        %741 = vrot.lane.b32.xlu0 %v729, 121
        %v742 = vpop.permute.xlu0 %741
        %743 = vrot.lane.b32.xlu0 %v730, 121
        %v744 = vpop.permute.xlu0 %743
        %745 = vrot.lane.b32.xlu0 %v731, 121
        %v746 = vpop.permute.xlu0 %745
        %vm747 = vcmask 990208
        %v748 = vsel %vm747, %v738, %v740
        %v749 = vsel %vm747, %v740, %v742
        %v750 = vsel %vm747, %v742, %v744
        %v751 = vsel %vm747, %v744, %v746
        %v756 = vadd.f32 %v719, %v748
        %v757 = vadd.f32 %v720, %v749
        %v758 = vadd.f32 %v721, %v750
        %v759 = vadd.f32 %v722, %v751
        %760 = vset.pattern.permute.xlu0 15
        %761 = vperm.xlu0 %760, %v208
        %v762 = vpop.permute.xlu0 %761
        %v764 = vmul.f32 %v762, %v316
        %v765 = vmul.f32 %v762, %v317
        %v766 = vmul.f32 %v762, %v318
        %v767 = vmul.f32 %v762, %v319
        %v768 = vmul.f32 %v762, %v320
        %774 = vrot.lane.b32.xlu0 %v764, 121
        %v775 = vpop.permute.xlu0 %774
        %776 = vrot.lane.b32.xlu0 %v765, 121
        %v777 = vpop.permute.xlu0 %776
        %778 = vrot.lane.b32.xlu0 %v766, 121
        %v779 = vpop.permute.xlu0 %778
        %780 = vrot.lane.b32.xlu0 %v767, 121
        %v781 = vpop.permute.xlu0 %780
        %782 = vrot.lane.b32.xlu0 %v768, 121
        %v783 = vpop.permute.xlu0 %782
        %v784 = vsel %vm747, %v775, %v777
        %v785 = vsel %vm747, %v777, %v779
        %v786 = vsel %vm747, %v779, %v781
        %v787 = vsel %vm747, %v781, %v783
        %v792 = vadd.f32 %v756, %v784
        %v793 = vadd.f32 %v757, %v785
        %v794 = vadd.f32 %v758, %v786
        %v795 = vadd.f32 %v759, %v787
        %796 = vst [vmem:[%s206] sm:$0xff] %v792
        %797 = vst [vmem:[%s206 + $0x8] sm:$0xff] %v793
        %798 = vst [vmem:[%s206 + $0x10] sm:$0xff] %v794
        %799 = vst [vmem:[%s206 + $0x18] sm:$0xff] %v795
        %s800 = scalar_lea.vmem %s183, 8 [#allocation2]
        %v801 = vld [vmem:[%s800] ss:$2 sm:$0xf]
        %v803 = vperm.slane %v801, 0
        %v804 = vperm.slane %v801, 1
        %v805 = vperm.slane %v801, 2
        %v806 = vperm.slane %v801, 3
        %v811 = vmul.f32 %v219, %v803
        %v812 = vmul.f32 %v219, %v804
        %v813 = vmul.f32 %v219, %v805
        %v814 = vmul.f32 %v219, %v806
        %v815 = vadd.f32 %v213, %v811
        %v816 = vadd.f32 %v213, %v812
        %v817 = vadd.f32 %v213, %v813
        %v818 = vadd.f32 %v213, %v814
        %s819 = scalar_lea.vmem %s183, 9 [#allocation2]
        %v820 = vld [vmem:[%s819] ss:$2 sm:$0xf]
        %v822 = vperm.slane %v820, 0
        %v823 = vperm.slane %v820, 1
        %v824 = vperm.slane %v820, 2
        %v825 = vperm.slane %v820, 3
        %v830 = vmul.f32 %v242, %v822
        %v831 = vmul.f32 %v242, %v823
        %v832 = vmul.f32 %v242, %v824
        %v833 = vmul.f32 %v242, %v825
        %v834 = vadd.f32 %v815, %v830
        %v835 = vadd.f32 %v816, %v831
        %v836 = vadd.f32 %v817, %v832
        %v837 = vadd.f32 %v818, %v833
        %v838 = vld [vmem:[%s800] ss:$2 sm:$0x1f]
        %v840 = vperm.slane %v838, 0
        %v841 = vperm.slane %v838, 1
        %v842 = vperm.slane %v838, 2
        %v843 = vperm.slane %v838, 3
        %v844 = vperm.slane %v838, 4
        %v850 = vmul.f32 %v264, %v840
        %v851 = vmul.f32 %v264, %v841
        %v852 = vmul.f32 %v264, %v842
        %v853 = vmul.f32 %v264, %v843
        %v854 = vmul.f32 %v264, %v844
        %860 = vrot.lane.b32.xlu0 %v850, 127
        %v861 = vpop.permute.xlu0 %860
        %862 = vrot.lane.b32.xlu0 %v851, 127
        %v863 = vpop.permute.xlu0 %862
        %864 = vrot.lane.b32.xlu0 %v852, 127
        %v865 = vpop.permute.xlu0 %864
        %866 = vrot.lane.b32.xlu0 %v853, 127
        %v867 = vpop.permute.xlu0 %866
        %868 = vrot.lane.b32.xlu0 %v854, 127
        %v869 = vpop.permute.xlu0 %868
        %v870 = vsel %vm297, %v861, %v863
        %v871 = vsel %vm297, %v863, %v865
        %v872 = vsel %vm297, %v865, %v867
        %v873 = vsel %vm297, %v867, %v869
        %v878 = vadd.f32 %v834, %v870
        %v879 = vadd.f32 %v835, %v871
        %v880 = vadd.f32 %v836, %v872
        %v881 = vadd.f32 %v837, %v873
        %v882 = vld [vmem:[%s819] ss:$2 sm:$0x1f]
        %v884 = vperm.slane %v882, 0
        %v885 = vperm.slane %v882, 1
        %v886 = vperm.slane %v882, 2
        %v887 = vperm.slane %v882, 3
        %v888 = vperm.slane %v882, 4
        %v894 = vmul.f32 %v313, %v884
        %v895 = vmul.f32 %v313, %v885
        %v896 = vmul.f32 %v313, %v886
        %v897 = vmul.f32 %v313, %v887
        %v898 = vmul.f32 %v313, %v888
        %904 = vrot.lane.b32.xlu0 %v894, 127
        %v905 = vpop.permute.xlu0 %904
        %906 = vrot.lane.b32.xlu0 %v895, 127
        %v907 = vpop.permute.xlu0 %906
        %908 = vrot.lane.b32.xlu0 %v896, 127
        %v909 = vpop.permute.xlu0 %908
        %910 = vrot.lane.b32.xlu0 %v897, 127
        %v911 = vpop.permute.xlu0 %910
        %912 = vrot.lane.b32.xlu0 %v898, 127
        %v913 = vpop.permute.xlu0 %912
        %v914 = vsel %vm297, %v905, %v907
        %v915 = vsel %vm297, %v907, %v909
        %v916 = vsel %vm297, %v909, %v911
        %v917 = vsel %vm297, %v911, %v913
        %v922 = vadd.f32 %v878, %v914
        %v923 = vadd.f32 %v879, %v915
        %v924 = vadd.f32 %v880, %v916
        %v925 = vadd.f32 %v881, %v917
        %v926 = vmul.f32 %v360, %v840
        %v927 = vmul.f32 %v360, %v841
        %v928 = vmul.f32 %v360, %v842
        %v929 = vmul.f32 %v360, %v843
        %v930 = vmul.f32 %v360, %v844
        %936 = vrot.lane.b32.xlu0 %v926, 126
        %v937 = vpop.permute.xlu0 %936
        %938 = vrot.lane.b32.xlu0 %v927, 126
        %v939 = vpop.permute.xlu0 %938
        %940 = vrot.lane.b32.xlu0 %v928, 126
        %v941 = vpop.permute.xlu0 %940
        %942 = vrot.lane.b32.xlu0 %v929, 126
        %v943 = vpop.permute.xlu0 %942
        %944 = vrot.lane.b32.xlu0 %v930, 126
        %v945 = vpop.permute.xlu0 %944
        %v946 = vsel %vm382, %v937, %v939
        %v947 = vsel %vm382, %v939, %v941
        %v948 = vsel %vm382, %v941, %v943
        %v949 = vsel %vm382, %v943, %v945
        %v954 = vadd.f32 %v922, %v946
        %v955 = vadd.f32 %v923, %v947
        %v956 = vadd.f32 %v924, %v948
        %v957 = vadd.f32 %v925, %v949
        %v958 = vmul.f32 %v397, %v884
        %v959 = vmul.f32 %v397, %v885
        %v960 = vmul.f32 %v397, %v886
        %v961 = vmul.f32 %v397, %v887
        %v962 = vmul.f32 %v397, %v888
        %968 = vrot.lane.b32.xlu0 %v958, 126
        %v969 = vpop.permute.xlu0 %968
        %970 = vrot.lane.b32.xlu0 %v959, 126
        %v971 = vpop.permute.xlu0 %970
        %972 = vrot.lane.b32.xlu0 %v960, 126
        %v973 = vpop.permute.xlu0 %972
        %974 = vrot.lane.b32.xlu0 %v961, 126
        %v975 = vpop.permute.xlu0 %974
        %976 = vrot.lane.b32.xlu0 %v962, 126
        %v977 = vpop.permute.xlu0 %976
        %v978 = vsel %vm382, %v969, %v971
        %v979 = vsel %vm382, %v971, %v973
        %v980 = vsel %vm382, %v973, %v975
        %v981 = vsel %vm382, %v975, %v977
        %v986 = vadd.f32 %v954, %v978
        %v987 = vadd.f32 %v955, %v979
        %v988 = vadd.f32 %v956, %v980
        %v989 = vadd.f32 %v957, %v981
        %v990 = vmul.f32 %v433, %v840
        %v991 = vmul.f32 %v433, %v841
        %v992 = vmul.f32 %v433, %v842
        %v993 = vmul.f32 %v433, %v843
        %v994 = vmul.f32 %v433, %v844
        %1000 = vrot.lane.b32.xlu0 %v990, 125
        %v1001 = vpop.permute.xlu0 %1000
        %1002 = vrot.lane.b32.xlu0 %v991, 125
        %v1003 = vpop.permute.xlu0 %1002
        %1004 = vrot.lane.b32.xlu0 %v992, 125
        %v1005 = vpop.permute.xlu0 %1004
        %1006 = vrot.lane.b32.xlu0 %v993, 125
        %v1007 = vpop.permute.xlu0 %1006
        %1008 = vrot.lane.b32.xlu0 %v994, 125
        %v1009 = vpop.permute.xlu0 %1008
        %v1010 = vsel %vm455, %v1001, %v1003
        %v1011 = vsel %vm455, %v1003, %v1005
        %v1012 = vsel %vm455, %v1005, %v1007
        %v1013 = vsel %vm455, %v1007, %v1009
        %v1018 = vadd.f32 %v986, %v1010
        %v1019 = vadd.f32 %v987, %v1011
        %v1020 = vadd.f32 %v988, %v1012
        %v1021 = vadd.f32 %v989, %v1013
        %v1022 = vmul.f32 %v470, %v884
        %v1023 = vmul.f32 %v470, %v885
        %v1024 = vmul.f32 %v470, %v886
        %v1025 = vmul.f32 %v470, %v887
        %v1026 = vmul.f32 %v470, %v888
        %1032 = vrot.lane.b32.xlu0 %v1022, 125
        %v1033 = vpop.permute.xlu0 %1032
        %1034 = vrot.lane.b32.xlu0 %v1023, 125
        %v1035 = vpop.permute.xlu0 %1034
        %1036 = vrot.lane.b32.xlu0 %v1024, 125
        %v1037 = vpop.permute.xlu0 %1036
        %1038 = vrot.lane.b32.xlu0 %v1025, 125
        %v1039 = vpop.permute.xlu0 %1038
        %1040 = vrot.lane.b32.xlu0 %v1026, 125
        %v1041 = vpop.permute.xlu0 %1040
        %v1042 = vsel %vm455, %v1033, %v1035
        %v1043 = vsel %vm455, %v1035, %v1037
        %v1044 = vsel %vm455, %v1037, %v1039
        %v1045 = vsel %vm455, %v1039, %v1041
        %v1050 = vadd.f32 %v1018, %v1042
        %v1051 = vadd.f32 %v1019, %v1043
        %v1052 = vadd.f32 %v1020, %v1044
        %v1053 = vadd.f32 %v1021, %v1045
        %v1054 = vmul.f32 %v506, %v840
        %v1055 = vmul.f32 %v506, %v841
        %v1056 = vmul.f32 %v506, %v842
        %v1057 = vmul.f32 %v506, %v843
        %v1058 = vmul.f32 %v506, %v844
        %1064 = vrot.lane.b32.xlu0 %v1054, 124
        %v1065 = vpop.permute.xlu0 %1064
        %1066 = vrot.lane.b32.xlu0 %v1055, 124
        %v1067 = vpop.permute.xlu0 %1066
        %1068 = vrot.lane.b32.xlu0 %v1056, 124
        %v1069 = vpop.permute.xlu0 %1068
        %1070 = vrot.lane.b32.xlu0 %v1057, 124
        %v1071 = vpop.permute.xlu0 %1070
        %1072 = vrot.lane.b32.xlu0 %v1058, 124
        %v1073 = vpop.permute.xlu0 %1072
        %v1074 = vsel %vm528, %v1065, %v1067
        %v1075 = vsel %vm528, %v1067, %v1069
        %v1076 = vsel %vm528, %v1069, %v1071
        %v1077 = vsel %vm528, %v1071, %v1073
        %v1082 = vadd.f32 %v1050, %v1074
        %v1083 = vadd.f32 %v1051, %v1075
        %v1084 = vadd.f32 %v1052, %v1076
        %v1085 = vadd.f32 %v1053, %v1077
        %v1086 = vmul.f32 %v543, %v884
        %v1087 = vmul.f32 %v543, %v885
        %v1088 = vmul.f32 %v543, %v886
        %v1089 = vmul.f32 %v543, %v887
        %v1090 = vmul.f32 %v543, %v888
        %1096 = vrot.lane.b32.xlu0 %v1086, 124
        %v1097 = vpop.permute.xlu0 %1096
        %1098 = vrot.lane.b32.xlu0 %v1087, 124
        %v1099 = vpop.permute.xlu0 %1098
        %1100 = vrot.lane.b32.xlu0 %v1088, 124
        %v1101 = vpop.permute.xlu0 %1100
        %1102 = vrot.lane.b32.xlu0 %v1089, 124
        %v1103 = vpop.permute.xlu0 %1102
        %1104 = vrot.lane.b32.xlu0 %v1090, 124
        %v1105 = vpop.permute.xlu0 %1104
        %v1106 = vsel %vm528, %v1097, %v1099
        %v1107 = vsel %vm528, %v1099, %v1101
        %v1108 = vsel %vm528, %v1101, %v1103
        %v1109 = vsel %vm528, %v1103, %v1105
        %v1114 = vadd.f32 %v1082, %v1106
        %v1115 = vadd.f32 %v1083, %v1107
        %v1116 = vadd.f32 %v1084, %v1108
        %v1117 = vadd.f32 %v1085, %v1109
        %v1118 = vmul.f32 %v579, %v840
        %v1119 = vmul.f32 %v579, %v841
        %v1120 = vmul.f32 %v579, %v842
        %v1121 = vmul.f32 %v579, %v843
        %v1122 = vmul.f32 %v579, %v844
        %1128 = vrot.lane.b32.xlu0 %v1118, 123
        %v1129 = vpop.permute.xlu0 %1128
        %1130 = vrot.lane.b32.xlu0 %v1119, 123
        %v1131 = vpop.permute.xlu0 %1130
        %1132 = vrot.lane.b32.xlu0 %v1120, 123
        %v1133 = vpop.permute.xlu0 %1132
        %1134 = vrot.lane.b32.xlu0 %v1121, 123
        %v1135 = vpop.permute.xlu0 %1134
        %1136 = vrot.lane.b32.xlu0 %v1122, 123
        %v1137 = vpop.permute.xlu0 %1136
        %v1138 = vsel %vm601, %v1129, %v1131
        %v1139 = vsel %vm601, %v1131, %v1133
        %v1140 = vsel %vm601, %v1133, %v1135
        %v1141 = vsel %vm601, %v1135, %v1137
        %v1146 = vadd.f32 %v1114, %v1138
        %v1147 = vadd.f32 %v1115, %v1139
        %v1148 = vadd.f32 %v1116, %v1140
        %v1149 = vadd.f32 %v1117, %v1141
        %v1150 = vmul.f32 %v616, %v884
        %v1151 = vmul.f32 %v616, %v885
        %v1152 = vmul.f32 %v616, %v886
        %v1153 = vmul.f32 %v616, %v887
        %v1154 = vmul.f32 %v616, %v888
        %1160 = vrot.lane.b32.xlu0 %v1150, 123
        %v1161 = vpop.permute.xlu0 %1160
        %1162 = vrot.lane.b32.xlu0 %v1151, 123
        %v1163 = vpop.permute.xlu0 %1162
        %1164 = vrot.lane.b32.xlu0 %v1152, 123
        %v1165 = vpop.permute.xlu0 %1164
        %1166 = vrot.lane.b32.xlu0 %v1153, 123
        %v1167 = vpop.permute.xlu0 %1166
        %1168 = vrot.lane.b32.xlu0 %v1154, 123
        %v1169 = vpop.permute.xlu0 %1168
        %v1170 = vsel %vm601, %v1161, %v1163
        %v1171 = vsel %vm601, %v1163, %v1165
        %v1172 = vsel %vm601, %v1165, %v1167
        %v1173 = vsel %vm601, %v1167, %v1169
        %v1178 = vadd.f32 %v1146, %v1170
        %v1179 = vadd.f32 %v1147, %v1171
        %v1180 = vadd.f32 %v1148, %v1172
        %v1181 = vadd.f32 %v1149, %v1173
        %v1182 = vmul.f32 %v652, %v840
        %v1183 = vmul.f32 %v652, %v841
        %v1184 = vmul.f32 %v652, %v842
        %v1185 = vmul.f32 %v652, %v843
        %v1186 = vmul.f32 %v652, %v844
        %1192 = vrot.lane.b32.xlu0 %v1182, 122
        %v1193 = vpop.permute.xlu0 %1192
        %1194 = vrot.lane.b32.xlu0 %v1183, 122
        %v1195 = vpop.permute.xlu0 %1194
        %1196 = vrot.lane.b32.xlu0 %v1184, 122
        %v1197 = vpop.permute.xlu0 %1196
        %1198 = vrot.lane.b32.xlu0 %v1185, 122
        %v1199 = vpop.permute.xlu0 %1198
        %1200 = vrot.lane.b32.xlu0 %v1186, 122
        %v1201 = vpop.permute.xlu0 %1200
        %v1202 = vsel %vm674, %v1193, %v1195
        %v1203 = vsel %vm674, %v1195, %v1197
        %v1204 = vsel %vm674, %v1197, %v1199
        %v1205 = vsel %vm674, %v1199, %v1201
        %v1210 = vadd.f32 %v1178, %v1202
        %v1211 = vadd.f32 %v1179, %v1203
        %v1212 = vadd.f32 %v1180, %v1204
        %v1213 = vadd.f32 %v1181, %v1205
        %v1214 = vmul.f32 %v689, %v884
        %v1215 = vmul.f32 %v689, %v885
        %v1216 = vmul.f32 %v689, %v886
        %v1217 = vmul.f32 %v689, %v887
        %v1218 = vmul.f32 %v689, %v888
        %1224 = vrot.lane.b32.xlu0 %v1214, 122
        %v1225 = vpop.permute.xlu0 %1224
        %1226 = vrot.lane.b32.xlu0 %v1215, 122
        %v1227 = vpop.permute.xlu0 %1226
        %1228 = vrot.lane.b32.xlu0 %v1216, 122
        %v1229 = vpop.permute.xlu0 %1228
        %1230 = vrot.lane.b32.xlu0 %v1217, 122
        %v1231 = vpop.permute.xlu0 %1230
        %1232 = vrot.lane.b32.xlu0 %v1218, 122
        %v1233 = vpop.permute.xlu0 %1232
        %v1234 = vsel %vm674, %v1225, %v1227
        %v1235 = vsel %vm674, %v1227, %v1229
        %v1236 = vsel %vm674, %v1229, %v1231
        %v1237 = vsel %vm674, %v1231, %v1233
        %v1242 = vadd.f32 %v1210, %v1234
        %v1243 = vadd.f32 %v1211, %v1235
        %v1244 = vadd.f32 %v1212, %v1236
        %v1245 = vadd.f32 %v1213, %v1237
        %v1246 = vmul.f32 %v725, %v840
        %v1247 = vmul.f32 %v725, %v841
        %v1248 = vmul.f32 %v725, %v842
        %v1249 = vmul.f32 %v725, %v843
        %v1250 = vmul.f32 %v725, %v844
        %1256 = vrot.lane.b32.xlu0 %v1246, 121
        %v1257 = vpop.permute.xlu0 %1256
        %1258 = vrot.lane.b32.xlu0 %v1247, 121
        %v1259 = vpop.permute.xlu0 %1258
        %1260 = vrot.lane.b32.xlu0 %v1248, 121
        %v1261 = vpop.permute.xlu0 %1260
        %1262 = vrot.lane.b32.xlu0 %v1249, 121
        %v1263 = vpop.permute.xlu0 %1262
        %1264 = vrot.lane.b32.xlu0 %v1250, 121
        %v1265 = vpop.permute.xlu0 %1264
        %v1266 = vsel %vm747, %v1257, %v1259
        %v1267 = vsel %vm747, %v1259, %v1261
        %v1268 = vsel %vm747, %v1261, %v1263
        %v1269 = vsel %vm747, %v1263, %v1265
        %v1274 = vadd.f32 %v1242, %v1266
        %v1275 = vadd.f32 %v1243, %v1267
        %v1276 = vadd.f32 %v1244, %v1268
        %v1277 = vadd.f32 %v1245, %v1269
        %v1278 = vmul.f32 %v762, %v884
        %v1279 = vmul.f32 %v762, %v885
        %v1280 = vmul.f32 %v762, %v886
        %v1281 = vmul.f32 %v762, %v887
        %v1282 = vmul.f32 %v762, %v888
        %1288 = vrot.lane.b32.xlu0 %v1278, 121
        %v1289 = vpop.permute.xlu0 %1288
        %1290 = vrot.lane.b32.xlu0 %v1279, 121
        %v1291 = vpop.permute.xlu0 %1290
        %1292 = vrot.lane.b32.xlu0 %v1280, 121
        %v1293 = vpop.permute.xlu0 %1292
        %1294 = vrot.lane.b32.xlu0 %v1281, 121
        %v1295 = vpop.permute.xlu0 %1294
        %1296 = vrot.lane.b32.xlu0 %v1282, 121
        %v1297 = vpop.permute.xlu0 %1296
        %v1298 = vsel %vm747, %v1289, %v1291
        %v1299 = vsel %vm747, %v1291, %v1293
        %v1300 = vsel %vm747, %v1293, %v1295
        %v1301 = vsel %vm747, %v1295, %v1297
        %v1306 = vadd.f32 %v1274, %v1298
        %v1307 = vadd.f32 %v1275, %v1299
        %v1308 = vadd.f32 %v1276, %v1300
        %v1309 = vadd.f32 %v1277, %v1301
        %1310 = vst [vmem:[%s206 + $0x20] sm:$0xff] %v1306
        %1311 = vst [vmem:[%s206 + $0x28] sm:$0xff] %v1307
        %1312 = vst [vmem:[%s206 + $0x30] sm:$0xff] %v1308
        %1313 = vst [vmem:[%s206 + $0x38] sm:$0xff] %v1309
        %s1314 = scalar_lea.vmem %s183, 16 [#allocation2]
        %v1315 = vld [vmem:[%s1314] ss:$2 sm:$0xf]
        %v1317 = vperm.slane %v1315, 0
        %v1318 = vperm.slane %v1315, 1
        %v1319 = vperm.slane %v1315, 2
        %v1320 = vperm.slane %v1315, 3
        %v1325 = vmul.f32 %v219, %v1317
        %v1326 = vmul.f32 %v219, %v1318
        %v1327 = vmul.f32 %v219, %v1319
        %v1328 = vmul.f32 %v219, %v1320
        %v1329 = vadd.f32 %v213, %v1325
        %v1330 = vadd.f32 %v213, %v1326
        %v1331 = vadd.f32 %v213, %v1327
        %v1332 = vadd.f32 %v213, %v1328
        %s1333 = scalar_lea.vmem %s183, 17 [#allocation2]
        %v1334 = vld [vmem:[%s1333] ss:$2 sm:$0xf]
        %v1336 = vperm.slane %v1334, 0
        %v1337 = vperm.slane %v1334, 1
        %v1338 = vperm.slane %v1334, 2
        %v1339 = vperm.slane %v1334, 3
        %v1344 = vmul.f32 %v242, %v1336
        %v1345 = vmul.f32 %v242, %v1337
        %v1346 = vmul.f32 %v242, %v1338
        %v1347 = vmul.f32 %v242, %v1339
        %v1348 = vadd.f32 %v1329, %v1344
        %v1349 = vadd.f32 %v1330, %v1345
        %v1350 = vadd.f32 %v1331, %v1346
        %v1351 = vadd.f32 %v1332, %v1347
        %v1352 = vld [vmem:[%s1314] ss:$2 sm:$0x1f]
        %v1354 = vperm.slane %v1352, 0
        %v1355 = vperm.slane %v1352, 1
        %v1356 = vperm.slane %v1352, 2
        %v1357 = vperm.slane %v1352, 3
        %v1358 = vperm.slane %v1352, 4
        %v1364 = vmul.f32 %v264, %v1354
        %v1365 = vmul.f32 %v264, %v1355
        %v1366 = vmul.f32 %v264, %v1356
        %v1367 = vmul.f32 %v264, %v1357
        %v1368 = vmul.f32 %v264, %v1358
        %1374 = vrot.lane.b32.xlu0 %v1364, 127
        %v1375 = vpop.permute.xlu0 %1374
        %1376 = vrot.lane.b32.xlu0 %v1365, 127
        %v1377 = vpop.permute.xlu0 %1376
        %1378 = vrot.lane.b32.xlu0 %v1366, 127
        %v1379 = vpop.permute.xlu0 %1378
        %1380 = vrot.lane.b32.xlu0 %v1367, 127
        %v1381 = vpop.permute.xlu0 %1380
        %1382 = vrot.lane.b32.xlu0 %v1368, 127
        %v1383 = vpop.permute.xlu0 %1382
        %v1384 = vsel %vm297, %v1375, %v1377
        %v1385 = vsel %vm297, %v1377, %v1379
        %v1386 = vsel %vm297, %v1379, %v1381
        %v1387 = vsel %vm297, %v1381, %v1383
        %v1392 = vadd.f32 %v1348, %v1384
        %v1393 = vadd.f32 %v1349, %v1385
        %v1394 = vadd.f32 %v1350, %v1386
        %v1395 = vadd.f32 %v1351, %v1387
        %v1396 = vld [vmem:[%s1333] ss:$2 sm:$0x1f]
        %v1398 = vperm.slane %v1396, 0
        %v1399 = vperm.slane %v1396, 1
        %v1400 = vperm.slane %v1396, 2
        %v1401 = vperm.slane %v1396, 3
        %v1402 = vperm.slane %v1396, 4
        %v1408 = vmul.f32 %v313, %v1398
        %v1409 = vmul.f32 %v313, %v1399
        %v1410 = vmul.f32 %v313, %v1400
        %v1411 = vmul.f32 %v313, %v1401
        %v1412 = vmul.f32 %v313, %v1402
        %1418 = vrot.lane.b32.xlu0 %v1408, 127
        %v1419 = vpop.permute.xlu0 %1418
        %1420 = vrot.lane.b32.xlu0 %v1409, 127
        %v1421 = vpop.permute.xlu0 %1420
        %1422 = vrot.lane.b32.xlu0 %v1410, 127
        %v1423 = vpop.permute.xlu0 %1422
        %1424 = vrot.lane.b32.xlu0 %v1411, 127
        %v1425 = vpop.permute.xlu0 %1424
        %1426 = vrot.lane.b32.xlu0 %v1412, 127
        %v1427 = vpop.permute.xlu0 %1426
        %v1428 = vsel %vm297, %v1419, %v1421
        %v1429 = vsel %vm297, %v1421, %v1423
        %v1430 = vsel %vm297, %v1423, %v1425
        %v1431 = vsel %vm297, %v1425, %v1427
        %v1436 = vadd.f32 %v1392, %v1428
        %v1437 = vadd.f32 %v1393, %v1429
        %v1438 = vadd.f32 %v1394, %v1430
        %v1439 = vadd.f32 %v1395, %v1431
        %v1440 = vmul.f32 %v360, %v1354
        %v1441 = vmul.f32 %v360, %v1355
        %v1442 = vmul.f32 %v360, %v1356
        %v1443 = vmul.f32 %v360, %v1357
        %v1444 = vmul.f32 %v360, %v1358
        %1450 = vrot.lane.b32.xlu0 %v1440, 126
        %v1451 = vpop.permute.xlu0 %1450
        %1452 = vrot.lane.b32.xlu0 %v1441, 126
        %v1453 = vpop.permute.xlu0 %1452
        %1454 = vrot.lane.b32.xlu0 %v1442, 126
        %v1455 = vpop.permute.xlu0 %1454
        %1456 = vrot.lane.b32.xlu0 %v1443, 126
        %v1457 = vpop.permute.xlu0 %1456
        %1458 = vrot.lane.b32.xlu0 %v1444, 126
        %v1459 = vpop.permute.xlu0 %1458
        %v1460 = vsel %vm382, %v1451, %v1453
        %v1461 = vsel %vm382, %v1453, %v1455
        %v1462 = vsel %vm382, %v1455, %v1457
        %v1463 = vsel %vm382, %v1457, %v1459
        %v1468 = vadd.f32 %v1436, %v1460
        %v1469 = vadd.f32 %v1437, %v1461
        %v1470 = vadd.f32 %v1438, %v1462
        %v1471 = vadd.f32 %v1439, %v1463
        %v1472 = vmul.f32 %v397, %v1398
        %v1473 = vmul.f32 %v397, %v1399
        %v1474 = vmul.f32 %v397, %v1400
        %v1475 = vmul.f32 %v397, %v1401
        %v1476 = vmul.f32 %v397, %v1402
        %1482 = vrot.lane.b32.xlu0 %v1472, 126
        %v1483 = vpop.permute.xlu0 %1482
        %1484 = vrot.lane.b32.xlu0 %v1473, 126
        %v1485 = vpop.permute.xlu0 %1484
        %1486 = vrot.lane.b32.xlu0 %v1474, 126
        %v1487 = vpop.permute.xlu0 %1486
        %1488 = vrot.lane.b32.xlu0 %v1475, 126
        %v1489 = vpop.permute.xlu0 %1488
        %1490 = vrot.lane.b32.xlu0 %v1476, 126
        %v1491 = vpop.permute.xlu0 %1490
        %v1492 = vsel %vm382, %v1483, %v1485
        %v1493 = vsel %vm382, %v1485, %v1487
        %v1494 = vsel %vm382, %v1487, %v1489
        %v1495 = vsel %vm382, %v1489, %v1491
        %v1500 = vadd.f32 %v1468, %v1492
        %v1501 = vadd.f32 %v1469, %v1493
        %v1502 = vadd.f32 %v1470, %v1494
        %v1503 = vadd.f32 %v1471, %v1495
        %v1504 = vmul.f32 %v433, %v1354
        %v1505 = vmul.f32 %v433, %v1355
        %v1506 = vmul.f32 %v433, %v1356
        %v1507 = vmul.f32 %v433, %v1357
        %v1508 = vmul.f32 %v433, %v1358
        %1514 = vrot.lane.b32.xlu0 %v1504, 125
        %v1515 = vpop.permute.xlu0 %1514
        %1516 = vrot.lane.b32.xlu0 %v1505, 125
        %v1517 = vpop.permute.xlu0 %1516
        %1518 = vrot.lane.b32.xlu0 %v1506, 125
        %v1519 = vpop.permute.xlu0 %1518
        %1520 = vrot.lane.b32.xlu0 %v1507, 125
        %v1521 = vpop.permute.xlu0 %1520
        %1522 = vrot.lane.b32.xlu0 %v1508, 125
        %v1523 = vpop.permute.xlu0 %1522
        %v1524 = vsel %vm455, %v1515, %v1517
        %v1525 = vsel %vm455, %v1517, %v1519
        %v1526 = vsel %vm455, %v1519, %v1521
        %v1527 = vsel %vm455, %v1521, %v1523
        %v1532 = vadd.f32 %v1500, %v1524
        %v1533 = vadd.f32 %v1501, %v1525
        %v1534 = vadd.f32 %v1502, %v1526
        %v1535 = vadd.f32 %v1503, %v1527
        %v1536 = vmul.f32 %v470, %v1398
        %v1537 = vmul.f32 %v470, %v1399
        %v1538 = vmul.f32 %v470, %v1400
        %v1539 = vmul.f32 %v470, %v1401
        %v1540 = vmul.f32 %v470, %v1402
        %1546 = vrot.lane.b32.xlu0 %v1536, 125
        %v1547 = vpop.permute.xlu0 %1546
        %1548 = vrot.lane.b32.xlu0 %v1537, 125
        %v1549 = vpop.permute.xlu0 %1548
        %1550 = vrot.lane.b32.xlu0 %v1538, 125
        %v1551 = vpop.permute.xlu0 %1550
        %1552 = vrot.lane.b32.xlu0 %v1539, 125
        %v1553 = vpop.permute.xlu0 %1552
        %1554 = vrot.lane.b32.xlu0 %v1540, 125
        %v1555 = vpop.permute.xlu0 %1554
        %v1556 = vsel %vm455, %v1547, %v1549
        %v1557 = vsel %vm455, %v1549, %v1551
        %v1558 = vsel %vm455, %v1551, %v1553
        %v1559 = vsel %vm455, %v1553, %v1555
        %v1564 = vadd.f32 %v1532, %v1556
        %v1565 = vadd.f32 %v1533, %v1557
        %v1566 = vadd.f32 %v1534, %v1558
        %v1567 = vadd.f32 %v1535, %v1559
        %v1568 = vmul.f32 %v506, %v1354
        %v1569 = vmul.f32 %v506, %v1355
        %v1570 = vmul.f32 %v506, %v1356
        %v1571 = vmul.f32 %v506, %v1357
        %v1572 = vmul.f32 %v506, %v1358
        %1578 = vrot.lane.b32.xlu0 %v1568, 124
        %v1579 = vpop.permute.xlu0 %1578
        %1580 = vrot.lane.b32.xlu0 %v1569, 124
        %v1581 = vpop.permute.xlu0 %1580
        %1582 = vrot.lane.b32.xlu0 %v1570, 124
        %v1583 = vpop.permute.xlu0 %1582
        %1584 = vrot.lane.b32.xlu0 %v1571, 124
        %v1585 = vpop.permute.xlu0 %1584
        %1586 = vrot.lane.b32.xlu0 %v1572, 124
        %v1587 = vpop.permute.xlu0 %1586
        %v1588 = vsel %vm528, %v1579, %v1581
        %v1589 = vsel %vm528, %v1581, %v1583
        %v1590 = vsel %vm528, %v1583, %v1585
        %v1591 = vsel %vm528, %v1585, %v1587
        %v1596 = vadd.f32 %v1564, %v1588
        %v1597 = vadd.f32 %v1565, %v1589
        %v1598 = vadd.f32 %v1566, %v1590
        %v1599 = vadd.f32 %v1567, %v1591
        %v1600 = vmul.f32 %v543, %v1398
        %v1601 = vmul.f32 %v543, %v1399
        %v1602 = vmul.f32 %v543, %v1400
        %v1603 = vmul.f32 %v543, %v1401
        %v1604 = vmul.f32 %v543, %v1402
        %1610 = vrot.lane.b32.xlu0 %v1600, 124
        %v1611 = vpop.permute.xlu0 %1610
        %1612 = vrot.lane.b32.xlu0 %v1601, 124
        %v1613 = vpop.permute.xlu0 %1612
        %1614 = vrot.lane.b32.xlu0 %v1602, 124
        %v1615 = vpop.permute.xlu0 %1614
        %1616 = vrot.lane.b32.xlu0 %v1603, 124
        %v1617 = vpop.permute.xlu0 %1616
        %1618 = vrot.lane.b32.xlu0 %v1604, 124
        %v1619 = vpop.permute.xlu0 %1618
        %v1620 = vsel %vm528, %v1611, %v1613
        %v1621 = vsel %vm528, %v1613, %v1615
        %v1622 = vsel %vm528, %v1615, %v1617
        %v1623 = vsel %vm528, %v1617, %v1619
        %v1628 = vadd.f32 %v1596, %v1620
        %v1629 = vadd.f32 %v1597, %v1621
        %v1630 = vadd.f32 %v1598, %v1622
        %v1631 = vadd.f32 %v1599, %v1623
        %v1632 = vmul.f32 %v579, %v1354
        %v1633 = vmul.f32 %v579, %v1355
        %v1634 = vmul.f32 %v579, %v1356
        %v1635 = vmul.f32 %v579, %v1357
        %v1636 = vmul.f32 %v579, %v1358
        %1642 = vrot.lane.b32.xlu0 %v1632, 123
        %v1643 = vpop.permute.xlu0 %1642
        %1644 = vrot.lane.b32.xlu0 %v1633, 123
        %v1645 = vpop.permute.xlu0 %1644
        %1646 = vrot.lane.b32.xlu0 %v1634, 123
        %v1647 = vpop.permute.xlu0 %1646
        %1648 = vrot.lane.b32.xlu0 %v1635, 123
        %v1649 = vpop.permute.xlu0 %1648
        %1650 = vrot.lane.b32.xlu0 %v1636, 123
        %v1651 = vpop.permute.xlu0 %1650
        %v1652 = vsel %vm601, %v1643, %v1645
        %v1653 = vsel %vm601, %v1645, %v1647
        %v1654 = vsel %vm601, %v1647, %v1649
        %v1655 = vsel %vm601, %v1649, %v1651
        %v1660 = vadd.f32 %v1628, %v1652
        %v1661 = vadd.f32 %v1629, %v1653
        %v1662 = vadd.f32 %v1630, %v1654
        %v1663 = vadd.f32 %v1631, %v1655
        %v1664 = vmul.f32 %v616, %v1398
        %v1665 = vmul.f32 %v616, %v1399
        %v1666 = vmul.f32 %v616, %v1400
        %v1667 = vmul.f32 %v616, %v1401
        %v1668 = vmul.f32 %v616, %v1402
        %1674 = vrot.lane.b32.xlu0 %v1664, 123
        %v1675 = vpop.permute.xlu0 %1674
        %1676 = vrot.lane.b32.xlu0 %v1665, 123
        %v1677 = vpop.permute.xlu0 %1676
        %1678 = vrot.lane.b32.xlu0 %v1666, 123
        %v1679 = vpop.permute.xlu0 %1678
        %1680 = vrot.lane.b32.xlu0 %v1667, 123
        %v1681 = vpop.permute.xlu0 %1680
        %1682 = vrot.lane.b32.xlu0 %v1668, 123
        %v1683 = vpop.permute.xlu0 %1682
        %v1684 = vsel %vm601, %v1675, %v1677
        %v1685 = vsel %vm601, %v1677, %v1679
        %v1686 = vsel %vm601, %v1679, %v1681
        %v1687 = vsel %vm601, %v1681, %v1683
        %v1692 = vadd.f32 %v1660, %v1684
        %v1693 = vadd.f32 %v1661, %v1685
        %v1694 = vadd.f32 %v1662, %v1686
        %v1695 = vadd.f32 %v1663, %v1687
        %v1696 = vmul.f32 %v652, %v1354
        %v1697 = vmul.f32 %v652, %v1355
        %v1698 = vmul.f32 %v652, %v1356
        %v1699 = vmul.f32 %v652, %v1357
        %v1700 = vmul.f32 %v652, %v1358
        %1706 = vrot.lane.b32.xlu0 %v1696, 122
        %v1707 = vpop.permute.xlu0 %1706
        %1708 = vrot.lane.b32.xlu0 %v1697, 122
        %v1709 = vpop.permute.xlu0 %1708
        %1710 = vrot.lane.b32.xlu0 %v1698, 122
        %v1711 = vpop.permute.xlu0 %1710
        %1712 = vrot.lane.b32.xlu0 %v1699, 122
        %v1713 = vpop.permute.xlu0 %1712
        %1714 = vrot.lane.b32.xlu0 %v1700, 122
        %v1715 = vpop.permute.xlu0 %1714
        %v1716 = vsel %vm674, %v1707, %v1709
        %v1717 = vsel %vm674, %v1709, %v1711
        %v1718 = vsel %vm674, %v1711, %v1713
        %v1719 = vsel %vm674, %v1713, %v1715
        %v1724 = vadd.f32 %v1692, %v1716
        %v1725 = vadd.f32 %v1693, %v1717
        %v1726 = vadd.f32 %v1694, %v1718
        %v1727 = vadd.f32 %v1695, %v1719
        %v1728 = vmul.f32 %v689, %v1398
        %v1729 = vmul.f32 %v689, %v1399
        %v1730 = vmul.f32 %v689, %v1400
        %v1731 = vmul.f32 %v689, %v1401
        %v1732 = vmul.f32 %v689, %v1402
        %1738 = vrot.lane.b32.xlu0 %v1728, 122
        %v1739 = vpop.permute.xlu0 %1738
        %1740 = vrot.lane.b32.xlu0 %v1729, 122
        %v1741 = vpop.permute.xlu0 %1740
        %1742 = vrot.lane.b32.xlu0 %v1730, 122
        %v1743 = vpop.permute.xlu0 %1742
        %1744 = vrot.lane.b32.xlu0 %v1731, 122
        %v1745 = vpop.permute.xlu0 %1744
        %1746 = vrot.lane.b32.xlu0 %v1732, 122
        %v1747 = vpop.permute.xlu0 %1746
        %v1748 = vsel %vm674, %v1739, %v1741
        %v1749 = vsel %vm674, %v1741, %v1743
        %v1750 = vsel %vm674, %v1743, %v1745
        %v1751 = vsel %vm674, %v1745, %v1747
        %v1756 = vadd.f32 %v1724, %v1748
        %v1757 = vadd.f32 %v1725, %v1749
        %v1758 = vadd.f32 %v1726, %v1750
        %v1759 = vadd.f32 %v1727, %v1751
        %v1760 = vmul.f32 %v725, %v1354
        %v1761 = vmul.f32 %v725, %v1355
        %v1762 = vmul.f32 %v725, %v1356
        %v1763 = vmul.f32 %v725, %v1357
        %v1764 = vmul.f32 %v725, %v1358
        %1770 = vrot.lane.b32.xlu0 %v1760, 121
        %v1771 = vpop.permute.xlu0 %1770
        %1772 = vrot.lane.b32.xlu0 %v1761, 121
        %v1773 = vpop.permute.xlu0 %1772
        %1774 = vrot.lane.b32.xlu0 %v1762, 121
        %v1775 = vpop.permute.xlu0 %1774
        %1776 = vrot.lane.b32.xlu0 %v1763, 121
        %v1777 = vpop.permute.xlu0 %1776
        %1778 = vrot.lane.b32.xlu0 %v1764, 121
        %v1779 = vpop.permute.xlu0 %1778
        %v1780 = vsel %vm747, %v1771, %v1773
        %v1781 = vsel %vm747, %v1773, %v1775
        %v1782 = vsel %vm747, %v1775, %v1777
        %v1783 = vsel %vm747, %v1777, %v1779
        %v1788 = vadd.f32 %v1756, %v1780
        %v1789 = vadd.f32 %v1757, %v1781
        %v1790 = vadd.f32 %v1758, %v1782
        %v1791 = vadd.f32 %v1759, %v1783
        %v1792 = vmul.f32 %v762, %v1398
        %v1793 = vmul.f32 %v762, %v1399
        %v1794 = vmul.f32 %v762, %v1400
        %v1795 = vmul.f32 %v762, %v1401
        %v1796 = vmul.f32 %v762, %v1402
        %1802 = vrot.lane.b32.xlu0 %v1792, 121
        %v1803 = vpop.permute.xlu0 %1802
        %1804 = vrot.lane.b32.xlu0 %v1793, 121
        %v1805 = vpop.permute.xlu0 %1804
        %1806 = vrot.lane.b32.xlu0 %v1794, 121
        %v1807 = vpop.permute.xlu0 %1806
        %1808 = vrot.lane.b32.xlu0 %v1795, 121
        %v1809 = vpop.permute.xlu0 %1808
        %1810 = vrot.lane.b32.xlu0 %v1796, 121
        %v1811 = vpop.permute.xlu0 %1810
        %v1812 = vsel %vm747, %v1803, %v1805
        %v1813 = vsel %vm747, %v1805, %v1807
        %v1814 = vsel %vm747, %v1807, %v1809
        %v1815 = vsel %vm747, %v1809, %v1811
        %v1820 = vadd.f32 %v1788, %v1812
        %v1821 = vadd.f32 %v1789, %v1813
        %v1822 = vadd.f32 %v1790, %v1814
        %v1823 = vadd.f32 %v1791, %v1815
        %1824 = vst [vmem:[%s206 + $0x40] sm:$0xff] %v1820
        %1825 = vst [vmem:[%s206 + $0x48] sm:$0xff] %v1821
        %1826 = vst [vmem:[%s206 + $0x50] sm:$0xff] %v1822
        %1827 = vst [vmem:[%s206 + $0x58] sm:$0xff] %v1823
        %s1828 = scalar_lea.vmem %s183, 24 [#allocation2]
        %v1829 = vld [vmem:[%s1828] ss:$2 sm:$0xf]
        %v1831 = vperm.slane %v1829, 0
        %v1832 = vperm.slane %v1829, 1
        %v1833 = vperm.slane %v1829, 2
        %v1834 = vperm.slane %v1829, 3
        %v1839 = vmul.f32 %v219, %v1831
        %v1840 = vmul.f32 %v219, %v1832
        %v1841 = vmul.f32 %v219, %v1833
        %v1842 = vmul.f32 %v219, %v1834
        %v1843 = vadd.f32 %v213, %v1839
        %v1844 = vadd.f32 %v213, %v1840
        %v1845 = vadd.f32 %v213, %v1841
        %v1846 = vadd.f32 %v213, %v1842
        %s1847 = scalar_lea.vmem %s183, 25 [#allocation2]
        %v1848 = vld [vmem:[%s1847] ss:$2 sm:$0xf]
        %v1850 = vperm.slane %v1848, 0
        %v1851 = vperm.slane %v1848, 1
        %v1852 = vperm.slane %v1848, 2
        %v1853 = vperm.slane %v1848, 3
        %v1858 = vmul.f32 %v242, %v1850
        %v1859 = vmul.f32 %v242, %v1851
        %v1860 = vmul.f32 %v242, %v1852
        %v1861 = vmul.f32 %v242, %v1853
        %v1862 = vadd.f32 %v1843, %v1858
        %v1863 = vadd.f32 %v1844, %v1859
        %v1864 = vadd.f32 %v1845, %v1860
        %v1865 = vadd.f32 %v1846, %v1861
        %v1866 = vld [vmem:[%s1828] ss:$2 sm:$0x1f]
        %v1868 = vperm.slane %v1866, 0
        %v1869 = vperm.slane %v1866, 1
        %v1870 = vperm.slane %v1866, 2
        %v1871 = vperm.slane %v1866, 3
        %v1872 = vperm.slane %v1866, 4
        %v1878 = vmul.f32 %v264, %v1868
        %v1879 = vmul.f32 %v264, %v1869
        %v1880 = vmul.f32 %v264, %v1870
        %v1881 = vmul.f32 %v264, %v1871
        %v1882 = vmul.f32 %v264, %v1872
        %1888 = vrot.lane.b32.xlu0 %v1878, 127
        %v1889 = vpop.permute.xlu0 %1888
        %1890 = vrot.lane.b32.xlu0 %v1879, 127
        %v1891 = vpop.permute.xlu0 %1890
        %1892 = vrot.lane.b32.xlu0 %v1880, 127
        %v1893 = vpop.permute.xlu0 %1892
        %1894 = vrot.lane.b32.xlu0 %v1881, 127
        %v1895 = vpop.permute.xlu0 %1894
        %1896 = vrot.lane.b32.xlu0 %v1882, 127
        %v1897 = vpop.permute.xlu0 %1896
        %v1898 = vsel %vm297, %v1889, %v1891
        %v1899 = vsel %vm297, %v1891, %v1893
        %v1900 = vsel %vm297, %v1893, %v1895
        %v1901 = vsel %vm297, %v1895, %v1897
        %v1906 = vadd.f32 %v1862, %v1898
        %v1907 = vadd.f32 %v1863, %v1899
        %v1908 = vadd.f32 %v1864, %v1900
        %v1909 = vadd.f32 %v1865, %v1901
        %v1910 = vld [vmem:[%s1847] ss:$2 sm:$0x1f]
        %v1912 = vperm.slane %v1910, 0
        %v1913 = vperm.slane %v1910, 1
        %v1914 = vperm.slane %v1910, 2
        %v1915 = vperm.slane %v1910, 3
        %v1916 = vperm.slane %v1910, 4
        %v1922 = vmul.f32 %v313, %v1912
        %v1923 = vmul.f32 %v313, %v1913
        %v1924 = vmul.f32 %v313, %v1914
        %v1925 = vmul.f32 %v313, %v1915
        %v1926 = vmul.f32 %v313, %v1916
        %1932 = vrot.lane.b32.xlu0 %v1922, 127
        %v1933 = vpop.permute.xlu0 %1932
        %1934 = vrot.lane.b32.xlu0 %v1923, 127
        %v1935 = vpop.permute.xlu0 %1934
        %1936 = vrot.lane.b32.xlu0 %v1924, 127
        %v1937 = vpop.permute.xlu0 %1936
        %1938 = vrot.lane.b32.xlu0 %v1925, 127
        %v1939 = vpop.permute.xlu0 %1938
        %1940 = vrot.lane.b32.xlu0 %v1926, 127
        %v1941 = vpop.permute.xlu0 %1940
        %v1942 = vsel %vm297, %v1933, %v1935
        %v1943 = vsel %vm297, %v1935, %v1937
        %v1944 = vsel %vm297, %v1937, %v1939
        %v1945 = vsel %vm297, %v1939, %v1941
        %v1950 = vadd.f32 %v1906, %v1942
        %v1951 = vadd.f32 %v1907, %v1943
        %v1952 = vadd.f32 %v1908, %v1944
        %v1953 = vadd.f32 %v1909, %v1945
        %v1954 = vmul.f32 %v360, %v1868
        %v1955 = vmul.f32 %v360, %v1869
        %v1956 = vmul.f32 %v360, %v1870
        %v1957 = vmul.f32 %v360, %v1871
        %v1958 = vmul.f32 %v360, %v1872
        %1964 = vrot.lane.b32.xlu0 %v1954, 126
        %v1965 = vpop.permute.xlu0 %1964
        %1966 = vrot.lane.b32.xlu0 %v1955, 126
        %v1967 = vpop.permute.xlu0 %1966
        %1968 = vrot.lane.b32.xlu0 %v1956, 126
        %v1969 = vpop.permute.xlu0 %1968
        %1970 = vrot.lane.b32.xlu0 %v1957, 126
        %v1971 = vpop.permute.xlu0 %1970
        %1972 = vrot.lane.b32.xlu0 %v1958, 126
        %v1973 = vpop.permute.xlu0 %1972
        %v1974 = vsel %vm382, %v1965, %v1967
        %v1975 = vsel %vm382, %v1967, %v1969
        %v1976 = vsel %vm382, %v1969, %v1971
        %v1977 = vsel %vm382, %v1971, %v1973
        %v1982 = vadd.f32 %v1950, %v1974
        %v1983 = vadd.f32 %v1951, %v1975
        %v1984 = vadd.f32 %v1952, %v1976
        %v1985 = vadd.f32 %v1953, %v1977
        %v1986 = vmul.f32 %v397, %v1912
        %v1987 = vmul.f32 %v397, %v1913
        %v1988 = vmul.f32 %v397, %v1914
        %v1989 = vmul.f32 %v397, %v1915
        %v1990 = vmul.f32 %v397, %v1916
        %1996 = vrot.lane.b32.xlu0 %v1986, 126
        %v1997 = vpop.permute.xlu0 %1996
        %1998 = vrot.lane.b32.xlu0 %v1987, 126
        %v1999 = vpop.permute.xlu0 %1998
        %2000 = vrot.lane.b32.xlu0 %v1988, 126
        %v2001 = vpop.permute.xlu0 %2000
        %2002 = vrot.lane.b32.xlu0 %v1989, 126
        %v2003 = vpop.permute.xlu0 %2002
        %2004 = vrot.lane.b32.xlu0 %v1990, 126
        %v2005 = vpop.permute.xlu0 %2004
        %v2006 = vsel %vm382, %v1997, %v1999
        %v2007 = vsel %vm382, %v1999, %v2001
        %v2008 = vsel %vm382, %v2001, %v2003
        %v2009 = vsel %vm382, %v2003, %v2005
        %v2014 = vadd.f32 %v1982, %v2006
        %v2015 = vadd.f32 %v1983, %v2007
        %v2016 = vadd.f32 %v1984, %v2008
        %v2017 = vadd.f32 %v1985, %v2009
        %v2018 = vmul.f32 %v433, %v1868
        %v2019 = vmul.f32 %v433, %v1869
        %v2020 = vmul.f32 %v433, %v1870
        %v2021 = vmul.f32 %v433, %v1871
        %v2022 = vmul.f32 %v433, %v1872
        %2028 = vrot.lane.b32.xlu0 %v2018, 125
        %v2029 = vpop.permute.xlu0 %2028
        %2030 = vrot.lane.b32.xlu0 %v2019, 125
        %v2031 = vpop.permute.xlu0 %2030
        %2032 = vrot.lane.b32.xlu0 %v2020, 125
        %v2033 = vpop.permute.xlu0 %2032
        %2034 = vrot.lane.b32.xlu0 %v2021, 125
        %v2035 = vpop.permute.xlu0 %2034
        %2036 = vrot.lane.b32.xlu0 %v2022, 125
        %v2037 = vpop.permute.xlu0 %2036
        %v2038 = vsel %vm455, %v2029, %v2031
        %v2039 = vsel %vm455, %v2031, %v2033
        %v2040 = vsel %vm455, %v2033, %v2035
        %v2041 = vsel %vm455, %v2035, %v2037
        %v2046 = vadd.f32 %v2014, %v2038
        %v2047 = vadd.f32 %v2015, %v2039
        %v2048 = vadd.f32 %v2016, %v2040
        %v2049 = vadd.f32 %v2017, %v2041
        %v2050 = vmul.f32 %v470, %v1912
        %v2051 = vmul.f32 %v470, %v1913
        %v2052 = vmul.f32 %v470, %v1914
        %v2053 = vmul.f32 %v470, %v1915
        %v2054 = vmul.f32 %v470, %v1916
        %2060 = vrot.lane.b32.xlu0 %v2050, 125
        %v2061 = vpop.permute.xlu0 %2060
        %2062 = vrot.lane.b32.xlu0 %v2051, 125
        %v2063 = vpop.permute.xlu0 %2062
        %2064 = vrot.lane.b32.xlu0 %v2052, 125
        %v2065 = vpop.permute.xlu0 %2064
        %2066 = vrot.lane.b32.xlu0 %v2053, 125
        %v2067 = vpop.permute.xlu0 %2066
        %2068 = vrot.lane.b32.xlu0 %v2054, 125
        %v2069 = vpop.permute.xlu0 %2068
        %v2070 = vsel %vm455, %v2061, %v2063
        %v2071 = vsel %vm455, %v2063, %v2065
        %v2072 = vsel %vm455, %v2065, %v2067
        %v2073 = vsel %vm455, %v2067, %v2069
        %v2078 = vadd.f32 %v2046, %v2070
        %v2079 = vadd.f32 %v2047, %v2071
        %v2080 = vadd.f32 %v2048, %v2072
        %v2081 = vadd.f32 %v2049, %v2073
        %v2082 = vmul.f32 %v506, %v1868
        %v2083 = vmul.f32 %v506, %v1869
        %v2084 = vmul.f32 %v506, %v1870
        %v2085 = vmul.f32 %v506, %v1871
        %v2086 = vmul.f32 %v506, %v1872
        %2092 = vrot.lane.b32.xlu0 %v2082, 124
        %v2093 = vpop.permute.xlu0 %2092
        %2094 = vrot.lane.b32.xlu0 %v2083, 124
        %v2095 = vpop.permute.xlu0 %2094
        %2096 = vrot.lane.b32.xlu0 %v2084, 124
        %v2097 = vpop.permute.xlu0 %2096
        %2098 = vrot.lane.b32.xlu0 %v2085, 124
        %v2099 = vpop.permute.xlu0 %2098
        %2100 = vrot.lane.b32.xlu0 %v2086, 124
        %v2101 = vpop.permute.xlu0 %2100
        %v2102 = vsel %vm528, %v2093, %v2095
        %v2103 = vsel %vm528, %v2095, %v2097
        %v2104 = vsel %vm528, %v2097, %v2099
        %v2105 = vsel %vm528, %v2099, %v2101
        %v2110 = vadd.f32 %v2078, %v2102
        %v2111 = vadd.f32 %v2079, %v2103
        %v2112 = vadd.f32 %v2080, %v2104
        %v2113 = vadd.f32 %v2081, %v2105
        %v2114 = vmul.f32 %v543, %v1912
        %v2115 = vmul.f32 %v543, %v1913
        %v2116 = vmul.f32 %v543, %v1914
        %v2117 = vmul.f32 %v543, %v1915
        %v2118 = vmul.f32 %v543, %v1916
        %2124 = vrot.lane.b32.xlu0 %v2114, 124
        %v2125 = vpop.permute.xlu0 %2124
        %2126 = vrot.lane.b32.xlu0 %v2115, 124
        %v2127 = vpop.permute.xlu0 %2126
        %2128 = vrot.lane.b32.xlu0 %v2116, 124
        %v2129 = vpop.permute.xlu0 %2128
        %2130 = vrot.lane.b32.xlu0 %v2117, 124
        %v2131 = vpop.permute.xlu0 %2130
        %2132 = vrot.lane.b32.xlu0 %v2118, 124
        %v2133 = vpop.permute.xlu0 %2132
        %v2134 = vsel %vm528, %v2125, %v2127
        %v2135 = vsel %vm528, %v2127, %v2129
        %v2136 = vsel %vm528, %v2129, %v2131
        %v2137 = vsel %vm528, %v2131, %v2133
        %v2142 = vadd.f32 %v2110, %v2134
        %v2143 = vadd.f32 %v2111, %v2135
        %v2144 = vadd.f32 %v2112, %v2136
        %v2145 = vadd.f32 %v2113, %v2137
        %v2146 = vmul.f32 %v579, %v1868
        %v2147 = vmul.f32 %v579, %v1869
        %v2148 = vmul.f32 %v579, %v1870
        %v2149 = vmul.f32 %v579, %v1871
        %v2150 = vmul.f32 %v579, %v1872
        %2156 = vrot.lane.b32.xlu0 %v2146, 123
        %v2157 = vpop.permute.xlu0 %2156
        %2158 = vrot.lane.b32.xlu0 %v2147, 123
        %v2159 = vpop.permute.xlu0 %2158
        %2160 = vrot.lane.b32.xlu0 %v2148, 123
        %v2161 = vpop.permute.xlu0 %2160
        %2162 = vrot.lane.b32.xlu0 %v2149, 123
        %v2163 = vpop.permute.xlu0 %2162
        %2164 = vrot.lane.b32.xlu0 %v2150, 123
        %v2165 = vpop.permute.xlu0 %2164
        %v2166 = vsel %vm601, %v2157, %v2159
        %v2167 = vsel %vm601, %v2159, %v2161
        %v2168 = vsel %vm601, %v2161, %v2163
        %v2169 = vsel %vm601, %v2163, %v2165
        %v2174 = vadd.f32 %v2142, %v2166
        %v2175 = vadd.f32 %v2143, %v2167
        %v2176 = vadd.f32 %v2144, %v2168
        %v2177 = vadd.f32 %v2145, %v2169
        %v2178 = vmul.f32 %v616, %v1912
        %v2179 = vmul.f32 %v616, %v1913
        %v2180 = vmul.f32 %v616, %v1914
        %v2181 = vmul.f32 %v616, %v1915
        %v2182 = vmul.f32 %v616, %v1916
        %2188 = vrot.lane.b32.xlu0 %v2178, 123
        %v2189 = vpop.permute.xlu0 %2188
        %2190 = vrot.lane.b32.xlu0 %v2179, 123
        %v2191 = vpop.permute.xlu0 %2190
        %2192 = vrot.lane.b32.xlu0 %v2180, 123
        %v2193 = vpop.permute.xlu0 %2192
        %2194 = vrot.lane.b32.xlu0 %v2181, 123
        %v2195 = vpop.permute.xlu0 %2194
        %2196 = vrot.lane.b32.xlu0 %v2182, 123
        %v2197 = vpop.permute.xlu0 %2196
        %v2198 = vsel %vm601, %v2189, %v2191
        %v2199 = vsel %vm601, %v2191, %v2193
        %v2200 = vsel %vm601, %v2193, %v2195
        %v2201 = vsel %vm601, %v2195, %v2197
        %v2206 = vadd.f32 %v2174, %v2198
        %v2207 = vadd.f32 %v2175, %v2199
        %v2208 = vadd.f32 %v2176, %v2200
        %v2209 = vadd.f32 %v2177, %v2201
        %v2210 = vmul.f32 %v652, %v1868
        %v2211 = vmul.f32 %v652, %v1869
        %v2212 = vmul.f32 %v652, %v1870
        %v2213 = vmul.f32 %v652, %v1871
        %v2214 = vmul.f32 %v652, %v1872
        %2220 = vrot.lane.b32.xlu0 %v2210, 122
        %v2221 = vpop.permute.xlu0 %2220
        %2222 = vrot.lane.b32.xlu0 %v2211, 122
        %v2223 = vpop.permute.xlu0 %2222
        %2224 = vrot.lane.b32.xlu0 %v2212, 122
        %v2225 = vpop.permute.xlu0 %2224
        %2226 = vrot.lane.b32.xlu0 %v2213, 122
        %v2227 = vpop.permute.xlu0 %2226
        %2228 = vrot.lane.b32.xlu0 %v2214, 122
        %v2229 = vpop.permute.xlu0 %2228
        %v2230 = vsel %vm674, %v2221, %v2223
        %v2231 = vsel %vm674, %v2223, %v2225
        %v2232 = vsel %vm674, %v2225, %v2227
        %v2233 = vsel %vm674, %v2227, %v2229
        %v2238 = vadd.f32 %v2206, %v2230
        %v2239 = vadd.f32 %v2207, %v2231
        %v2240 = vadd.f32 %v2208, %v2232
        %v2241 = vadd.f32 %v2209, %v2233
        %v2242 = vmul.f32 %v689, %v1912
        %v2243 = vmul.f32 %v689, %v1913
        %v2244 = vmul.f32 %v689, %v1914
        %v2245 = vmul.f32 %v689, %v1915
        %v2246 = vmul.f32 %v689, %v1916
        %2252 = vrot.lane.b32.xlu0 %v2242, 122
        %v2253 = vpop.permute.xlu0 %2252
        %2254 = vrot.lane.b32.xlu0 %v2243, 122
        %v2255 = vpop.permute.xlu0 %2254
        %2256 = vrot.lane.b32.xlu0 %v2244, 122
        %v2257 = vpop.permute.xlu0 %2256
        %2258 = vrot.lane.b32.xlu0 %v2245, 122
        %v2259 = vpop.permute.xlu0 %2258
        %2260 = vrot.lane.b32.xlu0 %v2246, 122
        %v2261 = vpop.permute.xlu0 %2260
        %v2262 = vsel %vm674, %v2253, %v2255
        %v2263 = vsel %vm674, %v2255, %v2257
        %v2264 = vsel %vm674, %v2257, %v2259
        %v2265 = vsel %vm674, %v2259, %v2261
        %v2270 = vadd.f32 %v2238, %v2262
        %v2271 = vadd.f32 %v2239, %v2263
        %v2272 = vadd.f32 %v2240, %v2264
        %v2273 = vadd.f32 %v2241, %v2265
        %v2274 = vmul.f32 %v725, %v1868
        %v2275 = vmul.f32 %v725, %v1869
        %v2276 = vmul.f32 %v725, %v1870
        %v2277 = vmul.f32 %v725, %v1871
        %v2278 = vmul.f32 %v725, %v1872
        %2284 = vrot.lane.b32.xlu0 %v2274, 121
        %v2285 = vpop.permute.xlu0 %2284
        %2286 = vrot.lane.b32.xlu0 %v2275, 121
        %v2287 = vpop.permute.xlu0 %2286
        %2288 = vrot.lane.b32.xlu0 %v2276, 121
        %v2289 = vpop.permute.xlu0 %2288
        %2290 = vrot.lane.b32.xlu0 %v2277, 121
        %v2291 = vpop.permute.xlu0 %2290
        %2292 = vrot.lane.b32.xlu0 %v2278, 121
        %v2293 = vpop.permute.xlu0 %2292
        %v2294 = vsel %vm747, %v2285, %v2287
        %v2295 = vsel %vm747, %v2287, %v2289
        %v2296 = vsel %vm747, %v2289, %v2291
        %v2297 = vsel %vm747, %v2291, %v2293
        %v2302 = vadd.f32 %v2270, %v2294
        %v2303 = vadd.f32 %v2271, %v2295
        %v2304 = vadd.f32 %v2272, %v2296
        %v2305 = vadd.f32 %v2273, %v2297
        %v2306 = vmul.f32 %v762, %v1912
        %v2307 = vmul.f32 %v762, %v1913
        %v2308 = vmul.f32 %v762, %v1914
        %v2309 = vmul.f32 %v762, %v1915
        %v2310 = vmul.f32 %v762, %v1916
        %2316 = vrot.lane.b32.xlu0 %v2306, 121
        %v2317 = vpop.permute.xlu0 %2316
        %2318 = vrot.lane.b32.xlu0 %v2307, 121
        %v2319 = vpop.permute.xlu0 %2318
        %2320 = vrot.lane.b32.xlu0 %v2308, 121
        %v2321 = vpop.permute.xlu0 %2320
        %2322 = vrot.lane.b32.xlu0 %v2309, 121
        %v2323 = vpop.permute.xlu0 %2322
        %2324 = vrot.lane.b32.xlu0 %v2310, 121
        %v2325 = vpop.permute.xlu0 %2324
        %v2326 = vsel %vm747, %v2317, %v2319
        %v2327 = vsel %vm747, %v2319, %v2321
        %v2328 = vsel %vm747, %v2321, %v2323
        %v2329 = vsel %vm747, %v2323, %v2325
        %v2334 = vadd.f32 %v2302, %v2326
        %v2335 = vadd.f32 %v2303, %v2327
        %v2336 = vadd.f32 %v2304, %v2328
        %v2337 = vadd.f32 %v2305, %v2329
        %2338 = vst [vmem:[%s206 + $0x60] sm:$0xff] %v2334
        %2339 = vst [vmem:[%s206 + $0x68] sm:$0xff] %v2335
        %2340 = vst [vmem:[%s206 + $0x70] sm:$0xff] %v2336
        %2341 = vst [vmem:[%s206 + $0x78] sm:$0xff] %v2337
        %s2342 = scalar_lea.vmem %s183, 32 [#allocation2]
        %v2343 = vld [vmem:[%s2342] ss:$2 sm:$0xf]
        %v2345 = vperm.slane %v2343, 0
        %v2346 = vperm.slane %v2343, 1
        %v2347 = vperm.slane %v2343, 2
        %v2348 = vperm.slane %v2343, 3
        %v2353 = vmul.f32 %v219, %v2345
        %v2354 = vmul.f32 %v219, %v2346
        %v2355 = vmul.f32 %v219, %v2347
        %v2356 = vmul.f32 %v219, %v2348
        %v2357 = vadd.f32 %v213, %v2353
        %v2358 = vadd.f32 %v213, %v2354
        %v2359 = vadd.f32 %v213, %v2355
        %v2360 = vadd.f32 %v213, %v2356
        %s2361 = scalar_lea.vmem %s183, 33 [#allocation2]
        %v2362 = vld [vmem:[%s2361] ss:$2 sm:$0xf]
        %v2364 = vperm.slane %v2362, 0
        %v2365 = vperm.slane %v2362, 1
        %v2366 = vperm.slane %v2362, 2
        %v2367 = vperm.slane %v2362, 3
        %v2372 = vmul.f32 %v242, %v2364
        %v2373 = vmul.f32 %v242, %v2365
        %v2374 = vmul.f32 %v242, %v2366
        %v2375 = vmul.f32 %v242, %v2367
        %v2376 = vadd.f32 %v2357, %v2372
        %v2377 = vadd.f32 %v2358, %v2373
        %v2378 = vadd.f32 %v2359, %v2374
        %v2379 = vadd.f32 %v2360, %v2375
        %v2380 = vld [vmem:[%s2342] ss:$2 sm:$0x1f]
        %v2382 = vperm.slane %v2380, 0
        %v2383 = vperm.slane %v2380, 1
        %v2384 = vperm.slane %v2380, 2
        %v2385 = vperm.slane %v2380, 3
        %v2386 = vperm.slane %v2380, 4
        %v2392 = vmul.f32 %v264, %v2382
        %v2393 = vmul.f32 %v264, %v2383
        %v2394 = vmul.f32 %v264, %v2384
        %v2395 = vmul.f32 %v264, %v2385
        %v2396 = vmul.f32 %v264, %v2386
        %2402 = vrot.lane.b32.xlu0 %v2392, 127
        %v2403 = vpop.permute.xlu0 %2402
        %2404 = vrot.lane.b32.xlu0 %v2393, 127
        %v2405 = vpop.permute.xlu0 %2404
        %2406 = vrot.lane.b32.xlu0 %v2394, 127
        %v2407 = vpop.permute.xlu0 %2406
        %2408 = vrot.lane.b32.xlu0 %v2395, 127
        %v2409 = vpop.permute.xlu0 %2408
        %2410 = vrot.lane.b32.xlu0 %v2396, 127
        %v2411 = vpop.permute.xlu0 %2410
        %v2412 = vsel %vm297, %v2403, %v2405
        %v2413 = vsel %vm297, %v2405, %v2407
        %v2414 = vsel %vm297, %v2407, %v2409
        %v2415 = vsel %vm297, %v2409, %v2411
        %v2420 = vadd.f32 %v2376, %v2412
        %v2421 = vadd.f32 %v2377, %v2413
        %v2422 = vadd.f32 %v2378, %v2414
        %v2423 = vadd.f32 %v2379, %v2415
        %v2424 = vld [vmem:[%s2361] ss:$2 sm:$0x1f]
        %v2426 = vperm.slane %v2424, 0
        %v2427 = vperm.slane %v2424, 1
        %v2428 = vperm.slane %v2424, 2
        %v2429 = vperm.slane %v2424, 3
        %v2430 = vperm.slane %v2424, 4
        %v2436 = vmul.f32 %v313, %v2426
        %v2437 = vmul.f32 %v313, %v2427
        %v2438 = vmul.f32 %v313, %v2428
        %v2439 = vmul.f32 %v313, %v2429
        %v2440 = vmul.f32 %v313, %v2430
        %2446 = vrot.lane.b32.xlu0 %v2436, 127
        %v2447 = vpop.permute.xlu0 %2446
        %2448 = vrot.lane.b32.xlu0 %v2437, 127
        %v2449 = vpop.permute.xlu0 %2448
        %2450 = vrot.lane.b32.xlu0 %v2438, 127
        %v2451 = vpop.permute.xlu0 %2450
        %2452 = vrot.lane.b32.xlu0 %v2439, 127
        %v2453 = vpop.permute.xlu0 %2452
        %2454 = vrot.lane.b32.xlu0 %v2440, 127
        %v2455 = vpop.permute.xlu0 %2454
        %v2456 = vsel %vm297, %v2447, %v2449
        %v2457 = vsel %vm297, %v2449, %v2451
        %v2458 = vsel %vm297, %v2451, %v2453
        %v2459 = vsel %vm297, %v2453, %v2455
        %v2464 = vadd.f32 %v2420, %v2456
        %v2465 = vadd.f32 %v2421, %v2457
        %v2466 = vadd.f32 %v2422, %v2458
        %v2467 = vadd.f32 %v2423, %v2459
        %v2468 = vmul.f32 %v360, %v2382
        %v2469 = vmul.f32 %v360, %v2383
        %v2470 = vmul.f32 %v360, %v2384
        %v2471 = vmul.f32 %v360, %v2385
        %v2472 = vmul.f32 %v360, %v2386
        %2478 = vrot.lane.b32.xlu0 %v2468, 126
        %v2479 = vpop.permute.xlu0 %2478
        %2480 = vrot.lane.b32.xlu0 %v2469, 126
        %v2481 = vpop.permute.xlu0 %2480
        %2482 = vrot.lane.b32.xlu0 %v2470, 126
        %v2483 = vpop.permute.xlu0 %2482
        %2484 = vrot.lane.b32.xlu0 %v2471, 126
        %v2485 = vpop.permute.xlu0 %2484
        %2486 = vrot.lane.b32.xlu0 %v2472, 126
        %v2487 = vpop.permute.xlu0 %2486
        %v2488 = vsel %vm382, %v2479, %v2481
        %v2489 = vsel %vm382, %v2481, %v2483
        %v2490 = vsel %vm382, %v2483, %v2485
        %v2491 = vsel %vm382, %v2485, %v2487
        %v2496 = vadd.f32 %v2464, %v2488
        %v2497 = vadd.f32 %v2465, %v2489
        %v2498 = vadd.f32 %v2466, %v2490
        %v2499 = vadd.f32 %v2467, %v2491
        %v2500 = vmul.f32 %v397, %v2426
        %v2501 = vmul.f32 %v397, %v2427
        %v2502 = vmul.f32 %v397, %v2428
        %v2503 = vmul.f32 %v397, %v2429
        %v2504 = vmul.f32 %v397, %v2430
        %2510 = vrot.lane.b32.xlu0 %v2500, 126
        %v2511 = vpop.permute.xlu0 %2510
        %2512 = vrot.lane.b32.xlu0 %v2501, 126
        %v2513 = vpop.permute.xlu0 %2512
        %2514 = vrot.lane.b32.xlu0 %v2502, 126
        %v2515 = vpop.permute.xlu0 %2514
        %2516 = vrot.lane.b32.xlu0 %v2503, 126
        %v2517 = vpop.permute.xlu0 %2516
        %2518 = vrot.lane.b32.xlu0 %v2504, 126
        %v2519 = vpop.permute.xlu0 %2518
        %v2520 = vsel %vm382, %v2511, %v2513
        %v2521 = vsel %vm382, %v2513, %v2515
        %v2522 = vsel %vm382, %v2515, %v2517
        %v2523 = vsel %vm382, %v2517, %v2519
        %v2528 = vadd.f32 %v2496, %v2520
        %v2529 = vadd.f32 %v2497, %v2521
        %v2530 = vadd.f32 %v2498, %v2522
        %v2531 = vadd.f32 %v2499, %v2523
        %v2532 = vmul.f32 %v433, %v2382
        %v2533 = vmul.f32 %v433, %v2383
        %v2534 = vmul.f32 %v433, %v2384
        %v2535 = vmul.f32 %v433, %v2385
        %v2536 = vmul.f32 %v433, %v2386
        %2542 = vrot.lane.b32.xlu0 %v2532, 125
        %v2543 = vpop.permute.xlu0 %2542
        %2544 = vrot.lane.b32.xlu0 %v2533, 125
        %v2545 = vpop.permute.xlu0 %2544
        %2546 = vrot.lane.b32.xlu0 %v2534, 125
        %v2547 = vpop.permute.xlu0 %2546
        %2548 = vrot.lane.b32.xlu0 %v2535, 125
        %v2549 = vpop.permute.xlu0 %2548
        %2550 = vrot.lane.b32.xlu0 %v2536, 125
        %v2551 = vpop.permute.xlu0 %2550
        %v2552 = vsel %vm455, %v2543, %v2545
        %v2553 = vsel %vm455, %v2545, %v2547
        %v2554 = vsel %vm455, %v2547, %v2549
        %v2555 = vsel %vm455, %v2549, %v2551
        %v2560 = vadd.f32 %v2528, %v2552
        %v2561 = vadd.f32 %v2529, %v2553
        %v2562 = vadd.f32 %v2530, %v2554
        %v2563 = vadd.f32 %v2531, %v2555
        %v2564 = vmul.f32 %v470, %v2426
        %v2565 = vmul.f32 %v470, %v2427
        %v2566 = vmul.f32 %v470, %v2428
        %v2567 = vmul.f32 %v470, %v2429
        %v2568 = vmul.f32 %v470, %v2430
        %2574 = vrot.lane.b32.xlu0 %v2564, 125
        %v2575 = vpop.permute.xlu0 %2574
        %2576 = vrot.lane.b32.xlu0 %v2565, 125
        %v2577 = vpop.permute.xlu0 %2576
        %2578 = vrot.lane.b32.xlu0 %v2566, 125
        %v2579 = vpop.permute.xlu0 %2578
        %2580 = vrot.lane.b32.xlu0 %v2567, 125
        %v2581 = vpop.permute.xlu0 %2580
        %2582 = vrot.lane.b32.xlu0 %v2568, 125
        %v2583 = vpop.permute.xlu0 %2582
        %v2584 = vsel %vm455, %v2575, %v2577
        %v2585 = vsel %vm455, %v2577, %v2579
        %v2586 = vsel %vm455, %v2579, %v2581
        %v2587 = vsel %vm455, %v2581, %v2583
        %v2592 = vadd.f32 %v2560, %v2584
        %v2593 = vadd.f32 %v2561, %v2585
        %v2594 = vadd.f32 %v2562, %v2586
        %v2595 = vadd.f32 %v2563, %v2587
        %v2596 = vmul.f32 %v506, %v2382
        %v2597 = vmul.f32 %v506, %v2383
        %v2598 = vmul.f32 %v506, %v2384
        %v2599 = vmul.f32 %v506, %v2385
        %v2600 = vmul.f32 %v506, %v2386
        %2606 = vrot.lane.b32.xlu0 %v2596, 124
        %v2607 = vpop.permute.xlu0 %2606
        %2608 = vrot.lane.b32.xlu0 %v2597, 124
        %v2609 = vpop.permute.xlu0 %2608
        %2610 = vrot.lane.b32.xlu0 %v2598, 124
        %v2611 = vpop.permute.xlu0 %2610
        %2612 = vrot.lane.b32.xlu0 %v2599, 124
        %v2613 = vpop.permute.xlu0 %2612
        %2614 = vrot.lane.b32.xlu0 %v2600, 124
        %v2615 = vpop.permute.xlu0 %2614
        %v2616 = vsel %vm528, %v2607, %v2609
        %v2617 = vsel %vm528, %v2609, %v2611
        %v2618 = vsel %vm528, %v2611, %v2613
        %v2619 = vsel %vm528, %v2613, %v2615
        %v2624 = vadd.f32 %v2592, %v2616
        %v2625 = vadd.f32 %v2593, %v2617
        %v2626 = vadd.f32 %v2594, %v2618
        %v2627 = vadd.f32 %v2595, %v2619
        %v2628 = vmul.f32 %v543, %v2426
        %v2629 = vmul.f32 %v543, %v2427
        %v2630 = vmul.f32 %v543, %v2428
        %v2631 = vmul.f32 %v543, %v2429
        %v2632 = vmul.f32 %v543, %v2430
        %2638 = vrot.lane.b32.xlu0 %v2628, 124
        %v2639 = vpop.permute.xlu0 %2638
        %2640 = vrot.lane.b32.xlu0 %v2629, 124
        %v2641 = vpop.permute.xlu0 %2640
        %2642 = vrot.lane.b32.xlu0 %v2630, 124
        %v2643 = vpop.permute.xlu0 %2642
        %2644 = vrot.lane.b32.xlu0 %v2631, 124
        %v2645 = vpop.permute.xlu0 %2644
        %2646 = vrot.lane.b32.xlu0 %v2632, 124
        %v2647 = vpop.permute.xlu0 %2646
        %v2648 = vsel %vm528, %v2639, %v2641
        %v2649 = vsel %vm528, %v2641, %v2643
        %v2650 = vsel %vm528, %v2643, %v2645
        %v2651 = vsel %vm528, %v2645, %v2647
        %v2656 = vadd.f32 %v2624, %v2648
        %v2657 = vadd.f32 %v2625, %v2649
        %v2658 = vadd.f32 %v2626, %v2650
        %v2659 = vadd.f32 %v2627, %v2651
        %v2660 = vmul.f32 %v579, %v2382
        %v2661 = vmul.f32 %v579, %v2383
        %v2662 = vmul.f32 %v579, %v2384
        %v2663 = vmul.f32 %v579, %v2385
        %v2664 = vmul.f32 %v579, %v2386
        %2670 = vrot.lane.b32.xlu0 %v2660, 123
        %v2671 = vpop.permute.xlu0 %2670
        %2672 = vrot.lane.b32.xlu0 %v2661, 123
        %v2673 = vpop.permute.xlu0 %2672
        %2674 = vrot.lane.b32.xlu0 %v2662, 123
        %v2675 = vpop.permute.xlu0 %2674
        %2676 = vrot.lane.b32.xlu0 %v2663, 123
        %v2677 = vpop.permute.xlu0 %2676
        %2678 = vrot.lane.b32.xlu0 %v2664, 123
        %v2679 = vpop.permute.xlu0 %2678
        %v2680 = vsel %vm601, %v2671, %v2673
        %v2681 = vsel %vm601, %v2673, %v2675
        %v2682 = vsel %vm601, %v2675, %v2677
        %v2683 = vsel %vm601, %v2677, %v2679
        %v2688 = vadd.f32 %v2656, %v2680
        %v2689 = vadd.f32 %v2657, %v2681
        %v2690 = vadd.f32 %v2658, %v2682
        %v2691 = vadd.f32 %v2659, %v2683
        %v2692 = vmul.f32 %v616, %v2426
        %v2693 = vmul.f32 %v616, %v2427
        %v2694 = vmul.f32 %v616, %v2428
        %v2695 = vmul.f32 %v616, %v2429
        %v2696 = vmul.f32 %v616, %v2430
        %2702 = vrot.lane.b32.xlu0 %v2692, 123
        %v2703 = vpop.permute.xlu0 %2702
        %2704 = vrot.lane.b32.xlu0 %v2693, 123
        %v2705 = vpop.permute.xlu0 %2704
        %2706 = vrot.lane.b32.xlu0 %v2694, 123
        %v2707 = vpop.permute.xlu0 %2706
        %2708 = vrot.lane.b32.xlu0 %v2695, 123
        %v2709 = vpop.permute.xlu0 %2708
        %2710 = vrot.lane.b32.xlu0 %v2696, 123
        %v2711 = vpop.permute.xlu0 %2710
        %v2712 = vsel %vm601, %v2703, %v2705
        %v2713 = vsel %vm601, %v2705, %v2707
        %v2714 = vsel %vm601, %v2707, %v2709
        %v2715 = vsel %vm601, %v2709, %v2711
        %v2720 = vadd.f32 %v2688, %v2712
        %v2721 = vadd.f32 %v2689, %v2713
        %v2722 = vadd.f32 %v2690, %v2714
        %v2723 = vadd.f32 %v2691, %v2715
        %v2724 = vmul.f32 %v652, %v2382
        %v2725 = vmul.f32 %v652, %v2383
        %v2726 = vmul.f32 %v652, %v2384
        %v2727 = vmul.f32 %v652, %v2385
        %v2728 = vmul.f32 %v652, %v2386
        %2734 = vrot.lane.b32.xlu0 %v2724, 122
        %v2735 = vpop.permute.xlu0 %2734
        %2736 = vrot.lane.b32.xlu0 %v2725, 122
        %v2737 = vpop.permute.xlu0 %2736
        %2738 = vrot.lane.b32.xlu0 %v2726, 122
        %v2739 = vpop.permute.xlu0 %2738
        %2740 = vrot.lane.b32.xlu0 %v2727, 122
        %v2741 = vpop.permute.xlu0 %2740
        %2742 = vrot.lane.b32.xlu0 %v2728, 122
        %v2743 = vpop.permute.xlu0 %2742
        %v2744 = vsel %vm674, %v2735, %v2737
        %v2745 = vsel %vm674, %v2737, %v2739
        %v2746 = vsel %vm674, %v2739, %v2741
        %v2747 = vsel %vm674, %v2741, %v2743
        %v2752 = vadd.f32 %v2720, %v2744
        %v2753 = vadd.f32 %v2721, %v2745
        %v2754 = vadd.f32 %v2722, %v2746
        %v2755 = vadd.f32 %v2723, %v2747
        %v2756 = vmul.f32 %v689, %v2426
        %v2757 = vmul.f32 %v689, %v2427
        %v2758 = vmul.f32 %v689, %v2428
        %v2759 = vmul.f32 %v689, %v2429
        %v2760 = vmul.f32 %v689, %v2430
        %2766 = vrot.lane.b32.xlu0 %v2756, 122
        %v2767 = vpop.permute.xlu0 %2766
        %2768 = vrot.lane.b32.xlu0 %v2757, 122
        %v2769 = vpop.permute.xlu0 %2768
        %2770 = vrot.lane.b32.xlu0 %v2758, 122
        %v2771 = vpop.permute.xlu0 %2770
        %2772 = vrot.lane.b32.xlu0 %v2759, 122
        %v2773 = vpop.permute.xlu0 %2772
        %2774 = vrot.lane.b32.xlu0 %v2760, 122
        %v2775 = vpop.permute.xlu0 %2774
        %v2776 = vsel %vm674, %v2767, %v2769
        %v2777 = vsel %vm674, %v2769, %v2771
        %v2778 = vsel %vm674, %v2771, %v2773
        %v2779 = vsel %vm674, %v2773, %v2775
        %v2784 = vadd.f32 %v2752, %v2776
        %v2785 = vadd.f32 %v2753, %v2777
        %v2786 = vadd.f32 %v2754, %v2778
        %v2787 = vadd.f32 %v2755, %v2779
        %v2788 = vmul.f32 %v725, %v2382
        %v2789 = vmul.f32 %v725, %v2383
        %v2790 = vmul.f32 %v725, %v2384
        %v2791 = vmul.f32 %v725, %v2385
        %v2792 = vmul.f32 %v725, %v2386
        %2798 = vrot.lane.b32.xlu0 %v2788, 121
        %v2799 = vpop.permute.xlu0 %2798
        %2800 = vrot.lane.b32.xlu0 %v2789, 121
        %v2801 = vpop.permute.xlu0 %2800
        %2802 = vrot.lane.b32.xlu0 %v2790, 121
        %v2803 = vpop.permute.xlu0 %2802
        %2804 = vrot.lane.b32.xlu0 %v2791, 121
        %v2805 = vpop.permute.xlu0 %2804
        %2806 = vrot.lane.b32.xlu0 %v2792, 121
        %v2807 = vpop.permute.xlu0 %2806
        %v2808 = vsel %vm747, %v2799, %v2801
        %v2809 = vsel %vm747, %v2801, %v2803
        %v2810 = vsel %vm747, %v2803, %v2805
        %v2811 = vsel %vm747, %v2805, %v2807
        %v2816 = vadd.f32 %v2784, %v2808
        %v2817 = vadd.f32 %v2785, %v2809
        %v2818 = vadd.f32 %v2786, %v2810
        %v2819 = vadd.f32 %v2787, %v2811
        %v2820 = vmul.f32 %v762, %v2426
        %v2821 = vmul.f32 %v762, %v2427
        %v2822 = vmul.f32 %v762, %v2428
        %v2823 = vmul.f32 %v762, %v2429
        %v2824 = vmul.f32 %v762, %v2430
        %2830 = vrot.lane.b32.xlu0 %v2820, 121
        %v2831 = vpop.permute.xlu0 %2830
        %2832 = vrot.lane.b32.xlu0 %v2821, 121
        %v2833 = vpop.permute.xlu0 %2832
        %2834 = vrot.lane.b32.xlu0 %v2822, 121
        %v2835 = vpop.permute.xlu0 %2834
        %2836 = vrot.lane.b32.xlu0 %v2823, 121
        %v2837 = vpop.permute.xlu0 %2836
        %2838 = vrot.lane.b32.xlu0 %v2824, 121
        %v2839 = vpop.permute.xlu0 %2838
        %v2840 = vsel %vm747, %v2831, %v2833
        %v2841 = vsel %vm747, %v2833, %v2835
        %v2842 = vsel %vm747, %v2835, %v2837
        %v2843 = vsel %vm747, %v2837, %v2839
        %v2848 = vadd.f32 %v2816, %v2840
        %v2849 = vadd.f32 %v2817, %v2841
        %v2850 = vadd.f32 %v2818, %v2842
        %v2851 = vadd.f32 %v2819, %v2843
        %2852 = vst [vmem:[%s206 + $0x80] sm:$0xff] %v2848
        %2853 = vst [vmem:[%s206 + $0x88] sm:$0xff] %v2849
        %2854 = vst [vmem:[%s206 + $0x90] sm:$0xff] %v2850
        %2855 = vst [vmem:[%s206 + $0x98] sm:$0xff] %v2851
        %s2856 = scalar_lea.vmem %s183, 40 [#allocation2]
        %v2857 = vld [vmem:[%s2856] ss:$2 sm:$0xf]
        %v2859 = vperm.slane %v2857, 0
        %v2860 = vperm.slane %v2857, 1
        %v2861 = vperm.slane %v2857, 2
        %v2862 = vperm.slane %v2857, 3
        %v2867 = vmul.f32 %v219, %v2859
        %v2868 = vmul.f32 %v219, %v2860
        %v2869 = vmul.f32 %v219, %v2861
        %v2870 = vmul.f32 %v219, %v2862
        %v2871 = vadd.f32 %v213, %v2867
        %v2872 = vadd.f32 %v213, %v2868
        %v2873 = vadd.f32 %v213, %v2869
        %v2874 = vadd.f32 %v213, %v2870
        %s2875 = scalar_lea.vmem %s183, 41 [#allocation2]
        %v2876 = vld [vmem:[%s2875] ss:$2 sm:$0xf]
        %v2878 = vperm.slane %v2876, 0
        %v2879 = vperm.slane %v2876, 1
        %v2880 = vperm.slane %v2876, 2
        %v2881 = vperm.slane %v2876, 3
        %v2886 = vmul.f32 %v242, %v2878
        %v2887 = vmul.f32 %v242, %v2879
        %v2888 = vmul.f32 %v242, %v2880
        %v2889 = vmul.f32 %v242, %v2881
        %v2890 = vadd.f32 %v2871, %v2886
        %v2891 = vadd.f32 %v2872, %v2887
        %v2892 = vadd.f32 %v2873, %v2888
        %v2893 = vadd.f32 %v2874, %v2889
        %v2894 = vld [vmem:[%s2856] ss:$2 sm:$0x1f]
        %v2896 = vperm.slane %v2894, 0
        %v2897 = vperm.slane %v2894, 1
        %v2898 = vperm.slane %v2894, 2
        %v2899 = vperm.slane %v2894, 3
        %v2900 = vperm.slane %v2894, 4
        %v2906 = vmul.f32 %v264, %v2896
        %v2907 = vmul.f32 %v264, %v2897
        %v2908 = vmul.f32 %v264, %v2898
        %v2909 = vmul.f32 %v264, %v2899
        %v2910 = vmul.f32 %v264, %v2900
        %2916 = vrot.lane.b32.xlu0 %v2906, 127
        %v2917 = vpop.permute.xlu0 %2916
        %2918 = vrot.lane.b32.xlu0 %v2907, 127
        %v2919 = vpop.permute.xlu0 %2918
        %2920 = vrot.lane.b32.xlu0 %v2908, 127
        %v2921 = vpop.permute.xlu0 %2920
        %2922 = vrot.lane.b32.xlu0 %v2909, 127
        %v2923 = vpop.permute.xlu0 %2922
        %2924 = vrot.lane.b32.xlu0 %v2910, 127
        %v2925 = vpop.permute.xlu0 %2924
        %v2926 = vsel %vm297, %v2917, %v2919
        %v2927 = vsel %vm297, %v2919, %v2921
        %v2928 = vsel %vm297, %v2921, %v2923
        %v2929 = vsel %vm297, %v2923, %v2925
        %v2934 = vadd.f32 %v2890, %v2926
        %v2935 = vadd.f32 %v2891, %v2927
        %v2936 = vadd.f32 %v2892, %v2928
        %v2937 = vadd.f32 %v2893, %v2929
        %v2938 = vld [vmem:[%s2875] ss:$2 sm:$0x1f]
        %v2940 = vperm.slane %v2938, 0
        %v2941 = vperm.slane %v2938, 1
        %v2942 = vperm.slane %v2938, 2
        %v2943 = vperm.slane %v2938, 3
        %v2944 = vperm.slane %v2938, 4
        %v2950 = vmul.f32 %v313, %v2940
        %v2951 = vmul.f32 %v313, %v2941
        %v2952 = vmul.f32 %v313, %v2942
        %v2953 = vmul.f32 %v313, %v2943
        %v2954 = vmul.f32 %v313, %v2944
        %2960 = vrot.lane.b32.xlu0 %v2950, 127
        %v2961 = vpop.permute.xlu0 %2960
        %2962 = vrot.lane.b32.xlu0 %v2951, 127
        %v2963 = vpop.permute.xlu0 %2962
        %2964 = vrot.lane.b32.xlu0 %v2952, 127
        %v2965 = vpop.permute.xlu0 %2964
        %2966 = vrot.lane.b32.xlu0 %v2953, 127
        %v2967 = vpop.permute.xlu0 %2966
        %2968 = vrot.lane.b32.xlu0 %v2954, 127
        %v2969 = vpop.permute.xlu0 %2968
        %v2970 = vsel %vm297, %v2961, %v2963
        %v2971 = vsel %vm297, %v2963, %v2965
        %v2972 = vsel %vm297, %v2965, %v2967
        %v2973 = vsel %vm297, %v2967, %v2969
        %v2978 = vadd.f32 %v2934, %v2970
        %v2979 = vadd.f32 %v2935, %v2971
        %v2980 = vadd.f32 %v2936, %v2972
        %v2981 = vadd.f32 %v2937, %v2973
        %v2982 = vmul.f32 %v360, %v2896
        %v2983 = vmul.f32 %v360, %v2897
        %v2984 = vmul.f32 %v360, %v2898
        %v2985 = vmul.f32 %v360, %v2899
        %v2986 = vmul.f32 %v360, %v2900
        %2992 = vrot.lane.b32.xlu0 %v2982, 126
        %v2993 = vpop.permute.xlu0 %2992
        %2994 = vrot.lane.b32.xlu0 %v2983, 126
        %v2995 = vpop.permute.xlu0 %2994
        %2996 = vrot.lane.b32.xlu0 %v2984, 126
        %v2997 = vpop.permute.xlu0 %2996
        %2998 = vrot.lane.b32.xlu0 %v2985, 126
        %v2999 = vpop.permute.xlu0 %2998
        %3000 = vrot.lane.b32.xlu0 %v2986, 126
        %v3001 = vpop.permute.xlu0 %3000
        %v3002 = vsel %vm382, %v2993, %v2995
        %v3003 = vsel %vm382, %v2995, %v2997
        %v3004 = vsel %vm382, %v2997, %v2999
        %v3005 = vsel %vm382, %v2999, %v3001
        %v3010 = vadd.f32 %v2978, %v3002
        %v3011 = vadd.f32 %v2979, %v3003
        %v3012 = vadd.f32 %v2980, %v3004
        %v3013 = vadd.f32 %v2981, %v3005
        %v3014 = vmul.f32 %v397, %v2940
        %v3015 = vmul.f32 %v397, %v2941
        %v3016 = vmul.f32 %v397, %v2942
        %v3017 = vmul.f32 %v397, %v2943
        %v3018 = vmul.f32 %v397, %v2944
        %3024 = vrot.lane.b32.xlu0 %v3014, 126
        %v3025 = vpop.permute.xlu0 %3024
        %3026 = vrot.lane.b32.xlu0 %v3015, 126
        %v3027 = vpop.permute.xlu0 %3026
        %3028 = vrot.lane.b32.xlu0 %v3016, 126
        %v3029 = vpop.permute.xlu0 %3028
        %3030 = vrot.lane.b32.xlu0 %v3017, 126
        %v3031 = vpop.permute.xlu0 %3030
        %3032 = vrot.lane.b32.xlu0 %v3018, 126
        %v3033 = vpop.permute.xlu0 %3032
        %v3034 = vsel %vm382, %v3025, %v3027
        %v3035 = vsel %vm382, %v3027, %v3029
        %v3036 = vsel %vm382, %v3029, %v3031
        %v3037 = vsel %vm382, %v3031, %v3033
        %v3042 = vadd.f32 %v3010, %v3034
        %v3043 = vadd.f32 %v3011, %v3035
        %v3044 = vadd.f32 %v3012, %v3036
        %v3045 = vadd.f32 %v3013, %v3037
        %v3046 = vmul.f32 %v433, %v2896
        %v3047 = vmul.f32 %v433, %v2897
        %v3048 = vmul.f32 %v433, %v2898
        %v3049 = vmul.f32 %v433, %v2899
        %v3050 = vmul.f32 %v433, %v2900
        %3056 = vrot.lane.b32.xlu0 %v3046, 125
        %v3057 = vpop.permute.xlu0 %3056
        %3058 = vrot.lane.b32.xlu0 %v3047, 125
        %v3059 = vpop.permute.xlu0 %3058
        %3060 = vrot.lane.b32.xlu0 %v3048, 125
        %v3061 = vpop.permute.xlu0 %3060
        %3062 = vrot.lane.b32.xlu0 %v3049, 125
        %v3063 = vpop.permute.xlu0 %3062
        %3064 = vrot.lane.b32.xlu0 %v3050, 125
        %v3065 = vpop.permute.xlu0 %3064
        %v3066 = vsel %vm455, %v3057, %v3059
        %v3067 = vsel %vm455, %v3059, %v3061
        %v3068 = vsel %vm455, %v3061, %v3063
        %v3069 = vsel %vm455, %v3063, %v3065
        %v3074 = vadd.f32 %v3042, %v3066
        %v3075 = vadd.f32 %v3043, %v3067
        %v3076 = vadd.f32 %v3044, %v3068
        %v3077 = vadd.f32 %v3045, %v3069
        %v3078 = vmul.f32 %v470, %v2940
        %v3079 = vmul.f32 %v470, %v2941
        %v3080 = vmul.f32 %v470, %v2942
        %v3081 = vmul.f32 %v470, %v2943
        %v3082 = vmul.f32 %v470, %v2944
        %3088 = vrot.lane.b32.xlu0 %v3078, 125
        %v3089 = vpop.permute.xlu0 %3088
        %3090 = vrot.lane.b32.xlu0 %v3079, 125
        %v3091 = vpop.permute.xlu0 %3090
        %3092 = vrot.lane.b32.xlu0 %v3080, 125
        %v3093 = vpop.permute.xlu0 %3092
        %3094 = vrot.lane.b32.xlu0 %v3081, 125
        %v3095 = vpop.permute.xlu0 %3094
        %3096 = vrot.lane.b32.xlu0 %v3082, 125
        %v3097 = vpop.permute.xlu0 %3096
        %v3098 = vsel %vm455, %v3089, %v3091
        %v3099 = vsel %vm455, %v3091, %v3093
        %v3100 = vsel %vm455, %v3093, %v3095
        %v3101 = vsel %vm455, %v3095, %v3097
        %v3106 = vadd.f32 %v3074, %v3098
        %v3107 = vadd.f32 %v3075, %v3099
        %v3108 = vadd.f32 %v3076, %v3100
        %v3109 = vadd.f32 %v3077, %v3101
        %v3110 = vmul.f32 %v506, %v2896
        %v3111 = vmul.f32 %v506, %v2897
        %v3112 = vmul.f32 %v506, %v2898
        %v3113 = vmul.f32 %v506, %v2899
        %v3114 = vmul.f32 %v506, %v2900
        %3120 = vrot.lane.b32.xlu0 %v3110, 124
        %v3121 = vpop.permute.xlu0 %3120
        %3122 = vrot.lane.b32.xlu0 %v3111, 124
        %v3123 = vpop.permute.xlu0 %3122
        %3124 = vrot.lane.b32.xlu0 %v3112, 124
        %v3125 = vpop.permute.xlu0 %3124
        %3126 = vrot.lane.b32.xlu0 %v3113, 124
        %v3127 = vpop.permute.xlu0 %3126
        %3128 = vrot.lane.b32.xlu0 %v3114, 124
        %v3129 = vpop.permute.xlu0 %3128
        %v3130 = vsel %vm528, %v3121, %v3123
        %v3131 = vsel %vm528, %v3123, %v3125
        %v3132 = vsel %vm528, %v3125, %v3127
        %v3133 = vsel %vm528, %v3127, %v3129
        %v3138 = vadd.f32 %v3106, %v3130
        %v3139 = vadd.f32 %v3107, %v3131
        %v3140 = vadd.f32 %v3108, %v3132
        %v3141 = vadd.f32 %v3109, %v3133
        %v3142 = vmul.f32 %v543, %v2940
        %v3143 = vmul.f32 %v543, %v2941
        %v3144 = vmul.f32 %v543, %v2942
        %v3145 = vmul.f32 %v543, %v2943
        %v3146 = vmul.f32 %v543, %v2944
        %3152 = vrot.lane.b32.xlu0 %v3142, 124
        %v3153 = vpop.permute.xlu0 %3152
        %3154 = vrot.lane.b32.xlu0 %v3143, 124
        %v3155 = vpop.permute.xlu0 %3154
        %3156 = vrot.lane.b32.xlu0 %v3144, 124
        %v3157 = vpop.permute.xlu0 %3156
        %3158 = vrot.lane.b32.xlu0 %v3145, 124
        %v3159 = vpop.permute.xlu0 %3158
        %3160 = vrot.lane.b32.xlu0 %v3146, 124
        %v3161 = vpop.permute.xlu0 %3160
        %v3162 = vsel %vm528, %v3153, %v3155
        %v3163 = vsel %vm528, %v3155, %v3157
        %v3164 = vsel %vm528, %v3157, %v3159
        %v3165 = vsel %vm528, %v3159, %v3161
        %v3170 = vadd.f32 %v3138, %v3162
        %v3171 = vadd.f32 %v3139, %v3163
        %v3172 = vadd.f32 %v3140, %v3164
        %v3173 = vadd.f32 %v3141, %v3165
        %v3174 = vmul.f32 %v579, %v2896
        %v3175 = vmul.f32 %v579, %v2897
        %v3176 = vmul.f32 %v579, %v2898
        %v3177 = vmul.f32 %v579, %v2899
        %v3178 = vmul.f32 %v579, %v2900
        %3184 = vrot.lane.b32.xlu0 %v3174, 123
        %v3185 = vpop.permute.xlu0 %3184
        %3186 = vrot.lane.b32.xlu0 %v3175, 123
        %v3187 = vpop.permute.xlu0 %3186
        %3188 = vrot.lane.b32.xlu0 %v3176, 123
        %v3189 = vpop.permute.xlu0 %3188
        %3190 = vrot.lane.b32.xlu0 %v3177, 123
        %v3191 = vpop.permute.xlu0 %3190
        %3192 = vrot.lane.b32.xlu0 %v3178, 123
        %v3193 = vpop.permute.xlu0 %3192
        %v3194 = vsel %vm601, %v3185, %v3187
        %v3195 = vsel %vm601, %v3187, %v3189
        %v3196 = vsel %vm601, %v3189, %v3191
        %v3197 = vsel %vm601, %v3191, %v3193
        %v3202 = vadd.f32 %v3170, %v3194
        %v3203 = vadd.f32 %v3171, %v3195
        %v3204 = vadd.f32 %v3172, %v3196
        %v3205 = vadd.f32 %v3173, %v3197
        %v3206 = vmul.f32 %v616, %v2940
        %v3207 = vmul.f32 %v616, %v2941
        %v3208 = vmul.f32 %v616, %v2942
        %v3209 = vmul.f32 %v616, %v2943
        %v3210 = vmul.f32 %v616, %v2944
        %3216 = vrot.lane.b32.xlu0 %v3206, 123
        %v3217 = vpop.permute.xlu0 %3216
        %3218 = vrot.lane.b32.xlu0 %v3207, 123
        %v3219 = vpop.permute.xlu0 %3218
        %3220 = vrot.lane.b32.xlu0 %v3208, 123
        %v3221 = vpop.permute.xlu0 %3220
        %3222 = vrot.lane.b32.xlu0 %v3209, 123
        %v3223 = vpop.permute.xlu0 %3222
        %3224 = vrot.lane.b32.xlu0 %v3210, 123
        %v3225 = vpop.permute.xlu0 %3224
        %v3226 = vsel %vm601, %v3217, %v3219
        %v3227 = vsel %vm601, %v3219, %v3221
        %v3228 = vsel %vm601, %v3221, %v3223
        %v3229 = vsel %vm601, %v3223, %v3225
        %v3234 = vadd.f32 %v3202, %v3226
        %v3235 = vadd.f32 %v3203, %v3227
        %v3236 = vadd.f32 %v3204, %v3228
        %v3237 = vadd.f32 %v3205, %v3229
        %v3238 = vmul.f32 %v652, %v2896
        %v3239 = vmul.f32 %v652, %v2897
        %v3240 = vmul.f32 %v652, %v2898
        %v3241 = vmul.f32 %v652, %v2899
        %v3242 = vmul.f32 %v652, %v2900
        %3248 = vrot.lane.b32.xlu0 %v3238, 122
        %v3249 = vpop.permute.xlu0 %3248
        %3250 = vrot.lane.b32.xlu0 %v3239, 122
        %v3251 = vpop.permute.xlu0 %3250
        %3252 = vrot.lane.b32.xlu0 %v3240, 122
        %v3253 = vpop.permute.xlu0 %3252
        %3254 = vrot.lane.b32.xlu0 %v3241, 122
        %v3255 = vpop.permute.xlu0 %3254
        %3256 = vrot.lane.b32.xlu0 %v3242, 122
        %v3257 = vpop.permute.xlu0 %3256
        %v3258 = vsel %vm674, %v3249, %v3251
        %v3259 = vsel %vm674, %v3251, %v3253
        %v3260 = vsel %vm674, %v3253, %v3255
        %v3261 = vsel %vm674, %v3255, %v3257
        %v3266 = vadd.f32 %v3234, %v3258
        %v3267 = vadd.f32 %v3235, %v3259
        %v3268 = vadd.f32 %v3236, %v3260
        %v3269 = vadd.f32 %v3237, %v3261
        %v3270 = vmul.f32 %v689, %v2940
        %v3271 = vmul.f32 %v689, %v2941
        %v3272 = vmul.f32 %v689, %v2942
        %v3273 = vmul.f32 %v689, %v2943
        %v3274 = vmul.f32 %v689, %v2944
        %3280 = vrot.lane.b32.xlu0 %v3270, 122
        %v3281 = vpop.permute.xlu0 %3280
        %3282 = vrot.lane.b32.xlu0 %v3271, 122
        %v3283 = vpop.permute.xlu0 %3282
        %3284 = vrot.lane.b32.xlu0 %v3272, 122
        %v3285 = vpop.permute.xlu0 %3284
        %3286 = vrot.lane.b32.xlu0 %v3273, 122
        %v3287 = vpop.permute.xlu0 %3286
        %3288 = vrot.lane.b32.xlu0 %v3274, 122
        %v3289 = vpop.permute.xlu0 %3288
        %v3290 = vsel %vm674, %v3281, %v3283
        %v3291 = vsel %vm674, %v3283, %v3285
        %v3292 = vsel %vm674, %v3285, %v3287
        %v3293 = vsel %vm674, %v3287, %v3289
        %v3298 = vadd.f32 %v3266, %v3290
        %v3299 = vadd.f32 %v3267, %v3291
        %v3300 = vadd.f32 %v3268, %v3292
        %v3301 = vadd.f32 %v3269, %v3293
        %v3302 = vmul.f32 %v725, %v2896
        %v3303 = vmul.f32 %v725, %v2897
        %v3304 = vmul.f32 %v725, %v2898
        %v3305 = vmul.f32 %v725, %v2899
        %v3306 = vmul.f32 %v725, %v2900
        %3312 = vrot.lane.b32.xlu0 %v3302, 121
        %v3313 = vpop.permute.xlu0 %3312
        %3314 = vrot.lane.b32.xlu0 %v3303, 121
        %v3315 = vpop.permute.xlu0 %3314
        %3316 = vrot.lane.b32.xlu0 %v3304, 121
        %v3317 = vpop.permute.xlu0 %3316
        %3318 = vrot.lane.b32.xlu0 %v3305, 121
        %v3319 = vpop.permute.xlu0 %3318
        %3320 = vrot.lane.b32.xlu0 %v3306, 121
        %v3321 = vpop.permute.xlu0 %3320
        %v3322 = vsel %vm747, %v3313, %v3315
        %v3323 = vsel %vm747, %v3315, %v3317
        %v3324 = vsel %vm747, %v3317, %v3319
        %v3325 = vsel %vm747, %v3319, %v3321
        %v3330 = vadd.f32 %v3298, %v3322
        %v3331 = vadd.f32 %v3299, %v3323
        %v3332 = vadd.f32 %v3300, %v3324
        %v3333 = vadd.f32 %v3301, %v3325
        %v3334 = vmul.f32 %v762, %v2940
        %v3335 = vmul.f32 %v762, %v2941
        %v3336 = vmul.f32 %v762, %v2942
        %v3337 = vmul.f32 %v762, %v2943
        %v3338 = vmul.f32 %v762, %v2944
        %3344 = vrot.lane.b32.xlu0 %v3334, 121
        %v3345 = vpop.permute.xlu0 %3344
        %3346 = vrot.lane.b32.xlu0 %v3335, 121
        %v3347 = vpop.permute.xlu0 %3346
        %3348 = vrot.lane.b32.xlu0 %v3336, 121
        %v3349 = vpop.permute.xlu0 %3348
        %3350 = vrot.lane.b32.xlu0 %v3337, 121
        %v3351 = vpop.permute.xlu0 %3350
        %3352 = vrot.lane.b32.xlu0 %v3338, 121
        %v3353 = vpop.permute.xlu0 %3352
        %v3354 = vsel %vm747, %v3345, %v3347
        %v3355 = vsel %vm747, %v3347, %v3349
        %v3356 = vsel %vm747, %v3349, %v3351
        %v3357 = vsel %vm747, %v3351, %v3353
        %v3362 = vadd.f32 %v3330, %v3354
        %v3363 = vadd.f32 %v3331, %v3355
        %v3364 = vadd.f32 %v3332, %v3356
        %v3365 = vadd.f32 %v3333, %v3357
        %3366 = vst [vmem:[%s206 + $0xa0] sm:$0xff] %v3362
        %3367 = vst [vmem:[%s206 + $0xa8] sm:$0xff] %v3363
        %3368 = vst [vmem:[%s206 + $0xb0] sm:$0xff] %v3364
        %3369 = vst [vmem:[%s206 + $0xb8] sm:$0xff] %v3365
        %s3370 = scalar_lea.vmem %s183, 48 [#allocation2]
        %v3371 = vld [vmem:[%s3370] ss:$2 sm:$0xf]
        %v3373 = vperm.slane %v3371, 0
        %v3374 = vperm.slane %v3371, 1
        %v3375 = vperm.slane %v3371, 2
        %v3376 = vperm.slane %v3371, 3
        %v3381 = vmul.f32 %v219, %v3373
        %v3382 = vmul.f32 %v219, %v3374
        %v3383 = vmul.f32 %v219, %v3375
        %v3384 = vmul.f32 %v219, %v3376
        %v3385 = vadd.f32 %v213, %v3381
        %v3386 = vadd.f32 %v213, %v3382
        %v3387 = vadd.f32 %v213, %v3383
        %v3388 = vadd.f32 %v213, %v3384
        %s3389 = scalar_lea.vmem %s183, 49 [#allocation2]
        %v3390 = vld [vmem:[%s3389] ss:$2 sm:$0xf]
        %v3392 = vperm.slane %v3390, 0
        %v3393 = vperm.slane %v3390, 1
        %v3394 = vperm.slane %v3390, 2
        %v3395 = vperm.slane %v3390, 3
        %v3400 = vmul.f32 %v242, %v3392
        %v3401 = vmul.f32 %v242, %v3393
        %v3402 = vmul.f32 %v242, %v3394
        %v3403 = vmul.f32 %v242, %v3395
        %v3404 = vadd.f32 %v3385, %v3400
        %v3405 = vadd.f32 %v3386, %v3401
        %v3406 = vadd.f32 %v3387, %v3402
        %v3407 = vadd.f32 %v3388, %v3403
        %v3408 = vld [vmem:[%s3370] ss:$2 sm:$0x1f]
        %v3410 = vperm.slane %v3408, 0
        %v3411 = vperm.slane %v3408, 1
        %v3412 = vperm.slane %v3408, 2
        %v3413 = vperm.slane %v3408, 3
        %v3414 = vperm.slane %v3408, 4
        %v3420 = vmul.f32 %v264, %v3410
        %v3421 = vmul.f32 %v264, %v3411
        %v3422 = vmul.f32 %v264, %v3412
        %v3423 = vmul.f32 %v264, %v3413
        %v3424 = vmul.f32 %v264, %v3414
        %3430 = vrot.lane.b32.xlu0 %v3420, 127
        %v3431 = vpop.permute.xlu0 %3430
        %3432 = vrot.lane.b32.xlu0 %v3421, 127
        %v3433 = vpop.permute.xlu0 %3432
        %3434 = vrot.lane.b32.xlu0 %v3422, 127
        %v3435 = vpop.permute.xlu0 %3434
        %3436 = vrot.lane.b32.xlu0 %v3423, 127
        %v3437 = vpop.permute.xlu0 %3436
        %3438 = vrot.lane.b32.xlu0 %v3424, 127
        %v3439 = vpop.permute.xlu0 %3438
        %v3440 = vsel %vm297, %v3431, %v3433
        %v3441 = vsel %vm297, %v3433, %v3435
        %v3442 = vsel %vm297, %v3435, %v3437
        %v3443 = vsel %vm297, %v3437, %v3439
        %v3448 = vadd.f32 %v3404, %v3440
        %v3449 = vadd.f32 %v3405, %v3441
        %v3450 = vadd.f32 %v3406, %v3442
        %v3451 = vadd.f32 %v3407, %v3443
        %v3452 = vld [vmem:[%s3389] ss:$2 sm:$0x1f]
        %v3454 = vperm.slane %v3452, 0
        %v3455 = vperm.slane %v3452, 1
        %v3456 = vperm.slane %v3452, 2
        %v3457 = vperm.slane %v3452, 3
        %v3458 = vperm.slane %v3452, 4
        %v3464 = vmul.f32 %v313, %v3454
        %v3465 = vmul.f32 %v313, %v3455
        %v3466 = vmul.f32 %v313, %v3456
        %v3467 = vmul.f32 %v313, %v3457
        %v3468 = vmul.f32 %v313, %v3458
        %3474 = vrot.lane.b32.xlu0 %v3464, 127
        %v3475 = vpop.permute.xlu0 %3474
        %3476 = vrot.lane.b32.xlu0 %v3465, 127
        %v3477 = vpop.permute.xlu0 %3476
        %3478 = vrot.lane.b32.xlu0 %v3466, 127
        %v3479 = vpop.permute.xlu0 %3478
        %3480 = vrot.lane.b32.xlu0 %v3467, 127
        %v3481 = vpop.permute.xlu0 %3480
        %3482 = vrot.lane.b32.xlu0 %v3468, 127
        %v3483 = vpop.permute.xlu0 %3482
        %v3484 = vsel %vm297, %v3475, %v3477
        %v3485 = vsel %vm297, %v3477, %v3479
        %v3486 = vsel %vm297, %v3479, %v3481
        %v3487 = vsel %vm297, %v3481, %v3483
        %v3492 = vadd.f32 %v3448, %v3484
        %v3493 = vadd.f32 %v3449, %v3485
        %v3494 = vadd.f32 %v3450, %v3486
        %v3495 = vadd.f32 %v3451, %v3487
        %v3496 = vmul.f32 %v360, %v3410
        %v3497 = vmul.f32 %v360, %v3411
        %v3498 = vmul.f32 %v360, %v3412
        %v3499 = vmul.f32 %v360, %v3413
        %v3500 = vmul.f32 %v360, %v3414
        %3506 = vrot.lane.b32.xlu0 %v3496, 126
        %v3507 = vpop.permute.xlu0 %3506
        %3508 = vrot.lane.b32.xlu0 %v3497, 126
        %v3509 = vpop.permute.xlu0 %3508
        %3510 = vrot.lane.b32.xlu0 %v3498, 126
        %v3511 = vpop.permute.xlu0 %3510
        %3512 = vrot.lane.b32.xlu0 %v3499, 126
        %v3513 = vpop.permute.xlu0 %3512
        %3514 = vrot.lane.b32.xlu0 %v3500, 126
        %v3515 = vpop.permute.xlu0 %3514
        %v3516 = vsel %vm382, %v3507, %v3509
        %v3517 = vsel %vm382, %v3509, %v3511
        %v3518 = vsel %vm382, %v3511, %v3513
        %v3519 = vsel %vm382, %v3513, %v3515
        %v3524 = vadd.f32 %v3492, %v3516
        %v3525 = vadd.f32 %v3493, %v3517
        %v3526 = vadd.f32 %v3494, %v3518
        %v3527 = vadd.f32 %v3495, %v3519
        %v3528 = vmul.f32 %v397, %v3454
        %v3529 = vmul.f32 %v397, %v3455
        %v3530 = vmul.f32 %v397, %v3456
        %v3531 = vmul.f32 %v397, %v3457
        %v3532 = vmul.f32 %v397, %v3458
        %3538 = vrot.lane.b32.xlu0 %v3528, 126
        %v3539 = vpop.permute.xlu0 %3538
        %3540 = vrot.lane.b32.xlu0 %v3529, 126
        %v3541 = vpop.permute.xlu0 %3540
        %3542 = vrot.lane.b32.xlu0 %v3530, 126
        %v3543 = vpop.permute.xlu0 %3542
        %3544 = vrot.lane.b32.xlu0 %v3531, 126
        %v3545 = vpop.permute.xlu0 %3544
        %3546 = vrot.lane.b32.xlu0 %v3532, 126
        %v3547 = vpop.permute.xlu0 %3546
        %v3548 = vsel %vm382, %v3539, %v3541
        %v3549 = vsel %vm382, %v3541, %v3543
        %v3550 = vsel %vm382, %v3543, %v3545
        %v3551 = vsel %vm382, %v3545, %v3547
        %v3556 = vadd.f32 %v3524, %v3548
        %v3557 = vadd.f32 %v3525, %v3549
        %v3558 = vadd.f32 %v3526, %v3550
        %v3559 = vadd.f32 %v3527, %v3551
        %v3560 = vmul.f32 %v433, %v3410
        %v3561 = vmul.f32 %v433, %v3411
        %v3562 = vmul.f32 %v433, %v3412
        %v3563 = vmul.f32 %v433, %v3413
        %v3564 = vmul.f32 %v433, %v3414
        %3570 = vrot.lane.b32.xlu0 %v3560, 125
        %v3571 = vpop.permute.xlu0 %3570
        %3572 = vrot.lane.b32.xlu0 %v3561, 125
        %v3573 = vpop.permute.xlu0 %3572
        %3574 = vrot.lane.b32.xlu0 %v3562, 125
        %v3575 = vpop.permute.xlu0 %3574
        %3576 = vrot.lane.b32.xlu0 %v3563, 125
        %v3577 = vpop.permute.xlu0 %3576
        %3578 = vrot.lane.b32.xlu0 %v3564, 125
        %v3579 = vpop.permute.xlu0 %3578
        %v3580 = vsel %vm455, %v3571, %v3573
        %v3581 = vsel %vm455, %v3573, %v3575
        %v3582 = vsel %vm455, %v3575, %v3577
        %v3583 = vsel %vm455, %v3577, %v3579
        %v3588 = vadd.f32 %v3556, %v3580
        %v3589 = vadd.f32 %v3557, %v3581
        %v3590 = vadd.f32 %v3558, %v3582
        %v3591 = vadd.f32 %v3559, %v3583
        %v3592 = vmul.f32 %v470, %v3454
        %v3593 = vmul.f32 %v470, %v3455
        %v3594 = vmul.f32 %v470, %v3456
        %v3595 = vmul.f32 %v470, %v3457
        %v3596 = vmul.f32 %v470, %v3458
        %3602 = vrot.lane.b32.xlu0 %v3592, 125
        %v3603 = vpop.permute.xlu0 %3602
        %3604 = vrot.lane.b32.xlu0 %v3593, 125
        %v3605 = vpop.permute.xlu0 %3604
        %3606 = vrot.lane.b32.xlu0 %v3594, 125
        %v3607 = vpop.permute.xlu0 %3606
        %3608 = vrot.lane.b32.xlu0 %v3595, 125
        %v3609 = vpop.permute.xlu0 %3608
        %3610 = vrot.lane.b32.xlu0 %v3596, 125
        %v3611 = vpop.permute.xlu0 %3610
        %v3612 = vsel %vm455, %v3603, %v3605
        %v3613 = vsel %vm455, %v3605, %v3607
        %v3614 = vsel %vm455, %v3607, %v3609
        %v3615 = vsel %vm455, %v3609, %v3611
        %v3620 = vadd.f32 %v3588, %v3612
        %v3621 = vadd.f32 %v3589, %v3613
        %v3622 = vadd.f32 %v3590, %v3614
        %v3623 = vadd.f32 %v3591, %v3615
        %v3624 = vmul.f32 %v506, %v3410
        %v3625 = vmul.f32 %v506, %v3411
        %v3626 = vmul.f32 %v506, %v3412
        %v3627 = vmul.f32 %v506, %v3413
        %v3628 = vmul.f32 %v506, %v3414
        %3634 = vrot.lane.b32.xlu0 %v3624, 124
        %v3635 = vpop.permute.xlu0 %3634
        %3636 = vrot.lane.b32.xlu0 %v3625, 124
        %v3637 = vpop.permute.xlu0 %3636
        %3638 = vrot.lane.b32.xlu0 %v3626, 124
        %v3639 = vpop.permute.xlu0 %3638
        %3640 = vrot.lane.b32.xlu0 %v3627, 124
        %v3641 = vpop.permute.xlu0 %3640
        %3642 = vrot.lane.b32.xlu0 %v3628, 124
        %v3643 = vpop.permute.xlu0 %3642
        %v3644 = vsel %vm528, %v3635, %v3637
        %v3645 = vsel %vm528, %v3637, %v3639
        %v3646 = vsel %vm528, %v3639, %v3641
        %v3647 = vsel %vm528, %v3641, %v3643
        %v3652 = vadd.f32 %v3620, %v3644
        %v3653 = vadd.f32 %v3621, %v3645
        %v3654 = vadd.f32 %v3622, %v3646
        %v3655 = vadd.f32 %v3623, %v3647
        %v3656 = vmul.f32 %v543, %v3454
        %v3657 = vmul.f32 %v543, %v3455
        %v3658 = vmul.f32 %v543, %v3456
        %v3659 = vmul.f32 %v543, %v3457
        %v3660 = vmul.f32 %v543, %v3458
        %3666 = vrot.lane.b32.xlu0 %v3656, 124
        %v3667 = vpop.permute.xlu0 %3666
        %3668 = vrot.lane.b32.xlu0 %v3657, 124
        %v3669 = vpop.permute.xlu0 %3668
        %3670 = vrot.lane.b32.xlu0 %v3658, 124
        %v3671 = vpop.permute.xlu0 %3670
        %3672 = vrot.lane.b32.xlu0 %v3659, 124
        %v3673 = vpop.permute.xlu0 %3672
        %3674 = vrot.lane.b32.xlu0 %v3660, 124
        %v3675 = vpop.permute.xlu0 %3674
        %v3676 = vsel %vm528, %v3667, %v3669
        %v3677 = vsel %vm528, %v3669, %v3671
        %v3678 = vsel %vm528, %v3671, %v3673
        %v3679 = vsel %vm528, %v3673, %v3675
        %v3684 = vadd.f32 %v3652, %v3676
        %v3685 = vadd.f32 %v3653, %v3677
        %v3686 = vadd.f32 %v3654, %v3678
        %v3687 = vadd.f32 %v3655, %v3679
        %v3688 = vmul.f32 %v579, %v3410
        %v3689 = vmul.f32 %v579, %v3411
        %v3690 = vmul.f32 %v579, %v3412
        %v3691 = vmul.f32 %v579, %v3413
        %v3692 = vmul.f32 %v579, %v3414
        %3698 = vrot.lane.b32.xlu0 %v3688, 123
        %v3699 = vpop.permute.xlu0 %3698
        %3700 = vrot.lane.b32.xlu0 %v3689, 123
        %v3701 = vpop.permute.xlu0 %3700
        %3702 = vrot.lane.b32.xlu0 %v3690, 123
        %v3703 = vpop.permute.xlu0 %3702
        %3704 = vrot.lane.b32.xlu0 %v3691, 123
        %v3705 = vpop.permute.xlu0 %3704
        %3706 = vrot.lane.b32.xlu0 %v3692, 123
        %v3707 = vpop.permute.xlu0 %3706
        %v3708 = vsel %vm601, %v3699, %v3701
        %v3709 = vsel %vm601, %v3701, %v3703
        %v3710 = vsel %vm601, %v3703, %v3705
        %v3711 = vsel %vm601, %v3705, %v3707
        %v3716 = vadd.f32 %v3684, %v3708
        %v3717 = vadd.f32 %v3685, %v3709
        %v3718 = vadd.f32 %v3686, %v3710
        %v3719 = vadd.f32 %v3687, %v3711
        %v3720 = vmul.f32 %v616, %v3454
        %v3721 = vmul.f32 %v616, %v3455
        %v3722 = vmul.f32 %v616, %v3456
        %v3723 = vmul.f32 %v616, %v3457
        %v3724 = vmul.f32 %v616, %v3458
        %3730 = vrot.lane.b32.xlu0 %v3720, 123
        %v3731 = vpop.permute.xlu0 %3730
        %3732 = vrot.lane.b32.xlu0 %v3721, 123
        %v3733 = vpop.permute.xlu0 %3732
        %3734 = vrot.lane.b32.xlu0 %v3722, 123
        %v3735 = vpop.permute.xlu0 %3734
        %3736 = vrot.lane.b32.xlu0 %v3723, 123
        %v3737 = vpop.permute.xlu0 %3736
        %3738 = vrot.lane.b32.xlu0 %v3724, 123
        %v3739 = vpop.permute.xlu0 %3738
        %v3740 = vsel %vm601, %v3731, %v3733
        %v3741 = vsel %vm601, %v3733, %v3735
        %v3742 = vsel %vm601, %v3735, %v3737
        %v3743 = vsel %vm601, %v3737, %v3739
        %v3748 = vadd.f32 %v3716, %v3740
        %v3749 = vadd.f32 %v3717, %v3741
        %v3750 = vadd.f32 %v3718, %v3742
        %v3751 = vadd.f32 %v3719, %v3743
        %v3752 = vmul.f32 %v652, %v3410
        %v3753 = vmul.f32 %v652, %v3411
        %v3754 = vmul.f32 %v652, %v3412
        %v3755 = vmul.f32 %v652, %v3413
        %v3756 = vmul.f32 %v652, %v3414
        %3762 = vrot.lane.b32.xlu0 %v3752, 122
        %v3763 = vpop.permute.xlu0 %3762
        %3764 = vrot.lane.b32.xlu0 %v3753, 122
        %v3765 = vpop.permute.xlu0 %3764
        %3766 = vrot.lane.b32.xlu0 %v3754, 122
        %v3767 = vpop.permute.xlu0 %3766
        %3768 = vrot.lane.b32.xlu0 %v3755, 122
        %v3769 = vpop.permute.xlu0 %3768
        %3770 = vrot.lane.b32.xlu0 %v3756, 122
        %v3771 = vpop.permute.xlu0 %3770
        %v3772 = vsel %vm674, %v3763, %v3765
        %v3773 = vsel %vm674, %v3765, %v3767
        %v3774 = vsel %vm674, %v3767, %v3769
        %v3775 = vsel %vm674, %v3769, %v3771
        %v3780 = vadd.f32 %v3748, %v3772
        %v3781 = vadd.f32 %v3749, %v3773
        %v3782 = vadd.f32 %v3750, %v3774
        %v3783 = vadd.f32 %v3751, %v3775
        %v3784 = vmul.f32 %v689, %v3454
        %v3785 = vmul.f32 %v689, %v3455
        %v3786 = vmul.f32 %v689, %v3456
        %v3787 = vmul.f32 %v689, %v3457
        %v3788 = vmul.f32 %v689, %v3458
        %3794 = vrot.lane.b32.xlu0 %v3784, 122
        %v3795 = vpop.permute.xlu0 %3794
        %3796 = vrot.lane.b32.xlu0 %v3785, 122
        %v3797 = vpop.permute.xlu0 %3796
        %3798 = vrot.lane.b32.xlu0 %v3786, 122
        %v3799 = vpop.permute.xlu0 %3798
        %3800 = vrot.lane.b32.xlu0 %v3787, 122
        %v3801 = vpop.permute.xlu0 %3800
        %3802 = vrot.lane.b32.xlu0 %v3788, 122
        %v3803 = vpop.permute.xlu0 %3802
        %v3804 = vsel %vm674, %v3795, %v3797
        %v3805 = vsel %vm674, %v3797, %v3799
        %v3806 = vsel %vm674, %v3799, %v3801
        %v3807 = vsel %vm674, %v3801, %v3803
        %v3812 = vadd.f32 %v3780, %v3804
        %v3813 = vadd.f32 %v3781, %v3805
        %v3814 = vadd.f32 %v3782, %v3806
        %v3815 = vadd.f32 %v3783, %v3807
        %v3816 = vmul.f32 %v725, %v3410
        %v3817 = vmul.f32 %v725, %v3411
        %v3818 = vmul.f32 %v725, %v3412
        %v3819 = vmul.f32 %v725, %v3413
        %v3820 = vmul.f32 %v725, %v3414
        %3826 = vrot.lane.b32.xlu0 %v3816, 121
        %v3827 = vpop.permute.xlu0 %3826
        %3828 = vrot.lane.b32.xlu0 %v3817, 121
        %v3829 = vpop.permute.xlu0 %3828
        %3830 = vrot.lane.b32.xlu0 %v3818, 121
        %v3831 = vpop.permute.xlu0 %3830
        %3832 = vrot.lane.b32.xlu0 %v3819, 121
        %v3833 = vpop.permute.xlu0 %3832
        %3834 = vrot.lane.b32.xlu0 %v3820, 121
        %v3835 = vpop.permute.xlu0 %3834
        %v3836 = vsel %vm747, %v3827, %v3829
        %v3837 = vsel %vm747, %v3829, %v3831
        %v3838 = vsel %vm747, %v3831, %v3833
        %v3839 = vsel %vm747, %v3833, %v3835
        %v3844 = vadd.f32 %v3812, %v3836
        %v3845 = vadd.f32 %v3813, %v3837
        %v3846 = vadd.f32 %v3814, %v3838
        %v3847 = vadd.f32 %v3815, %v3839
        %v3848 = vmul.f32 %v762, %v3454
        %v3849 = vmul.f32 %v762, %v3455
        %v3850 = vmul.f32 %v762, %v3456
        %v3851 = vmul.f32 %v762, %v3457
        %v3852 = vmul.f32 %v762, %v3458
        %3858 = vrot.lane.b32.xlu0 %v3848, 121
        %v3859 = vpop.permute.xlu0 %3858
        %3860 = vrot.lane.b32.xlu0 %v3849, 121
        %v3861 = vpop.permute.xlu0 %3860
        %3862 = vrot.lane.b32.xlu0 %v3850, 121
        %v3863 = vpop.permute.xlu0 %3862
        %3864 = vrot.lane.b32.xlu0 %v3851, 121
        %v3865 = vpop.permute.xlu0 %3864
        %3866 = vrot.lane.b32.xlu0 %v3852, 121
        %v3867 = vpop.permute.xlu0 %3866
        %v3868 = vsel %vm747, %v3859, %v3861
        %v3869 = vsel %vm747, %v3861, %v3863
        %v3870 = vsel %vm747, %v3863, %v3865
        %v3871 = vsel %vm747, %v3865, %v3867
        %v3876 = vadd.f32 %v3844, %v3868
        %v3877 = vadd.f32 %v3845, %v3869
        %v3878 = vadd.f32 %v3846, %v3870
        %v3879 = vadd.f32 %v3847, %v3871
        %3880 = vst [vmem:[%s206 + $0xc0] sm:$0xff] %v3876
        %3881 = vst [vmem:[%s206 + $0xc8] sm:$0xff] %v3877
        %3882 = vst [vmem:[%s206 + $0xd0] sm:$0xff] %v3878
        %3883 = vst [vmem:[%s206 + $0xd8] sm:$0xff] %v3879
        %s3884 = scalar_lea.vmem %s183, 56 [#allocation2]
        %v3885 = vld [vmem:[%s3884] ss:$2 sm:$0xf]
        %v3887 = vperm.slane %v3885, 0
        %v3888 = vperm.slane %v3885, 1
        %v3889 = vperm.slane %v3885, 2
        %v3890 = vperm.slane %v3885, 3
        %v3895 = vmul.f32 %v219, %v3887
        %v3896 = vmul.f32 %v219, %v3888
        %v3897 = vmul.f32 %v219, %v3889
        %v3898 = vmul.f32 %v219, %v3890
        %v3899 = vadd.f32 %v213, %v3895
        %v3900 = vadd.f32 %v213, %v3896
        %v3901 = vadd.f32 %v213, %v3897
        %v3902 = vadd.f32 %v213, %v3898
        %s3903 = scalar_lea.vmem %s183, 57 [#allocation2]
        %v3904 = vld [vmem:[%s3903] ss:$2 sm:$0xf]
        %v3906 = vperm.slane %v3904, 0
        %v3907 = vperm.slane %v3904, 1
        %v3908 = vperm.slane %v3904, 2
        %v3909 = vperm.slane %v3904, 3
        %v3914 = vmul.f32 %v242, %v3906
        %v3915 = vmul.f32 %v242, %v3907
        %v3916 = vmul.f32 %v242, %v3908
        %v3917 = vmul.f32 %v242, %v3909
        %v3918 = vadd.f32 %v3899, %v3914
        %v3919 = vadd.f32 %v3900, %v3915
        %v3920 = vadd.f32 %v3901, %v3916
        %v3921 = vadd.f32 %v3902, %v3917
        %v3922 = vld [vmem:[%s3884] ss:$2 sm:$0x1f]
        %v3924 = vperm.slane %v3922, 0
        %v3925 = vperm.slane %v3922, 1
        %v3926 = vperm.slane %v3922, 2
        %v3927 = vperm.slane %v3922, 3
        %v3928 = vperm.slane %v3922, 4
        %v3934 = vmul.f32 %v264, %v3924
        %v3935 = vmul.f32 %v264, %v3925
        %v3936 = vmul.f32 %v264, %v3926
        %v3937 = vmul.f32 %v264, %v3927
        %v3938 = vmul.f32 %v264, %v3928
        %3944 = vrot.lane.b32.xlu0 %v3934, 127
        %v3945 = vpop.permute.xlu0 %3944
        %3946 = vrot.lane.b32.xlu0 %v3935, 127
        %v3947 = vpop.permute.xlu0 %3946
        %3948 = vrot.lane.b32.xlu0 %v3936, 127
        %v3949 = vpop.permute.xlu0 %3948
        %3950 = vrot.lane.b32.xlu0 %v3937, 127
        %v3951 = vpop.permute.xlu0 %3950
        %3952 = vrot.lane.b32.xlu0 %v3938, 127
        %v3953 = vpop.permute.xlu0 %3952
        %v3954 = vsel %vm297, %v3945, %v3947
        %v3955 = vsel %vm297, %v3947, %v3949
        %v3956 = vsel %vm297, %v3949, %v3951
        %v3957 = vsel %vm297, %v3951, %v3953
        %v3962 = vadd.f32 %v3918, %v3954
        %v3963 = vadd.f32 %v3919, %v3955
        %v3964 = vadd.f32 %v3920, %v3956
        %v3965 = vadd.f32 %v3921, %v3957
        %v3966 = vld [vmem:[%s3903] ss:$2 sm:$0x1f]
        %v3968 = vperm.slane %v3966, 0
        %v3969 = vperm.slane %v3966, 1
        %v3970 = vperm.slane %v3966, 2
        %v3971 = vperm.slane %v3966, 3
        %v3972 = vperm.slane %v3966, 4
        %v3978 = vmul.f32 %v313, %v3968
        %v3979 = vmul.f32 %v313, %v3969
        %v3980 = vmul.f32 %v313, %v3970
        %v3981 = vmul.f32 %v313, %v3971
        %v3982 = vmul.f32 %v313, %v3972
        %3988 = vrot.lane.b32.xlu0 %v3978, 127
        %v3989 = vpop.permute.xlu0 %3988
        %3990 = vrot.lane.b32.xlu0 %v3979, 127
        %v3991 = vpop.permute.xlu0 %3990
        %3992 = vrot.lane.b32.xlu0 %v3980, 127
        %v3993 = vpop.permute.xlu0 %3992
        %3994 = vrot.lane.b32.xlu0 %v3981, 127
        %v3995 = vpop.permute.xlu0 %3994
        %3996 = vrot.lane.b32.xlu0 %v3982, 127
        %v3997 = vpop.permute.xlu0 %3996
        %v3998 = vsel %vm297, %v3989, %v3991
        %v3999 = vsel %vm297, %v3991, %v3993
        %v4000 = vsel %vm297, %v3993, %v3995
        %v4001 = vsel %vm297, %v3995, %v3997
        %v4006 = vadd.f32 %v3962, %v3998
        %v4007 = vadd.f32 %v3963, %v3999
        %v4008 = vadd.f32 %v3964, %v4000
        %v4009 = vadd.f32 %v3965, %v4001
        %v4010 = vmul.f32 %v360, %v3924
        %v4011 = vmul.f32 %v360, %v3925
        %v4012 = vmul.f32 %v360, %v3926
        %v4013 = vmul.f32 %v360, %v3927
        %v4014 = vmul.f32 %v360, %v3928
        %4020 = vrot.lane.b32.xlu0 %v4010, 126
        %v4021 = vpop.permute.xlu0 %4020
        %4022 = vrot.lane.b32.xlu0 %v4011, 126
        %v4023 = vpop.permute.xlu0 %4022
        %4024 = vrot.lane.b32.xlu0 %v4012, 126
        %v4025 = vpop.permute.xlu0 %4024
        %4026 = vrot.lane.b32.xlu0 %v4013, 126
        %v4027 = vpop.permute.xlu0 %4026
        %4028 = vrot.lane.b32.xlu0 %v4014, 126
        %v4029 = vpop.permute.xlu0 %4028
        %v4030 = vsel %vm382, %v4021, %v4023
        %v4031 = vsel %vm382, %v4023, %v4025
        %v4032 = vsel %vm382, %v4025, %v4027
        %v4033 = vsel %vm382, %v4027, %v4029
        %v4038 = vadd.f32 %v4006, %v4030
        %v4039 = vadd.f32 %v4007, %v4031
        %v4040 = vadd.f32 %v4008, %v4032
        %v4041 = vadd.f32 %v4009, %v4033
        %v4042 = vmul.f32 %v397, %v3968
        %v4043 = vmul.f32 %v397, %v3969
        %v4044 = vmul.f32 %v397, %v3970
        %v4045 = vmul.f32 %v397, %v3971
        %v4046 = vmul.f32 %v397, %v3972
        %4052 = vrot.lane.b32.xlu0 %v4042, 126
        %v4053 = vpop.permute.xlu0 %4052
        %4054 = vrot.lane.b32.xlu0 %v4043, 126
        %v4055 = vpop.permute.xlu0 %4054
        %4056 = vrot.lane.b32.xlu0 %v4044, 126
        %v4057 = vpop.permute.xlu0 %4056
        %4058 = vrot.lane.b32.xlu0 %v4045, 126
        %v4059 = vpop.permute.xlu0 %4058
        %4060 = vrot.lane.b32.xlu0 %v4046, 126
        %v4061 = vpop.permute.xlu0 %4060
        %v4062 = vsel %vm382, %v4053, %v4055
        %v4063 = vsel %vm382, %v4055, %v4057
        %v4064 = vsel %vm382, %v4057, %v4059
        %v4065 = vsel %vm382, %v4059, %v4061
        %v4070 = vadd.f32 %v4038, %v4062
        %v4071 = vadd.f32 %v4039, %v4063
        %v4072 = vadd.f32 %v4040, %v4064
        %v4073 = vadd.f32 %v4041, %v4065
        %v4074 = vmul.f32 %v433, %v3924
        %v4075 = vmul.f32 %v433, %v3925
        %v4076 = vmul.f32 %v433, %v3926
        %v4077 = vmul.f32 %v433, %v3927
        %v4078 = vmul.f32 %v433, %v3928
        %4084 = vrot.lane.b32.xlu0 %v4074, 125
        %v4085 = vpop.permute.xlu0 %4084
        %4086 = vrot.lane.b32.xlu0 %v4075, 125
        %v4087 = vpop.permute.xlu0 %4086
        %4088 = vrot.lane.b32.xlu0 %v4076, 125
        %v4089 = vpop.permute.xlu0 %4088
        %4090 = vrot.lane.b32.xlu0 %v4077, 125
        %v4091 = vpop.permute.xlu0 %4090
        %4092 = vrot.lane.b32.xlu0 %v4078, 125
        %v4093 = vpop.permute.xlu0 %4092
        %v4094 = vsel %vm455, %v4085, %v4087
        %v4095 = vsel %vm455, %v4087, %v4089
        %v4096 = vsel %vm455, %v4089, %v4091
        %v4097 = vsel %vm455, %v4091, %v4093
        %v4102 = vadd.f32 %v4070, %v4094
        %v4103 = vadd.f32 %v4071, %v4095
        %v4104 = vadd.f32 %v4072, %v4096
        %v4105 = vadd.f32 %v4073, %v4097
        %v4106 = vmul.f32 %v470, %v3968
        %v4107 = vmul.f32 %v470, %v3969
        %v4108 = vmul.f32 %v470, %v3970
        %v4109 = vmul.f32 %v470, %v3971
        %v4110 = vmul.f32 %v470, %v3972
        %4116 = vrot.lane.b32.xlu0 %v4106, 125
        %v4117 = vpop.permute.xlu0 %4116
        %4118 = vrot.lane.b32.xlu0 %v4107, 125
        %v4119 = vpop.permute.xlu0 %4118
        %4120 = vrot.lane.b32.xlu0 %v4108, 125
        %v4121 = vpop.permute.xlu0 %4120
        %4122 = vrot.lane.b32.xlu0 %v4109, 125
        %v4123 = vpop.permute.xlu0 %4122
        %4124 = vrot.lane.b32.xlu0 %v4110, 125
        %v4125 = vpop.permute.xlu0 %4124
        %v4126 = vsel %vm455, %v4117, %v4119
        %v4127 = vsel %vm455, %v4119, %v4121
        %v4128 = vsel %vm455, %v4121, %v4123
        %v4129 = vsel %vm455, %v4123, %v4125
        %v4134 = vadd.f32 %v4102, %v4126
        %v4135 = vadd.f32 %v4103, %v4127
        %v4136 = vadd.f32 %v4104, %v4128
        %v4137 = vadd.f32 %v4105, %v4129
        %v4138 = vmul.f32 %v506, %v3924
        %v4139 = vmul.f32 %v506, %v3925
        %v4140 = vmul.f32 %v506, %v3926
        %v4141 = vmul.f32 %v506, %v3927
        %v4142 = vmul.f32 %v506, %v3928
        %4148 = vrot.lane.b32.xlu0 %v4138, 124
        %v4149 = vpop.permute.xlu0 %4148
        %4150 = vrot.lane.b32.xlu0 %v4139, 124
        %v4151 = vpop.permute.xlu0 %4150
        %4152 = vrot.lane.b32.xlu0 %v4140, 124
        %v4153 = vpop.permute.xlu0 %4152
        %4154 = vrot.lane.b32.xlu0 %v4141, 124
        %v4155 = vpop.permute.xlu0 %4154
        %4156 = vrot.lane.b32.xlu0 %v4142, 124
        %v4157 = vpop.permute.xlu0 %4156
        %v4158 = vsel %vm528, %v4149, %v4151
        %v4159 = vsel %vm528, %v4151, %v4153
        %v4160 = vsel %vm528, %v4153, %v4155
        %v4161 = vsel %vm528, %v4155, %v4157
        %v4166 = vadd.f32 %v4134, %v4158
        %v4167 = vadd.f32 %v4135, %v4159
        %v4168 = vadd.f32 %v4136, %v4160
        %v4169 = vadd.f32 %v4137, %v4161
        %v4170 = vmul.f32 %v543, %v3968
        %v4171 = vmul.f32 %v543, %v3969
        %v4172 = vmul.f32 %v543, %v3970
        %v4173 = vmul.f32 %v543, %v3971
        %v4174 = vmul.f32 %v543, %v3972
        %4180 = vrot.lane.b32.xlu0 %v4170, 124
        %v4181 = vpop.permute.xlu0 %4180
        %4182 = vrot.lane.b32.xlu0 %v4171, 124
        %v4183 = vpop.permute.xlu0 %4182
        %4184 = vrot.lane.b32.xlu0 %v4172, 124
        %v4185 = vpop.permute.xlu0 %4184
        %4186 = vrot.lane.b32.xlu0 %v4173, 124
        %v4187 = vpop.permute.xlu0 %4186
        %4188 = vrot.lane.b32.xlu0 %v4174, 124
        %v4189 = vpop.permute.xlu0 %4188
        %v4190 = vsel %vm528, %v4181, %v4183
        %v4191 = vsel %vm528, %v4183, %v4185
        %v4192 = vsel %vm528, %v4185, %v4187
        %v4193 = vsel %vm528, %v4187, %v4189
        %v4198 = vadd.f32 %v4166, %v4190
        %v4199 = vadd.f32 %v4167, %v4191
        %v4200 = vadd.f32 %v4168, %v4192
        %v4201 = vadd.f32 %v4169, %v4193
        %v4202 = vmul.f32 %v579, %v3924
        %v4203 = vmul.f32 %v579, %v3925
        %v4204 = vmul.f32 %v579, %v3926
        %v4205 = vmul.f32 %v579, %v3927
        %v4206 = vmul.f32 %v579, %v3928
        %4212 = vrot.lane.b32.xlu0 %v4202, 123
        %v4213 = vpop.permute.xlu0 %4212
        %4214 = vrot.lane.b32.xlu0 %v4203, 123
        %v4215 = vpop.permute.xlu0 %4214
        %4216 = vrot.lane.b32.xlu0 %v4204, 123
        %v4217 = vpop.permute.xlu0 %4216
        %4218 = vrot.lane.b32.xlu0 %v4205, 123
        %v4219 = vpop.permute.xlu0 %4218
        %4220 = vrot.lane.b32.xlu0 %v4206, 123
        %v4221 = vpop.permute.xlu0 %4220
        %v4222 = vsel %vm601, %v4213, %v4215
        %v4223 = vsel %vm601, %v4215, %v4217
        %v4224 = vsel %vm601, %v4217, %v4219
        %v4225 = vsel %vm601, %v4219, %v4221
        %v4230 = vadd.f32 %v4198, %v4222
        %v4231 = vadd.f32 %v4199, %v4223
        %v4232 = vadd.f32 %v4200, %v4224
        %v4233 = vadd.f32 %v4201, %v4225
        %v4234 = vmul.f32 %v616, %v3968
        %v4235 = vmul.f32 %v616, %v3969
        %v4236 = vmul.f32 %v616, %v3970
        %v4237 = vmul.f32 %v616, %v3971
        %v4238 = vmul.f32 %v616, %v3972
        %4244 = vrot.lane.b32.xlu0 %v4234, 123
        %v4245 = vpop.permute.xlu0 %4244
        %4246 = vrot.lane.b32.xlu0 %v4235, 123
        %v4247 = vpop.permute.xlu0 %4246
        %4248 = vrot.lane.b32.xlu0 %v4236, 123
        %v4249 = vpop.permute.xlu0 %4248
        %4250 = vrot.lane.b32.xlu0 %v4237, 123
        %v4251 = vpop.permute.xlu0 %4250
        %4252 = vrot.lane.b32.xlu0 %v4238, 123
        %v4253 = vpop.permute.xlu0 %4252
        %v4254 = vsel %vm601, %v4245, %v4247
        %v4255 = vsel %vm601, %v4247, %v4249
        %v4256 = vsel %vm601, %v4249, %v4251
        %v4257 = vsel %vm601, %v4251, %v4253
        %v4262 = vadd.f32 %v4230, %v4254
        %v4263 = vadd.f32 %v4231, %v4255
        %v4264 = vadd.f32 %v4232, %v4256
        %v4265 = vadd.f32 %v4233, %v4257
        %v4266 = vmul.f32 %v652, %v3924
        %v4267 = vmul.f32 %v652, %v3925
        %v4268 = vmul.f32 %v652, %v3926
        %v4269 = vmul.f32 %v652, %v3927
        %v4270 = vmul.f32 %v652, %v3928
        %4276 = vrot.lane.b32.xlu0 %v4266, 122
        %v4277 = vpop.permute.xlu0 %4276
        %4278 = vrot.lane.b32.xlu0 %v4267, 122
        %v4279 = vpop.permute.xlu0 %4278
        %4280 = vrot.lane.b32.xlu0 %v4268, 122
        %v4281 = vpop.permute.xlu0 %4280
        %4282 = vrot.lane.b32.xlu0 %v4269, 122
        %v4283 = vpop.permute.xlu0 %4282
        %4284 = vrot.lane.b32.xlu0 %v4270, 122
        %v4285 = vpop.permute.xlu0 %4284
        %v4286 = vsel %vm674, %v4277, %v4279
        %v4287 = vsel %vm674, %v4279, %v4281
        %v4288 = vsel %vm674, %v4281, %v4283
        %v4289 = vsel %vm674, %v4283, %v4285
        %v4294 = vadd.f32 %v4262, %v4286
        %v4295 = vadd.f32 %v4263, %v4287
        %v4296 = vadd.f32 %v4264, %v4288
        %v4297 = vadd.f32 %v4265, %v4289
        %v4298 = vmul.f32 %v689, %v3968
        %v4299 = vmul.f32 %v689, %v3969
        %v4300 = vmul.f32 %v689, %v3970
        %v4301 = vmul.f32 %v689, %v3971
        %v4302 = vmul.f32 %v689, %v3972
        %4308 = vrot.lane.b32.xlu0 %v4298, 122
        %v4309 = vpop.permute.xlu0 %4308
        %4310 = vrot.lane.b32.xlu0 %v4299, 122
        %v4311 = vpop.permute.xlu0 %4310
        %4312 = vrot.lane.b32.xlu0 %v4300, 122
        %v4313 = vpop.permute.xlu0 %4312
        %4314 = vrot.lane.b32.xlu0 %v4301, 122
        %v4315 = vpop.permute.xlu0 %4314
        %4316 = vrot.lane.b32.xlu0 %v4302, 122
        %v4317 = vpop.permute.xlu0 %4316
        %v4318 = vsel %vm674, %v4309, %v4311
        %v4319 = vsel %vm674, %v4311, %v4313
        %v4320 = vsel %vm674, %v4313, %v4315
        %v4321 = vsel %vm674, %v4315, %v4317
        %v4326 = vadd.f32 %v4294, %v4318
        %v4327 = vadd.f32 %v4295, %v4319
        %v4328 = vadd.f32 %v4296, %v4320
        %v4329 = vadd.f32 %v4297, %v4321
        %v4330 = vmul.f32 %v725, %v3924
        %v4331 = vmul.f32 %v725, %v3925
        %v4332 = vmul.f32 %v725, %v3926
        %v4333 = vmul.f32 %v725, %v3927
        %v4334 = vmul.f32 %v725, %v3928
        %4340 = vrot.lane.b32.xlu0 %v4330, 121
        %v4341 = vpop.permute.xlu0 %4340
        %4342 = vrot.lane.b32.xlu0 %v4331, 121
        %v4343 = vpop.permute.xlu0 %4342
        %4344 = vrot.lane.b32.xlu0 %v4332, 121
        %v4345 = vpop.permute.xlu0 %4344
        %4346 = vrot.lane.b32.xlu0 %v4333, 121
        %v4347 = vpop.permute.xlu0 %4346
        %4348 = vrot.lane.b32.xlu0 %v4334, 121
        %v4349 = vpop.permute.xlu0 %4348
        %v4350 = vsel %vm747, %v4341, %v4343
        %v4351 = vsel %vm747, %v4343, %v4345
        %v4352 = vsel %vm747, %v4345, %v4347
        %v4353 = vsel %vm747, %v4347, %v4349
        %v4358 = vadd.f32 %v4326, %v4350
        %v4359 = vadd.f32 %v4327, %v4351
        %v4360 = vadd.f32 %v4328, %v4352
        %v4361 = vadd.f32 %v4329, %v4353
        %v4362 = vmul.f32 %v762, %v3968
        %v4363 = vmul.f32 %v762, %v3969
        %v4364 = vmul.f32 %v762, %v3970
        %v4365 = vmul.f32 %v762, %v3971
        %v4366 = vmul.f32 %v762, %v3972
        %4372 = vrot.lane.b32.xlu0 %v4362, 121
        %v4373 = vpop.permute.xlu0 %4372
        %4374 = vrot.lane.b32.xlu0 %v4363, 121
        %v4375 = vpop.permute.xlu0 %4374
        %4376 = vrot.lane.b32.xlu0 %v4364, 121
        %v4377 = vpop.permute.xlu0 %4376
        %4378 = vrot.lane.b32.xlu0 %v4365, 121
        %v4379 = vpop.permute.xlu0 %4378
        %4380 = vrot.lane.b32.xlu0 %v4366, 121
        %v4381 = vpop.permute.xlu0 %4380
        %v4382 = vsel %vm747, %v4373, %v4375
        %v4383 = vsel %vm747, %v4375, %v4377
        %v4384 = vsel %vm747, %v4377, %v4379
        %v4385 = vsel %vm747, %v4379, %v4381
        %v4390 = vadd.f32 %v4358, %v4382
        %v4391 = vadd.f32 %v4359, %v4383
        %v4392 = vadd.f32 %v4360, %v4384
        %v4393 = vadd.f32 %v4361, %v4385
        %4394 = vst [vmem:[%s206 + $0xe0] sm:$0xff] %v4390
        %4395 = vst [vmem:[%s206 + $0xe8] sm:$0xff] %v4391
        %4396 = vst [vmem:[%s206 + $0xf0] sm:$0xff] %v4392
        %4397 = vst [vmem:[%s206 + $0xf8] sm:$0xff] %v4393
        %s4398 = scalar_lea.vmem %s183, 64 [#allocation2]
        %v4399 = vld [vmem:[%s4398] ss:$2 sm:$0xf]
        %v4401 = vperm.slane %v4399, 0
        %v4402 = vperm.slane %v4399, 1
        %v4403 = vperm.slane %v4399, 2
        %v4404 = vperm.slane %v4399, 3
        %v4409 = vmul.f32 %v219, %v4401
        %v4410 = vmul.f32 %v219, %v4402
        %v4411 = vmul.f32 %v219, %v4403
        %v4412 = vmul.f32 %v219, %v4404
        %v4413 = vadd.f32 %v213, %v4409
        %v4414 = vadd.f32 %v213, %v4410
        %v4415 = vadd.f32 %v213, %v4411
        %v4416 = vadd.f32 %v213, %v4412
        %s4417 = scalar_lea.vmem %s183, 65 [#allocation2]
        %v4418 = vld [vmem:[%s4417] ss:$2 sm:$0xf]
        %v4420 = vperm.slane %v4418, 0
        %v4421 = vperm.slane %v4418, 1
        %v4422 = vperm.slane %v4418, 2
        %v4423 = vperm.slane %v4418, 3
        %v4428 = vmul.f32 %v242, %v4420
        %v4429 = vmul.f32 %v242, %v4421
        %v4430 = vmul.f32 %v242, %v4422
        %v4431 = vmul.f32 %v242, %v4423
        %v4432 = vadd.f32 %v4413, %v4428
        %v4433 = vadd.f32 %v4414, %v4429
        %v4434 = vadd.f32 %v4415, %v4430
        %v4435 = vadd.f32 %v4416, %v4431
        %s4436 = scalar_lea.vmem %s183, 64 [#allocation2]
        %v4437 = vld [vmem:[%s4436] ss:$2 sm:$0x1f]
        %v4439 = vperm.slane %v4437, 0
        %v4440 = vperm.slane %v4437, 1
        %v4441 = vperm.slane %v4437, 2
        %v4442 = vperm.slane %v4437, 3
        %v4443 = vperm.slane %v4437, 4
        %v4449 = vmul.f32 %v264, %v4439
        %v4450 = vmul.f32 %v264, %v4440
        %v4451 = vmul.f32 %v264, %v4441
        %v4452 = vmul.f32 %v264, %v4442
        %v4453 = vmul.f32 %v264, %v4443
        %4459 = vrot.lane.b32.xlu0 %v4449, 127
        %v4460 = vpop.permute.xlu0 %4459
        %4461 = vrot.lane.b32.xlu0 %v4450, 127
        %v4462 = vpop.permute.xlu0 %4461
        %4463 = vrot.lane.b32.xlu0 %v4451, 127
        %v4464 = vpop.permute.xlu0 %4463
        %4465 = vrot.lane.b32.xlu0 %v4452, 127
        %v4466 = vpop.permute.xlu0 %4465
        %4467 = vrot.lane.b32.xlu0 %v4453, 127
        %v4468 = vpop.permute.xlu0 %4467
        %v4469 = vsel %vm297, %v4460, %v4462
        %v4470 = vsel %vm297, %v4462, %v4464
        %v4471 = vsel %vm297, %v4464, %v4466
        %v4472 = vsel %vm297, %v4466, %v4468
        %v4477 = vadd.f32 %v4432, %v4469
        %v4478 = vadd.f32 %v4433, %v4470
        %v4479 = vadd.f32 %v4434, %v4471
        %v4480 = vadd.f32 %v4435, %v4472
        %s4481 = scalar_lea.vmem %s183, 65 [#allocation2]
        %v4482 = vld [vmem:[%s4481] ss:$2 sm:$0x1f]
        %v4484 = vperm.slane %v4482, 0
        %v4485 = vperm.slane %v4482, 1
        %v4486 = vperm.slane %v4482, 2
        %v4487 = vperm.slane %v4482, 3
        %v4488 = vperm.slane %v4482, 4
        %v4494 = vmul.f32 %v313, %v4484
        %v4495 = vmul.f32 %v313, %v4485
        %v4496 = vmul.f32 %v313, %v4486
        %v4497 = vmul.f32 %v313, %v4487
        %v4498 = vmul.f32 %v313, %v4488
        %4504 = vrot.lane.b32.xlu0 %v4494, 127
        %v4505 = vpop.permute.xlu0 %4504
        %4506 = vrot.lane.b32.xlu0 %v4495, 127
        %v4507 = vpop.permute.xlu0 %4506
        %4508 = vrot.lane.b32.xlu0 %v4496, 127
        %v4509 = vpop.permute.xlu0 %4508
        %4510 = vrot.lane.b32.xlu0 %v4497, 127
        %v4511 = vpop.permute.xlu0 %4510
        %4512 = vrot.lane.b32.xlu0 %v4498, 127
        %v4513 = vpop.permute.xlu0 %4512
        %v4514 = vsel %vm297, %v4505, %v4507
        %v4515 = vsel %vm297, %v4507, %v4509
        %v4516 = vsel %vm297, %v4509, %v4511
        %v4517 = vsel %vm297, %v4511, %v4513
        %v4522 = vadd.f32 %v4477, %v4514
        %v4523 = vadd.f32 %v4478, %v4515
        %v4524 = vadd.f32 %v4479, %v4516
        %v4525 = vadd.f32 %v4480, %v4517
        %v4526 = vmul.f32 %v360, %v4439
        %v4527 = vmul.f32 %v360, %v4440
        %v4528 = vmul.f32 %v360, %v4441
        %v4529 = vmul.f32 %v360, %v4442
        %v4530 = vmul.f32 %v360, %v4443
        %4536 = vrot.lane.b32.xlu0 %v4526, 126
        %v4537 = vpop.permute.xlu0 %4536
        %4538 = vrot.lane.b32.xlu0 %v4527, 126
        %v4539 = vpop.permute.xlu0 %4538
        %4540 = vrot.lane.b32.xlu0 %v4528, 126
        %v4541 = vpop.permute.xlu0 %4540
        %4542 = vrot.lane.b32.xlu0 %v4529, 126
        %v4543 = vpop.permute.xlu0 %4542
        %4544 = vrot.lane.b32.xlu0 %v4530, 126
        %v4545 = vpop.permute.xlu0 %4544
        %v4546 = vsel %vm382, %v4537, %v4539
        %v4547 = vsel %vm382, %v4539, %v4541
        %v4548 = vsel %vm382, %v4541, %v4543
        %v4549 = vsel %vm382, %v4543, %v4545
        %v4554 = vadd.f32 %v4522, %v4546
        %v4555 = vadd.f32 %v4523, %v4547
        %v4556 = vadd.f32 %v4524, %v4548
        %v4557 = vadd.f32 %v4525, %v4549
        %v4558 = vmul.f32 %v397, %v4484
        %v4559 = vmul.f32 %v397, %v4485
        %v4560 = vmul.f32 %v397, %v4486
        %v4561 = vmul.f32 %v397, %v4487
        %v4562 = vmul.f32 %v397, %v4488
        %4568 = vrot.lane.b32.xlu0 %v4558, 126
        %v4569 = vpop.permute.xlu0 %4568
        %4570 = vrot.lane.b32.xlu0 %v4559, 126
        %v4571 = vpop.permute.xlu0 %4570
        %4572 = vrot.lane.b32.xlu0 %v4560, 126
        %v4573 = vpop.permute.xlu0 %4572
        %4574 = vrot.lane.b32.xlu0 %v4561, 126
        %v4575 = vpop.permute.xlu0 %4574
        %4576 = vrot.lane.b32.xlu0 %v4562, 126
        %v4577 = vpop.permute.xlu0 %4576
        %v4578 = vsel %vm382, %v4569, %v4571
        %v4579 = vsel %vm382, %v4571, %v4573
        %v4580 = vsel %vm382, %v4573, %v4575
        %v4581 = vsel %vm382, %v4575, %v4577
        %v4586 = vadd.f32 %v4554, %v4578
        %v4587 = vadd.f32 %v4555, %v4579
        %v4588 = vadd.f32 %v4556, %v4580
        %v4589 = vadd.f32 %v4557, %v4581
        %v4590 = vmul.f32 %v433, %v4439
        %v4591 = vmul.f32 %v433, %v4440
        %v4592 = vmul.f32 %v433, %v4441
        %v4593 = vmul.f32 %v433, %v4442
        %v4594 = vmul.f32 %v433, %v4443
        %4600 = vrot.lane.b32.xlu0 %v4590, 125
        %v4601 = vpop.permute.xlu0 %4600
        %4602 = vrot.lane.b32.xlu0 %v4591, 125
        %v4603 = vpop.permute.xlu0 %4602
        %4604 = vrot.lane.b32.xlu0 %v4592, 125
        %v4605 = vpop.permute.xlu0 %4604
        %4606 = vrot.lane.b32.xlu0 %v4593, 125
        %v4607 = vpop.permute.xlu0 %4606
        %4608 = vrot.lane.b32.xlu0 %v4594, 125
        %v4609 = vpop.permute.xlu0 %4608
        %v4610 = vsel %vm455, %v4601, %v4603
        %v4611 = vsel %vm455, %v4603, %v4605
        %v4612 = vsel %vm455, %v4605, %v4607
        %v4613 = vsel %vm455, %v4607, %v4609
        %v4618 = vadd.f32 %v4586, %v4610
        %v4619 = vadd.f32 %v4587, %v4611
        %v4620 = vadd.f32 %v4588, %v4612
        %v4621 = vadd.f32 %v4589, %v4613
        %v4622 = vmul.f32 %v470, %v4484
        %v4623 = vmul.f32 %v470, %v4485
        %v4624 = vmul.f32 %v470, %v4486
        %v4625 = vmul.f32 %v470, %v4487
        %v4626 = vmul.f32 %v470, %v4488
        %4632 = vrot.lane.b32.xlu0 %v4622, 125
        %v4633 = vpop.permute.xlu0 %4632
        %4634 = vrot.lane.b32.xlu0 %v4623, 125
        %v4635 = vpop.permute.xlu0 %4634
        %4636 = vrot.lane.b32.xlu0 %v4624, 125
        %v4637 = vpop.permute.xlu0 %4636
        %4638 = vrot.lane.b32.xlu0 %v4625, 125
        %v4639 = vpop.permute.xlu0 %4638
        %4640 = vrot.lane.b32.xlu0 %v4626, 125
        %v4641 = vpop.permute.xlu0 %4640
        %v4642 = vsel %vm455, %v4633, %v4635
        %v4643 = vsel %vm455, %v4635, %v4637
        %v4644 = vsel %vm455, %v4637, %v4639
        %v4645 = vsel %vm455, %v4639, %v4641
        %v4650 = vadd.f32 %v4618, %v4642
        %v4651 = vadd.f32 %v4619, %v4643
        %v4652 = vadd.f32 %v4620, %v4644
        %v4653 = vadd.f32 %v4621, %v4645
        %v4654 = vmul.f32 %v506, %v4439
        %v4655 = vmul.f32 %v506, %v4440
        %v4656 = vmul.f32 %v506, %v4441
        %v4657 = vmul.f32 %v506, %v4442
        %v4658 = vmul.f32 %v506, %v4443
        %4664 = vrot.lane.b32.xlu0 %v4654, 124
        %v4665 = vpop.permute.xlu0 %4664
        %4666 = vrot.lane.b32.xlu0 %v4655, 124
        %v4667 = vpop.permute.xlu0 %4666
        %4668 = vrot.lane.b32.xlu0 %v4656, 124
        %v4669 = vpop.permute.xlu0 %4668
        %4670 = vrot.lane.b32.xlu0 %v4657, 124
        %v4671 = vpop.permute.xlu0 %4670
        %4672 = vrot.lane.b32.xlu0 %v4658, 124
        %v4673 = vpop.permute.xlu0 %4672
        %v4674 = vsel %vm528, %v4665, %v4667
        %v4675 = vsel %vm528, %v4667, %v4669
        %v4676 = vsel %vm528, %v4669, %v4671
        %v4677 = vsel %vm528, %v4671, %v4673
        %v4682 = vadd.f32 %v4650, %v4674
        %v4683 = vadd.f32 %v4651, %v4675
        %v4684 = vadd.f32 %v4652, %v4676
        %v4685 = vadd.f32 %v4653, %v4677
        %v4686 = vmul.f32 %v543, %v4484
        %v4687 = vmul.f32 %v543, %v4485
        %v4688 = vmul.f32 %v543, %v4486
        %v4689 = vmul.f32 %v543, %v4487
        %v4690 = vmul.f32 %v543, %v4488
        %4696 = vrot.lane.b32.xlu0 %v4686, 124
        %v4697 = vpop.permute.xlu0 %4696
        %4698 = vrot.lane.b32.xlu0 %v4687, 124
        %v4699 = vpop.permute.xlu0 %4698
        %4700 = vrot.lane.b32.xlu0 %v4688, 124
        %v4701 = vpop.permute.xlu0 %4700
        %4702 = vrot.lane.b32.xlu0 %v4689, 124
        %v4703 = vpop.permute.xlu0 %4702
        %4704 = vrot.lane.b32.xlu0 %v4690, 124
        %v4705 = vpop.permute.xlu0 %4704
        %v4706 = vsel %vm528, %v4697, %v4699
        %v4707 = vsel %vm528, %v4699, %v4701
        %v4708 = vsel %vm528, %v4701, %v4703
        %v4709 = vsel %vm528, %v4703, %v4705
        %v4714 = vadd.f32 %v4682, %v4706
        %v4715 = vadd.f32 %v4683, %v4707
        %v4716 = vadd.f32 %v4684, %v4708
        %v4717 = vadd.f32 %v4685, %v4709
        %v4718 = vmul.f32 %v579, %v4439
        %v4719 = vmul.f32 %v579, %v4440
        %v4720 = vmul.f32 %v579, %v4441
        %v4721 = vmul.f32 %v579, %v4442
        %v4722 = vmul.f32 %v579, %v4443
        %4728 = vrot.lane.b32.xlu0 %v4718, 123
        %v4729 = vpop.permute.xlu0 %4728
        %4730 = vrot.lane.b32.xlu0 %v4719, 123
        %v4731 = vpop.permute.xlu0 %4730
        %4732 = vrot.lane.b32.xlu0 %v4720, 123
        %v4733 = vpop.permute.xlu0 %4732
        %4734 = vrot.lane.b32.xlu0 %v4721, 123
        %v4735 = vpop.permute.xlu0 %4734
        %4736 = vrot.lane.b32.xlu0 %v4722, 123
        %v4737 = vpop.permute.xlu0 %4736
        %v4738 = vsel %vm601, %v4729, %v4731
        %v4739 = vsel %vm601, %v4731, %v4733
        %v4740 = vsel %vm601, %v4733, %v4735
        %v4741 = vsel %vm601, %v4735, %v4737
        %v4746 = vadd.f32 %v4714, %v4738
        %v4747 = vadd.f32 %v4715, %v4739
        %v4748 = vadd.f32 %v4716, %v4740
        %v4749 = vadd.f32 %v4717, %v4741
        %v4750 = vmul.f32 %v616, %v4484
        %v4751 = vmul.f32 %v616, %v4485
        %v4752 = vmul.f32 %v616, %v4486
        %v4753 = vmul.f32 %v616, %v4487
        %v4754 = vmul.f32 %v616, %v4488
        %4760 = vrot.lane.b32.xlu0 %v4750, 123
        %v4761 = vpop.permute.xlu0 %4760
        %4762 = vrot.lane.b32.xlu0 %v4751, 123
        %v4763 = vpop.permute.xlu0 %4762
        %4764 = vrot.lane.b32.xlu0 %v4752, 123
        %v4765 = vpop.permute.xlu0 %4764
        %4766 = vrot.lane.b32.xlu0 %v4753, 123
        %v4767 = vpop.permute.xlu0 %4766
        %4768 = vrot.lane.b32.xlu0 %v4754, 123
        %v4769 = vpop.permute.xlu0 %4768
        %v4770 = vsel %vm601, %v4761, %v4763
        %v4771 = vsel %vm601, %v4763, %v4765
        %v4772 = vsel %vm601, %v4765, %v4767
        %v4773 = vsel %vm601, %v4767, %v4769
        %v4778 = vadd.f32 %v4746, %v4770
        %v4779 = vadd.f32 %v4747, %v4771
        %v4780 = vadd.f32 %v4748, %v4772
        %v4781 = vadd.f32 %v4749, %v4773
        %v4782 = vmul.f32 %v652, %v4439
        %v4783 = vmul.f32 %v652, %v4440
        %v4784 = vmul.f32 %v652, %v4441
        %v4785 = vmul.f32 %v652, %v4442
        %v4786 = vmul.f32 %v652, %v4443
        %4792 = vrot.lane.b32.xlu0 %v4782, 122
        %v4793 = vpop.permute.xlu0 %4792
        %4794 = vrot.lane.b32.xlu0 %v4783, 122
        %v4795 = vpop.permute.xlu0 %4794
        %4796 = vrot.lane.b32.xlu0 %v4784, 122
        %v4797 = vpop.permute.xlu0 %4796
        %4798 = vrot.lane.b32.xlu0 %v4785, 122
        %v4799 = vpop.permute.xlu0 %4798
        %4800 = vrot.lane.b32.xlu0 %v4786, 122
        %v4801 = vpop.permute.xlu0 %4800
        %v4802 = vsel %vm674, %v4793, %v4795
        %v4803 = vsel %vm674, %v4795, %v4797
        %v4804 = vsel %vm674, %v4797, %v4799
        %v4805 = vsel %vm674, %v4799, %v4801
        %v4810 = vadd.f32 %v4778, %v4802
        %v4811 = vadd.f32 %v4779, %v4803
        %v4812 = vadd.f32 %v4780, %v4804
        %v4813 = vadd.f32 %v4781, %v4805
        %v4814 = vmul.f32 %v689, %v4484
        %v4815 = vmul.f32 %v689, %v4485
        %v4816 = vmul.f32 %v689, %v4486
        %v4817 = vmul.f32 %v689, %v4487
        %v4818 = vmul.f32 %v689, %v4488
        %4824 = vrot.lane.b32.xlu0 %v4814, 122
        %v4825 = vpop.permute.xlu0 %4824
        %4826 = vrot.lane.b32.xlu0 %v4815, 122
        %v4827 = vpop.permute.xlu0 %4826
        %4828 = vrot.lane.b32.xlu0 %v4816, 122
        %v4829 = vpop.permute.xlu0 %4828
        %4830 = vrot.lane.b32.xlu0 %v4817, 122
        %v4831 = vpop.permute.xlu0 %4830
        %4832 = vrot.lane.b32.xlu0 %v4818, 122
        %v4833 = vpop.permute.xlu0 %4832
        %v4834 = vsel %vm674, %v4825, %v4827
        %v4835 = vsel %vm674, %v4827, %v4829
        %v4836 = vsel %vm674, %v4829, %v4831
        %v4837 = vsel %vm674, %v4831, %v4833
        %v4842 = vadd.f32 %v4810, %v4834
        %v4843 = vadd.f32 %v4811, %v4835
        %v4844 = vadd.f32 %v4812, %v4836
        %v4845 = vadd.f32 %v4813, %v4837
        %v4846 = vmul.f32 %v725, %v4439
        %v4847 = vmul.f32 %v725, %v4440
        %v4848 = vmul.f32 %v725, %v4441
        %v4849 = vmul.f32 %v725, %v4442
        %v4850 = vmul.f32 %v725, %v4443
        %4856 = vrot.lane.b32.xlu0 %v4846, 121
        %v4857 = vpop.permute.xlu0 %4856
        %4858 = vrot.lane.b32.xlu0 %v4847, 121
        %v4859 = vpop.permute.xlu0 %4858
        %4860 = vrot.lane.b32.xlu0 %v4848, 121
        %v4861 = vpop.permute.xlu0 %4860
        %4862 = vrot.lane.b32.xlu0 %v4849, 121
        %v4863 = vpop.permute.xlu0 %4862
        %4864 = vrot.lane.b32.xlu0 %v4850, 121
        %v4865 = vpop.permute.xlu0 %4864
        %v4866 = vsel %vm747, %v4857, %v4859
        %v4867 = vsel %vm747, %v4859, %v4861
        %v4868 = vsel %vm747, %v4861, %v4863
        %v4869 = vsel %vm747, %v4863, %v4865
        %v4874 = vadd.f32 %v4842, %v4866
        %v4875 = vadd.f32 %v4843, %v4867
        %v4876 = vadd.f32 %v4844, %v4868
        %v4877 = vadd.f32 %v4845, %v4869
        %v4878 = vmul.f32 %v762, %v4484
        %v4879 = vmul.f32 %v762, %v4485
        %v4880 = vmul.f32 %v762, %v4486
        %v4881 = vmul.f32 %v762, %v4487
        %v4882 = vmul.f32 %v762, %v4488
        %4888 = vrot.lane.b32.xlu0 %v4878, 121
        %v4889 = vpop.permute.xlu0 %4888
        %4890 = vrot.lane.b32.xlu0 %v4879, 121
        %v4891 = vpop.permute.xlu0 %4890
        %4892 = vrot.lane.b32.xlu0 %v4880, 121
        %v4893 = vpop.permute.xlu0 %4892
        %4894 = vrot.lane.b32.xlu0 %v4881, 121
        %v4895 = vpop.permute.xlu0 %4894
        %4896 = vrot.lane.b32.xlu0 %v4882, 121
        %v4897 = vpop.permute.xlu0 %4896
        %v4898 = vsel %vm747, %v4889, %v4891
        %v4899 = vsel %vm747, %v4891, %v4893
        %v4900 = vsel %vm747, %v4893, %v4895
        %v4901 = vsel %vm747, %v4895, %v4897
        %v4906 = vadd.f32 %v4874, %v4898
        %v4907 = vadd.f32 %v4875, %v4899
        %v4908 = vadd.f32 %v4876, %v4900
        %v4909 = vadd.f32 %v4877, %v4901
        %4910 = vst [vmem:[%s206 + $0x100] sm:$0xff] %v4906
        %4911 = vst [vmem:[%s206 + $0x108] sm:$0xff] %v4907
        %4912 = vst [vmem:[%s206 + $0x110] sm:$0xff] %v4908
        %4913 = vst [vmem:[%s206 + $0x118] sm:$0xff] %v4909
        %s4914 = sand.u32 %s112, 1
        %s4915 = scalar_lea.sflag [#allocation4], %s4914
        %s4916 = sand.u32 %s112, 1
        %s4917 = smul.addr %s4916, 288
        %s4918 = scalar_lea.vmem [#allocation5], %s4917
        // Predicated region
        $region37: #{tpu_custom_call.1} parent=31 // pred_check
          %p4919 = pneg %p122
        $region38: #{tpu_custom_call.1} parent=31 // pred_check_branch
          %4921 = sbr.rel (%p4919) target = $region40
        $region39: #{tpu_custom_call.1} parent=31 // pred_region
          %s4922 = smul.u32 36, %s25
          %4924 = vsyncadd %s4915, 0
          %s4925 = smul.addr %s24, 36
          %s4926 = sadd.s32 %s4922, %s4925
          %s4927 = smul.addr %s4926, 8
          %s4928 = scalar_lea.hbm %s3, %s4927
          %s4930 = sshll.u32 %s4918, 4
          %s4931 = int_to_ptr.vmem [resolvable:$true] %s4930
          %s4932 = sshll.u32 %s4928, 4
          %s4933 = int_to_ptr.hbm [resolvable:$true] %s4932
          %4935 = dma.vmem_to_hbm [thread:$0]  %s4931, 4608, %s4933, %s4915
        $region40: #{tpu_custom_call.1} parent=31 // pred_fallthru
          _
      $region32: #{tpu_custom_call.1} parent=5 // pred_fallthru
        _
      %p4936 = scmp.le.s32.totalorder 2, %s15
      // Predicated region
      $region41: #{tpu_custom_call.1} parent=5 // pred_check
        %p4937 = pneg %p4936
      $region42: #{tpu_custom_call.1} parent=5 // pred_check_branch
        %4939 = sbr.rel (%p4937) target = $region44
      $region43: #{tpu_custom_call.1} parent=5 // pred_region
        %s4940 = ssub.s32 %s15, 2
        // Predicated region
        $region45: #{tpu_custom_call.1} parent=43 // pred_check
          %p4941 = pneg %p128
        $region46: #{tpu_custom_call.1} parent=43 // pred_check_branch
          %4943 = sbr.rel (%p4941) target = $region48
        $region47: #{tpu_custom_call.1} parent=43 // pred_region
          %s4944 = sand.u32 %s113, 1
          %s4945 = scalar_lea.sflag [#allocation4], %s4944
          %s4946 = sand.u32 %s113, 1
          %s4947 = smul.addr %s4946, 288
          %s4948 = scalar_lea.vmem [#allocation5], %s4947
          %4950 = dma.done %s4945, 4608
        $region48: #{tpu_custom_call.1} parent=43 // pred_fallthru
          _
      $region44: #{tpu_custom_call.1} parent=5 // pred_fallthru
        _
    $region6: #{tpu_custom_call.1} parent=1 // loop_footer
      %s19 = sadd.s32 1, %s15
    $region7: #{tpu_custom_call.1} parent=1 // loop_footer_branch
      %14 = sbr.rel target = $region3
    $region8: #{tpu_custom_call.1} parent=1 // loop_exit
      _
    %4951 = vsyncpa [#allocation3], 1
    %s4952 = scalar_lea.sflag [#allocation3], 1
    %4953 = vsyncpa %s4952, 1
    %4954 = vsyncpa [#allocation4], 1
    %s4955 = scalar_lea.sflag [#allocation4], 1
    %4956 = vsyncpa %s4955, 1

</llo_original>
